<compile_context>
chip_gen: v7x
topology: tpu7x:2x2x1
jax: 0.10.0
libtpu: 0.0.40
codegen_flags: <defaults>
</compile_context>

<pallas_src>
import math
from functools import partial

import jax
import jax.numpy as jnp
from jax.experimental import pallas as pl
from jax.experimental.pallas import tpu as pltpu

VMEM_SPEC = pl.BlockSpec(memory_space=pltpu.MemorySpace.VMEM)


# ----------------------------------------------------------------------------
# Fused forward kernel: transformer encoder stack + VAE head
# ----------------------------------------------------------------------------
def _fused_forward_kernel(
    x_ref, eps_ref,
    wqkv_ref, wout_ref, wff1_ref, wff2_ref, lvec_ref,
    wenc_ref, headw_ref, headv_ref,
    state_ref, packed_ref,
    *, num_layers, B, S, H, D, L, F, ln_eps=1e-5,
):
    hd = D // H
    Dh = D // 2
    BS = B * S
    scale = 1.0 / math.sqrt(hd)
    bf16 = jnp.bfloat16

    def mm(a, b):
        # a @ b, bf16 operands on the MXU, f32 accumulate.
        return jax.lax.dot_general(a, b, (((1,), (0,)), ((), ())),
                                   preferred_element_type=jnp.float32)

    def mm_t(a, b):
        # a @ b.T (contract last dims of both), bf16 MXU, f32 accumulate.
        return jax.lax.dot_general(a, b, (((1,), (1,)), ((), ())),
                                   preferred_element_type=jnp.float32)

    def add_ln(x, y, g, beta):
        # LayerNorm(x + y), biased variance, affine (torch eps=1e-5).
        h = x + y
        mean = jnp.mean(h, axis=-1, keepdims=True)
        c = h - mean
        var = jnp.mean(c * c, axis=-1, keepdims=True)
        return c * jax.lax.rsqrt(var + ln_eps) * g + beta

    # Residual stream in natural seq-major order: row = s * B + b.
    x = x_ref[...]                                            # (B*S, D) f32

    # Block-diagonal attention bias: row i may only attend to columns j with
    # the same batch index (i % B == j % B); cross-batch entries get -1e30.
    ri = jax.lax.broadcasted_iota(jnp.int32, (BS, BS), 0)
    ci = jax.lax.broadcasted_iota(jnp.int32, (BS, BS), 1)
    attn_bias = jnp.where((ri % B) == (ci % B), 0.0, -1e30).astype(jnp.float32)

    for l in range(num_layers):
        w_qkv = wqkv_ref[l]                                   # (D, 3D) bf16
        w_out = wout_ref[l]                                   # (D, D)  bf16
        w_ff1 = wff1_ref[l]                                   # (D, F)  bf16
        w_ff2 = wff2_ref[l]                                   # (F, D)  bf16
        lv = lvec_ref[l]                                      # (8, 3D) f32
        b_qkv = lv[0:1, :3 * D]
        b_out = lv[1:2, :D]
        ln1_g = lv[2:3, :D]
        ln1_b = lv[3:4, :D]
        b_ff1 = lv[4:5, :F]
        b_ff2 = lv[5:6, :D]
        ln2_g = lv[6:7, :D]
        ln2_b = lv[7:8, :D]

        # --- self attention (post-LN), all batches folded into one tile ---
        qkv = mm(x.astype(bf16), w_qkv) + b_qkv               # (B*S, 3D) f32
        qkv_bf = qkv.astype(bf16)                             # cast once

        heads = []
        for h in range(H):
            c0 = h * hd
            q = qkv_bf[:, c0:c0 + hd]                         # (B*S, hd)
            k = qkv_bf[:, D + c0:D + c0 + hd]
            v = qkv_bf[:, 2 * D + c0:2 * D + c0 + hd]
            s = mm_t(q, k) * scale + attn_bias                # (B*S, B*S)
            s = s - jnp.max(s, axis=-1, keepdims=True)
            p = jnp.exp(s)
            p = p * pl.reciprocal(jnp.sum(p, axis=-1, keepdims=True),
                                  approx=True)
            heads.append(mm(p.astype(bf16), v))               # (B*S, hd) f32
        attn = jnp.concatenate(heads, axis=-1)                # (B*S, D) f32
        attn = mm(attn.astype(bf16), w_out) + b_out           # one out-proj

        x = add_ln(x, attn, ln1_g, ln1_b)

        # --- feed-forward block (post-LN) ---
        ffh = jnp.maximum(mm(x.astype(bf16), w_ff1) + b_ff1, 0.0)
        ff = mm(ffh.astype(bf16), w_ff2) + b_ff2
        x = add_ln(x, ff, ln2_g, ln2_b)

    # --- last hidden state: the last B rows (s = S-1, b = 0..B-1) ---
    h_last = x[(S - 1) * B:S * B, :]                          # (B, D)

    # --- unpack fused head weights / biases ---
    hw = headw_ref[...]                                       # (3L+Dh, D) bf16
    hv = headv_ref[...]                                       # (8, D+2L) f32
    w_dyn1 = hw[0:L, 0:L]
    w_dyn2 = hw[L:2 * L, 0:L]
    w_dec1 = hw[2 * L:3 * L, 0:Dh]
    w_dec2 = hw[3 * L:3 * L + Dh, 0:D]
    b_enc = hv[0:1, 0:D + 2 * L]
    b_dyn1 = hv[1:2, 0:L]
    b_dyn2 = hv[2:3, 0:L]
    b_dec1 = hv[3:4, 0:Dh]
    b_dec2 = hv[4:5, 0:D]
    w_unc = hv[5:6, 0:D]
    b_unc = hv[6:7, 0:1]

    # --- VAE head: fused [residual | mu | logvar] projection ---
    enc = mm(h_last.astype(bf16), wenc_ref[...]) + b_enc      # (B, D + 2L)
    residual = enc[:, 0:D]
    mu = enc[:, D:D + L]
    logvar = enc[:, D + L:D + 2 * L]

    std = jnp.exp(0.5 * logvar)
    z = mu + eps_ref[...] * std                               # reparameterize

    # dynamics: Linear -> Tanh -> Linear
    zh = jnp.tanh(mm(z.astype(bf16), w_dyn1) + b_dyn1)
    z_next = mm(zh.astype(bf16), w_dyn2) + b_dyn2

    # decoder: Linear -> LeakyReLU(0.01) -> Linear
    dh = mm(z_next.astype(bf16), w_dec1) + b_dec1
    dh = jnp.where(dh >= 0.0, dh, 0.01 * dh)
    decoded = mm(dh.astype(bf16), w_dec2) + b_dec2

    next_state = decoded + residual                           # (B, D)

    # uncertainty estimator: Linear(D, 1) + exact f32 sigmoid (open interval)
    u = jnp.sum(next_state * w_unc, axis=-1, keepdims=True) + b_unc
    unc = 1.0 / (1.0 + jnp.exp(-u))                           # (B, 1)

    # outputs: lane-dense (B, D) slabs
    state_ref[...] = next_state
    col = jax.lax.broadcasted_iota(jnp.int32, (B, D - 2 * L), 1)
    unc_pad = jnp.where(col == 0, unc, 0.0)                   # (B, D-2L)
    packed_ref[...] = jnp.concatenate([mu, logvar, unc_pad], axis=-1)  # (B, D)


# ----------------------------------------------------------------------------
# Parameter init (pre-transposed (Din, Dout) bf16 matmul weights; small
# per-layer vectors and head parameters packed into a few stacked arrays)
# ----------------------------------------------------------------------------
def init_params(key, feat_dim, nhead, num_layers, latent_dim, dim_ff):
    D, L, F, NL = feat_dim, latent_dim, dim_ff, num_layers
    Dh = D // 2
    keys = iter(jax.random.split(key, 128))

    def w(din, dout, scale=0.05):
        return (scale * jax.random.normal(next(keys), (din, dout),
                                          jnp.float32)).astype(jnp.bfloat16)

    def vec(dout, scale=0.05):
        return scale * jax.random.normal(next(keys), (dout,), jnp.float32)

    # ---- stacked matmul weights per layer (bf16, (Din, Dout)) ----
    w_qkv = jnp.stack([w(D, 3 * D) for _ in range(NL)])       # (NL, D, 3D)
    w_out = jnp.stack([w(D, D) for _ in range(NL)])           # (NL, D, D)
    w_ff1 = jnp.stack([w(D, F) for _ in range(NL)])           # (NL, D, F)
    w_ff2 = jnp.stack([w(F, D) for _ in range(NL)])           # (NL, F, D)

    # ---- per-layer small vectors packed into (NL, 8, 3D) f32 ----
    W3 = 3 * D

    def prow(v):
        return jnp.pad(v, (0, W3 - v.shape[0]))

    layer_vecs = jnp.stack([
        jnp.stack([
            prow(vec(3 * D)),                       # b_qkv
            prow(vec(D)),                           # b_out
            prow(jnp.ones((D,), jnp.float32)),      # ln1_g
            prow(jnp.zeros((D,), jnp.float32)),     # ln1_b
            prow(vec(F)),                           # b_ff1
            prow(vec(D)),                           # b_ff2
            prow(jnp.ones((D,), jnp.float32)),      # ln2_g
            prow(jnp.zeros((D,), jnp.float32)),     # ln2_b
        ])
        for _ in range(NL)
    ])                                              # (NL, 8, 3D)

    # ---- head: fused [residual_proj | encoder_mean | encoder_logvar] ----
    w_enc = w(D, D + 2 * L)                         # (D, D+2L) bf16

    def pcols(m, width):
        return jnp.pad(m, ((0, 0), (0, width - m.shape[1])))

    head_w = jnp.concatenate([
        pcols(w(L, L), D),                          # w_dyn1  rows [0, L)
        pcols(w(L, L), D),                          # w_dyn2  rows [L, 2L)
        pcols(w(L, Dh), D),                         # w_dec1  rows [2L, 3L)
        pcols(w(Dh, D), D),                         # w_dec2  rows [3L, 3L+Dh)
    ], axis=0)                                      # (3L+Dh, D) bf16

    W2 = D + 2 * L

    def phrow(v):
        return jnp.pad(v, (0, W2 - v.shape[0]))

    head_vecs = jnp.stack([
        phrow(vec(D + 2 * L)),                      # b_enc
        phrow(vec(L)),                              # b_dyn1
        phrow(vec(L)),                              # b_dyn2
        phrow(vec(Dh)),                             # b_dec1
        phrow(vec(D)),                              # b_dec2
        phrow(vec(D)),                              # w_unc
        phrow(vec(1)),                              # b_unc
        jnp.zeros((W2,), jnp.float32),
    ])                                              # (8, D+2L) f32

    return dict(
        nhead=nhead,
        w_qkv=w_qkv, w_out=w_out, w_ff1=w_ff1, w_ff2=w_ff2,
        layer_vecs=layer_vecs,
        w_enc=w_enc, head_w=head_w, head_vecs=head_vecs,
    )


# ----------------------------------------------------------------------------
# Forward wrapper: one fused gridless pallas_call (10 operands)
# ----------------------------------------------------------------------------
def mpc_transformer_forward(history, params, eps):
    """history: (S, B, D) f32; eps: (B, latent_dim) f32 standard-normal draw."""
    S, B, D = history.shape
    H = int(params["nhead"])
    L = eps.shape[1]
    num_layers = params["w_qkv"].shape[0]
    F = params["w_ff1"].shape[2]
    assert D % H == 0 and 2 * L + 1 <= D

    # Free contiguous collapse (no transpose, no copy): row = s * B + b.
    x0 = history.reshape(S * B, D)

    kernel = partial(
        _fused_forward_kernel,
        num_layers=num_layers, B=B, S=S, H=H, D=D, L=L, F=F,
    )
    next_state, packed = pl.pallas_call(
        kernel,
        out_shape=(
            jax.ShapeDtypeStruct((B, D), jnp.float32),   # next_state
            jax.ShapeDtypeStruct((B, D), jnp.float32),   # [mu | logvar | unc | 0]
        ),
        in_specs=[VMEM_SPEC] * 10,
        out_specs=(VMEM_SPEC, VMEM_SPEC),
        compiler_params=pltpu.CompilerParams(
            vmem_limit_bytes=32 * 1024 * 1024),
    )(
        x0, eps,
        params["w_qkv"], params["w_out"], params["w_ff1"], params["w_ff2"],
        params["layer_vecs"],
        params["w_enc"], params["head_w"], params["head_vecs"],
    )

    mu = packed[:, :L]
    logvar = packed[:, L:2 * L]
    uncertainty = packed[:, 2 * L:2 * L + 1]
    return next_state, uncertainty, mu, logvar


# ----------------------------------------------------------------------------
# Driver
# ----------------------------------------------------------------------------
if __name__ == "__main__":
    SEQ, BATCH = 8, 2
    FEAT, NHEAD, NLAYERS, LATENT, DFF = 128, 4, 2, 32, 256

    key = jax.random.PRNGKey(0)
    k_hist, k_eps, k_params = jax.random.split(key, 3)

    history = jax.random.normal(k_hist, (SEQ, BATCH, FEAT), dtype=jnp.float32)
    eps = jax.random.normal(k_eps, (BATCH, LATENT), dtype=jnp.float32)
    params = init_params(k_params, FEAT, NHEAD, NLAYERS, LATENT, DFF)

    fwd = jax.jit(lambda h, e: mpc_transformer_forward(h, params, e))
    next_state, uncertainty, mu, logvar = fwd(history, eps)
    jax.block_until_ready((next_state, uncertainty, mu, logvar))

    assert next_state.shape == (BATCH, FEAT)
    assert uncertainty.shape == (BATCH, 1)
    assert mu.shape == (BATCH, LATENT)
    assert logvar.shape == (BATCH, LATENT)
    assert bool(jnp.all(jnp.isfinite(next_state)))
    assert bool(jnp.all(jnp.isfinite(mu)))
    assert bool(jnp.all(jnp.isfinite(logvar)))
    assert bool(jnp.all((uncertainty > 0.0) & (uncertainty < 1.0)))

    print("KERNEL_OK")
</pallas_src>

<mosaic_0001>
module attributes {stable_mosaic.version = 11 : i64} {
  func.func @_fused_forward_kernel(%arg0: memref<16x128xf32, #tpu.memory_space<vmem>>, %arg1: memref<2x32xf32, #tpu.memory_space<vmem>>, %arg2: memref<2x128x384xbf16, #tpu.memory_space<vmem>>, %arg3: memref<2x128x128xbf16, #tpu.memory_space<vmem>>, %arg4: memref<2x128x256xbf16, #tpu.memory_space<vmem>>, %arg5: memref<2x256x128xbf16, #tpu.memory_space<vmem>>, %arg6: memref<2x8x384xf32, #tpu.memory_space<vmem>>, %arg7: memref<128x192xbf16, #tpu.memory_space<vmem>>, %arg8: memref<160x128xbf16, #tpu.memory_space<vmem>>, %arg9: memref<8x192xf32, #tpu.memory_space<vmem>>, %arg10: memref<2x128xf32, #tpu.memory_space<vmem>>, %arg11: memref<2x128xf32, #tpu.memory_space<vmem>>) attributes {dimension_semantics = [], scalar_prefetch = 0 : i64, scratch_operands = 0 : i64, tpu.core_type = #tpu.core_type<tc>} {
    %c0 = arith.constant 0 : index
    %c0_0 = arith.constant 0 : index
    %0 = vector.load %arg0[%c0, %c0_0] : memref<16x128xf32, #tpu.memory_space<vmem>>, vector<16x128xf32>
    %1 = tpu.iota {dimensions = array<i32: 0>} : vector<16x16xi32>
    %2 = tpu.iota {dimensions = array<i32: 1>} : vector<16x16xi32>
    %c2_i32 = arith.constant 2 : i32
    %c0_i32 = arith.constant 0 : i32
    %3 = arith.cmpi eq, %c2_i32, %c0_i32 : i32
    %c1_i32 = arith.constant 1 : i32
    %4 = arith.select %3, %c1_i32, %c2_i32 : i32
    %5 = vector.broadcast %4 : i32 to vector<16x16xi32>
    %6 = arith.remsi %1, %5 : vector<16x16xi32>
    %c0_i32_1 = arith.constant 0 : i32
    %7 = vector.broadcast %c0_i32_1 : i32 to vector<16x16xi32>
    %8 = arith.cmpi ne, %6, %7 : vector<16x16xi32>
    %c0_i32_2 = arith.constant 0 : i32
    %9 = vector.broadcast %c0_i32_2 : i32 to vector<16x16xi32>
    %10 = arith.cmpi slt, %6, %9 : vector<16x16xi32>
    %c0_i32_3 = arith.constant 0 : i32
    %11 = arith.cmpi slt, %4, %c0_i32_3 : i32
    %12 = vector.broadcast %11 : i1 to vector<16x16xi1>
    %13 = vector.broadcast %12 : vector<16x16xi1> to vector<16x16xi1>
    %14 = arith.xori %10, %13 : vector<16x16xi1>
    %15 = arith.andi %14, %8 : vector<16x16xi1>
    %16 = vector.broadcast %4 : i32 to vector<16x16xi32>
    %17 = arith.addi %6, %16 : vector<16x16xi32>
    %18 = arith.select %15, %17, %6 : vector<16x16xi1>, vector<16x16xi32>
    %c2_i32_4 = arith.constant 2 : i32
    %c0_i32_5 = arith.constant 0 : i32
    %19 = arith.cmpi eq, %c2_i32_4, %c0_i32_5 : i32
    %c1_i32_6 = arith.constant 1 : i32
    %20 = arith.select %19, %c1_i32_6, %c2_i32_4 : i32
    %21 = vector.broadcast %20 : i32 to vector<16x16xi32>
    %22 = arith.remsi %2, %21 : vector<16x16xi32>
    %c0_i32_7 = arith.constant 0 : i32
    %23 = vector.broadcast %c0_i32_7 : i32 to vector<16x16xi32>
    %24 = arith.cmpi ne, %22, %23 : vector<16x16xi32>
    %c0_i32_8 = arith.constant 0 : i32
    %25 = vector.broadcast %c0_i32_8 : i32 to vector<16x16xi32>
    %26 = arith.cmpi slt, %22, %25 : vector<16x16xi32>
    %c0_i32_9 = arith.constant 0 : i32
    %27 = arith.cmpi slt, %20, %c0_i32_9 : i32
    %28 = vector.broadcast %27 : i1 to vector<16x16xi1>
    %29 = vector.broadcast %28 : vector<16x16xi1> to vector<16x16xi1>
    %30 = arith.xori %26, %29 : vector<16x16xi1>
    %31 = arith.andi %30, %24 : vector<16x16xi1>
    %32 = vector.broadcast %20 : i32 to vector<16x16xi32>
    %33 = arith.addi %22, %32 : vector<16x16xi32>
    %34 = arith.select %31, %33, %22 : vector<16x16xi1>, vector<16x16xi32>
    %35 = arith.cmpi eq, %18, %34 : vector<16x16xi32>
    %cst = arith.constant 0.000000e+00 : f32
    %cst_10 = arith.constant -1.000000e+30 : f32
    %36 = vector.broadcast %cst : f32 to vector<16x16xf32>
    %37 = vector.broadcast %cst_10 : f32 to vector<16x16xf32>
    %38 = arith.select %35, %36, %37 : vector<16x16xi1>, vector<16x16xf32>
    %c0_11 = arith.constant 0 : index
    %c0_12 = arith.constant 0 : index
    %c0_13 = arith.constant 0 : index
    %39 = vector.load %arg2[%c0_11, %c0_12, %c0_13] : memref<2x128x384xbf16, #tpu.memory_space<vmem>>, vector<1x128x384xbf16>
    %40 = vector.shape_cast %39 : vector<1x128x384xbf16> to vector<128x384xbf16>
    %c0_14 = arith.constant 0 : index
    %c0_15 = arith.constant 0 : index
    %c0_16 = arith.constant 0 : index
    %41 = vector.load %arg3[%c0_14, %c0_15, %c0_16] : memref<2x128x128xbf16, #tpu.memory_space<vmem>>, vector<1x128x128xbf16>
    %42 = vector.shape_cast %41 : vector<1x128x128xbf16> to vector<128x128xbf16>
    %c0_17 = arith.constant 0 : index
    %c0_18 = arith.constant 0 : index
    %c0_19 = arith.constant 0 : index
    %43 = vector.load %arg4[%c0_17, %c0_18, %c0_19] : memref<2x128x256xbf16, #tpu.memory_space<vmem>>, vector<1x128x256xbf16>
    %44 = vector.shape_cast %43 : vector<1x128x256xbf16> to vector<128x256xbf16>
    %c0_20 = arith.constant 0 : index
    %c0_21 = arith.constant 0 : index
    %c0_22 = arith.constant 0 : index
    %45 = vector.load %arg5[%c0_20, %c0_21, %c0_22] : memref<2x256x128xbf16, #tpu.memory_space<vmem>>, vector<1x256x128xbf16>
    %46 = vector.shape_cast %45 : vector<1x256x128xbf16> to vector<256x128xbf16>
    %c0_23 = arith.constant 0 : index
    %c0_24 = arith.constant 0 : index
    %c0_25 = arith.constant 0 : index
    %47 = vector.load %arg6[%c0_23, %c0_24, %c0_25] : memref<2x8x384xf32, #tpu.memory_space<vmem>>, vector<1x8x384xf32>
    %48 = vector.shape_cast %47 : vector<1x8x384xf32> to vector<8x384xf32>
    %49 = vector.extract_strided_slice %48 {offsets = [0, 0], sizes = [1, 384], strides = [1, 1]} : vector<8x384xf32> to vector<1x384xf32>
    %50 = vector.extract_strided_slice %48 {offsets = [1, 0], sizes = [1, 128], strides = [1, 1]} : vector<8x384xf32> to vector<1x128xf32>
    %51 = vector.extract_strided_slice %48 {offsets = [2, 0], sizes = [1, 128], strides = [1, 1]} : vector<8x384xf32> to vector<1x128xf32>
    %52 = vector.extract_strided_slice %48 {offsets = [3, 0], sizes = [1, 128], strides = [1, 1]} : vector<8x384xf32> to vector<1x128xf32>
    %53 = vector.extract_strided_slice %48 {offsets = [4, 0], sizes = [1, 256], strides = [1, 1]} : vector<8x384xf32> to vector<1x256xf32>
    %54 = vector.extract_strided_slice %48 {offsets = [5, 0], sizes = [1, 128], strides = [1, 1]} : vector<8x384xf32> to vector<1x128xf32>
    %55 = vector.extract_strided_slice %48 {offsets = [6, 0], sizes = [1, 128], strides = [1, 1]} : vector<8x384xf32> to vector<1x128xf32>
    %56 = vector.extract_strided_slice %48 {offsets = [7, 0], sizes = [1, 128], strides = [1, 1]} : vector<8x384xf32> to vector<1x128xf32>
    %57 = arith.truncf %0 : vector<16x128xf32> to vector<16x128xbf16>
    %cst_26 = arith.constant dense<0.000000e+00> : vector<16x384xf32>
    %58 = tpu.matmul %57, %40, %cst_26 {dimension_numbers = #tpu.dot_dimension_numbers<[1], [0], [0], [1], [0, 0, 1, 1], [], []>} : vector<16x128xbf16>, vector<128x384xbf16>, vector<16x384xf32> -> vector<16x384xf32>
    %59 = vector.broadcast %49 : vector<1x384xf32> to vector<16x384xf32>
    %60 = arith.addf %58, %59 : vector<16x384xf32>
    %61 = arith.truncf %60 : vector<16x384xf32> to vector<16x384xbf16>
    %62 = vector.extract_strided_slice %61 {offsets = [0, 0], sizes = [16, 32], strides = [1, 1]} : vector<16x384xbf16> to vector<16x32xbf16>
    %63 = vector.extract_strided_slice %61 {offsets = [0, 128], sizes = [16, 32], strides = [1, 1]} : vector<16x384xbf16> to vector<16x32xbf16>
    %64 = vector.extract_strided_slice %61 {offsets = [0, 256], sizes = [16, 32], strides = [1, 1]} : vector<16x384xbf16> to vector<16x32xbf16>
    %cst_27 = arith.constant dense<0.000000e+00> : vector<16x16xf32>
    %65 = tpu.matmul %62, %63, %cst_27 {dimension_numbers = #tpu.dot_dimension_numbers<[1], [1], [0], [0], [0, 0, 1, 0], [], []>} : vector<16x32xbf16>, vector<16x32xbf16>, vector<16x16xf32> -> vector<16x16xf32>
    %cst_28 = arith.constant 0.176776692 : f32
    %66 = vector.broadcast %cst_28 : f32 to vector<16x16xf32>
    %67 = arith.mulf %65, %66 : vector<16x16xf32>
    %68 = arith.addf %67, %38 : vector<16x16xf32>
    %cst_29 = arith.constant dense<0xFF800000> : vector<16xf32>
    %69 = vector.multi_reduction <maximumf>, %68, %cst_29 [1] : vector<16x16xf32> to vector<16xf32>
    %70 = vector.shape_cast %69 : vector<16xf32> to vector<16x1xf32>
    %71 = vector.broadcast %70 : vector<16x1xf32> to vector<16x16xf32>
    %72 = arith.subf %68, %71 : vector<16x16xf32>
    %73 = math.exp %72 : vector<16x16xf32>
    %cst_30 = arith.constant dense<0.000000e+00> : vector<16xf32>
    %74 = vector.multi_reduction <add>, %73, %cst_30 [1] : vector<16x16xf32> to vector<16xf32>
    %75 = vector.shape_cast %74 : vector<16xf32> to vector<16x1xf32>
    %76 = tpu.reciprocal %75 {approx = true} : vector<16x1xf32> -> vector<16x1xf32>
    %77 = vector.broadcast %76 : vector<16x1xf32> to vector<16x16xf32>
    %78 = arith.mulf %73, %77 : vector<16x16xf32>
    %79 = arith.truncf %78 : vector<16x16xf32> to vector<16x16xbf16>
    %cst_31 = arith.constant dense<0.000000e+00> : vector<16x32xf32>
    %80 = tpu.matmul %79, %64, %cst_31 {dimension_numbers = #tpu.dot_dimension_numbers<[1], [0], [0], [1], [0, 0, 1, 1], [], []>} : vector<16x16xbf16>, vector<16x32xbf16>, vector<16x32xf32> -> vector<16x32xf32>
    %81 = vector.extract_strided_slice %61 {offsets = [0, 32], sizes = [16, 32], strides = [1, 1]} : vector<16x384xbf16> to vector<16x32xbf16>
    %82 = vector.extract_strided_slice %61 {offsets = [0, 160], sizes = [16, 32], strides = [1, 1]} : vector<16x384xbf16> to vector<16x32xbf16>
    %83 = vector.extract_strided_slice %61 {offsets = [0, 288], sizes = [16, 32], strides = [1, 1]} : vector<16x384xbf16> to vector<16x32xbf16>
    %cst_32 = arith.constant dense<0.000000e+00> : vector<16x16xf32>
    %84 = tpu.matmul %81, %82, %cst_32 {dimension_numbers = #tpu.dot_dimension_numbers<[1], [1], [0], [0], [0, 0, 1, 0], [], []>} : vector<16x32xbf16>, vector<16x32xbf16>, vector<16x16xf32> -> vector<16x16xf32>
    %cst_33 = arith.constant 0.176776692 : f32
    %85 = vector.broadcast %cst_33 : f32 to vector<16x16xf32>
    %86 = arith.mulf %84, %85 : vector<16x16xf32>
    %87 = arith.addf %86, %38 : vector<16x16xf32>
    %cst_34 = arith.constant dense<0xFF800000> : vector<16xf32>
    %88 = vector.multi_reduction <maximumf>, %87, %cst_34 [1] : vector<16x16xf32> to vector<16xf32>
    %89 = vector.shape_cast %88 : vector<16xf32> to vector<16x1xf32>
    %90 = vector.broadcast %89 : vector<16x1xf32> to vector<16x16xf32>
    %91 = arith.subf %87, %90 : vector<16x16xf32>
    %92 = math.exp %91 : vector<16x16xf32>
    %cst_35 = arith.constant dense<0.000000e+00> : vector<16xf32>
    %93 = vector.multi_reduction <add>, %92, %cst_35 [1] : vector<16x16xf32> to vector<16xf32>
    %94 = vector.shape_cast %93 : vector<16xf32> to vector<16x1xf32>
    %95 = tpu.reciprocal %94 {approx = true} : vector<16x1xf32> -> vector<16x1xf32>
    %96 = vector.broadcast %95 : vector<16x1xf32> to vector<16x16xf32>
    %97 = arith.mulf %92, %96 : vector<16x16xf32>
    %98 = arith.truncf %97 : vector<16x16xf32> to vector<16x16xbf16>
    %cst_36 = arith.constant dense<0.000000e+00> : vector<16x32xf32>
    %99 = tpu.matmul %98, %83, %cst_36 {dimension_numbers = #tpu.dot_dimension_numbers<[1], [0], [0], [1], [0, 0, 1, 1], [], []>} : vector<16x16xbf16>, vector<16x32xbf16>, vector<16x32xf32> -> vector<16x32xf32>
    %100 = vector.extract_strided_slice %61 {offsets = [0, 64], sizes = [16, 32], strides = [1, 1]} : vector<16x384xbf16> to vector<16x32xbf16>
    %101 = vector.extract_strided_slice %61 {offsets = [0, 192], sizes = [16, 32], strides = [1, 1]} : vector<16x384xbf16> to vector<16x32xbf16>
    %102 = vector.extract_strided_slice %61 {offsets = [0, 320], sizes = [16, 32], strides = [1, 1]} : vector<16x384xbf16> to vector<16x32xbf16>
    %cst_37 = arith.constant dense<0.000000e+00> : vector<16x16xf32>
    %103 = tpu.matmul %100, %101, %cst_37 {dimension_numbers = #tpu.dot_dimension_numbers<[1], [1], [0], [0], [0, 0, 1, 0], [], []>} : vector<16x32xbf16>, vector<16x32xbf16>, vector<16x16xf32> -> vector<16x16xf32>
    %cst_38 = arith.constant 0.176776692 : f32
    %104 = vector.broadcast %cst_38 : f32 to vector<16x16xf32>
    %105 = arith.mulf %103, %104 : vector<16x16xf32>
    %106 = arith.addf %105, %38 : vector<16x16xf32>
    %cst_39 = arith.constant dense<0xFF800000> : vector<16xf32>
    %107 = vector.multi_reduction <maximumf>, %106, %cst_39 [1] : vector<16x16xf32> to vector<16xf32>
    %108 = vector.shape_cast %107 : vector<16xf32> to vector<16x1xf32>
    %109 = vector.broadcast %108 : vector<16x1xf32> to vector<16x16xf32>
    %110 = arith.subf %106, %109 : vector<16x16xf32>
    %111 = math.exp %110 : vector<16x16xf32>
    %cst_40 = arith.constant dense<0.000000e+00> : vector<16xf32>
    %112 = vector.multi_reduction <add>, %111, %cst_40 [1] : vector<16x16xf32> to vector<16xf32>
    %113 = vector.shape_cast %112 : vector<16xf32> to vector<16x1xf32>
    %114 = tpu.reciprocal %113 {approx = true} : vector<16x1xf32> -> vector<16x1xf32>
    %115 = vector.broadcast %114 : vector<16x1xf32> to vector<16x16xf32>
    %116 = arith.mulf %111, %115 : vector<16x16xf32>
    %117 = arith.truncf %116 : vector<16x16xf32> to vector<16x16xbf16>
    %cst_41 = arith.constant dense<0.000000e+00> : vector<16x32xf32>
    %118 = tpu.matmul %117, %102, %cst_41 {dimension_numbers = #tpu.dot_dimension_numbers<[1], [0], [0], [1], [0, 0, 1, 1], [], []>} : vector<16x16xbf16>, vector<16x32xbf16>, vector<16x32xf32> -> vector<16x32xf32>
    %119 = vector.extract_strided_slice %61 {offsets = [0, 96], sizes = [16, 32], strides = [1, 1]} : vector<16x384xbf16> to vector<16x32xbf16>
    %120 = vector.extract_strided_slice %61 {offsets = [0, 224], sizes = [16, 32], strides = [1, 1]} : vector<16x384xbf16> to vector<16x32xbf16>
    %121 = vector.extract_strided_slice %61 {offsets = [0, 352], sizes = [16, 32], strides = [1, 1]} : vector<16x384xbf16> to vector<16x32xbf16>
    %cst_42 = arith.constant dense<0.000000e+00> : vector<16x16xf32>
    %122 = tpu.matmul %119, %120, %cst_42 {dimension_numbers = #tpu.dot_dimension_numbers<[1], [1], [0], [0], [0, 0, 1, 0], [], []>} : vector<16x32xbf16>, vector<16x32xbf16>, vector<16x16xf32> -> vector<16x16xf32>
    %cst_43 = arith.constant 0.176776692 : f32
    %123 = vector.broadcast %cst_43 : f32 to vector<16x16xf32>
    %124 = arith.mulf %122, %123 : vector<16x16xf32>
    %125 = arith.addf %124, %38 : vector<16x16xf32>
    %cst_44 = arith.constant dense<0xFF800000> : vector<16xf32>
    %126 = vector.multi_reduction <maximumf>, %125, %cst_44 [1] : vector<16x16xf32> to vector<16xf32>
    %127 = vector.shape_cast %126 : vector<16xf32> to vector<16x1xf32>
    %128 = vector.broadcast %127 : vector<16x1xf32> to vector<16x16xf32>
    %129 = arith.subf %125, %128 : vector<16x16xf32>
    %130 = math.exp %129 : vector<16x16xf32>
    %cst_45 = arith.constant dense<0.000000e+00> : vector<16xf32>
    %131 = vector.multi_reduction <add>, %130, %cst_45 [1] : vector<16x16xf32> to vector<16xf32>
    %132 = vector.shape_cast %131 : vector<16xf32> to vector<16x1xf32>
    %133 = tpu.reciprocal %132 {approx = true} : vector<16x1xf32> -> vector<16x1xf32>
    %134 = vector.broadcast %133 : vector<16x1xf32> to vector<16x16xf32>
    %135 = arith.mulf %130, %134 : vector<16x16xf32>
    %136 = arith.truncf %135 : vector<16x16xf32> to vector<16x16xbf16>
    %cst_46 = arith.constant dense<0.000000e+00> : vector<16x32xf32>
    %137 = tpu.matmul %136, %121, %cst_46 {dimension_numbers = #tpu.dot_dimension_numbers<[1], [0], [0], [1], [0, 0, 1, 1], [], []>} : vector<16x16xbf16>, vector<16x32xbf16>, vector<16x32xf32> -> vector<16x32xf32>
    %138 = tpu.concatenate %80, %99, %118, %137 in 1 : vector<16x32xf32>, vector<16x32xf32>, vector<16x32xf32>, vector<16x32xf32> -> vector<16x128xf32>
    %139 = arith.truncf %138 : vector<16x128xf32> to vector<16x128xbf16>
    %cst_47 = arith.constant dense<0.000000e+00> : vector<16x128xf32>
    %140 = tpu.matmul %139, %42, %cst_47 {dimension_numbers = #tpu.dot_dimension_numbers<[1], [0], [0], [1], [0, 0, 1, 1], [], []>} : vector<16x128xbf16>, vector<128x128xbf16>, vector<16x128xf32> -> vector<16x128xf32>
    %141 = vector.broadcast %50 : vector<1x128xf32> to vector<16x128xf32>
    %142 = arith.addf %140, %141 : vector<16x128xf32>
    %143 = arith.addf %0, %142 : vector<16x128xf32>
    %cst_48 = arith.constant dense<0.000000e+00> : vector<16xf32>
    %144 = vector.multi_reduction <add>, %143, %cst_48 [1] : vector<16x128xf32> to vector<16xf32>
    %145 = vector.shape_cast %144 : vector<16xf32> to vector<16x1xf32>
    %cst_49 = arith.constant 1.280000e+02 : f32
    %146 = vector.broadcast %cst_49 : f32 to vector<16x1xf32>
    %147 = arith.divf %145, %146 : vector<16x1xf32>
    %148 = vector.broadcast %147 : vector<16x1xf32> to vector<16x128xf32>
    %149 = arith.subf %143, %148 : vector<16x128xf32>
    %150 = arith.mulf %149, %149 : vector<16x128xf32>
    %cst_50 = arith.constant dense<0.000000e+00> : vector<16xf32>
    %151 = vector.multi_reduction <add>, %150, %cst_50 [1] : vector<16x128xf32> to vector<16xf32>
    %152 = vector.shape_cast %151 : vector<16xf32> to vector<16x1xf32>
    %cst_51 = arith.constant 1.280000e+02 : f32
    %153 = vector.broadcast %cst_51 : f32 to vector<16x1xf32>
    %154 = arith.divf %152, %153 : vector<16x1xf32>
    %cst_52 = arith.constant 9.99999974E-6 : f32
    %155 = vector.broadcast %cst_52 : f32 to vector<16x1xf32>
    %156 = arith.addf %154, %155 : vector<16x1xf32>
    %157 = math.rsqrt %156 : vector<16x1xf32>
    %158 = vector.broadcast %157 : vector<16x1xf32> to vector<16x128xf32>
    %159 = arith.mulf %149, %158 : vector<16x128xf32>
    %160 = vector.broadcast %51 : vector<1x128xf32> to vector<16x128xf32>
    %161 = arith.mulf %159, %160 : vector<16x128xf32>
    %162 = vector.broadcast %52 : vector<1x128xf32> to vector<16x128xf32>
    %163 = arith.addf %161, %162 : vector<16x128xf32>
    %164 = arith.truncf %163 : vector<16x128xf32> to vector<16x128xbf16>
    %cst_53 = arith.constant dense<0.000000e+00> : vector<16x256xf32>
    %165 = tpu.matmul %164, %44, %cst_53 {dimension_numbers = #tpu.dot_dimension_numbers<[1], [0], [0], [1], [0, 0, 1, 1], [], []>} : vector<16x128xbf16>, vector<128x256xbf16>, vector<16x256xf32> -> vector<16x256xf32>
    %166 = vector.broadcast %53 : vector<1x256xf32> to vector<16x256xf32>
    %167 = arith.addf %165, %166 : vector<16x256xf32>
    %cst_54 = arith.constant 0.000000e+00 : f32
    %168 = vector.broadcast %cst_54 : f32 to vector<16x256xf32>
    %169 = arith.maximumf %167, %168 : vector<16x256xf32>
    %170 = arith.truncf %169 : vector<16x256xf32> to vector<16x256xbf16>
    %cst_55 = arith.constant dense<0.000000e+00> : vector<16x128xf32>
    %171 = tpu.matmul %170, %46, %cst_55 {dimension_numbers = #tpu.dot_dimension_numbers<[1], [0], [0], [1], [0, 0, 1, 1], [], []>} : vector<16x256xbf16>, vector<256x128xbf16>, vector<16x128xf32> -> vector<16x128xf32>
    %172 = vector.broadcast %54 : vector<1x128xf32> to vector<16x128xf32>
    %173 = arith.addf %171, %172 : vector<16x128xf32>
    %174 = arith.addf %163, %173 : vector<16x128xf32>
    %cst_56 = arith.constant dense<0.000000e+00> : vector<16xf32>
    %175 = vector.multi_reduction <add>, %174, %cst_56 [1] : vector<16x128xf32> to vector<16xf32>
    %176 = vector.shape_cast %175 : vector<16xf32> to vector<16x1xf32>
    %cst_57 = arith.constant 1.280000e+02 : f32
    %177 = vector.broadcast %cst_57 : f32 to vector<16x1xf32>
    %178 = arith.divf %176, %177 : vector<16x1xf32>
    %179 = vector.broadcast %178 : vector<16x1xf32> to vector<16x128xf32>
    %180 = arith.subf %174, %179 : vector<16x128xf32>
    %181 = arith.mulf %180, %180 : vector<16x128xf32>
    %cst_58 = arith.constant dense<0.000000e+00> : vector<16xf32>
    %182 = vector.multi_reduction <add>, %181, %cst_58 [1] : vector<16x128xf32> to vector<16xf32>
    %183 = vector.shape_cast %182 : vector<16xf32> to vector<16x1xf32>
    %cst_59 = arith.constant 1.280000e+02 : f32
    %184 = vector.broadcast %cst_59 : f32 to vector<16x1xf32>
    %185 = arith.divf %183, %184 : vector<16x1xf32>
    %cst_60 = arith.constant 9.99999974E-6 : f32
    %186 = vector.broadcast %cst_60 : f32 to vector<16x1xf32>
    %187 = arith.addf %185, %186 : vector<16x1xf32>
    %188 = math.rsqrt %187 : vector<16x1xf32>
    %189 = vector.broadcast %188 : vector<16x1xf32> to vector<16x128xf32>
    %190 = arith.mulf %180, %189 : vector<16x128xf32>
    %191 = vector.broadcast %55 : vector<1x128xf32> to vector<16x128xf32>
    %192 = arith.mulf %190, %191 : vector<16x128xf32>
    %193 = vector.broadcast %56 : vector<1x128xf32> to vector<16x128xf32>
    %194 = arith.addf %192, %193 : vector<16x128xf32>
    %c1 = arith.constant 1 : index
    %c0_61 = arith.constant 0 : index
    %c0_62 = arith.constant 0 : index
    %195 = vector.load %arg2[%c1, %c0_61, %c0_62] : memref<2x128x384xbf16, #tpu.memory_space<vmem>>, vector<1x128x384xbf16>
    %196 = vector.shape_cast %195 : vector<1x128x384xbf16> to vector<128x384xbf16>
    %c1_63 = arith.constant 1 : index
    %c0_64 = arith.constant 0 : index
    %c0_65 = arith.constant 0 : index
    %197 = vector.load %arg3[%c1_63, %c0_64, %c0_65] : memref<2x128x128xbf16, #tpu.memory_space<vmem>>, vector<1x128x128xbf16>
    %198 = vector.shape_cast %197 : vector<1x128x128xbf16> to vector<128x128xbf16>
    %c1_66 = arith.constant 1 : index
    %c0_67 = arith.constant 0 : index
    %c0_68 = arith.constant 0 : index
    %199 = vector.load %arg4[%c1_66, %c0_67, %c0_68] : memref<2x128x256xbf16, #tpu.memory_space<vmem>>, vector<1x128x256xbf16>
    %200 = vector.shape_cast %199 : vector<1x128x256xbf16> to vector<128x256xbf16>
    %c1_69 = arith.constant 1 : index
    %c0_70 = arith.constant 0 : index
    %c0_71 = arith.constant 0 : index
    %201 = vector.load %arg5[%c1_69, %c0_70, %c0_71] : memref<2x256x128xbf16, #tpu.memory_space<vmem>>, vector<1x256x128xbf16>
    %202 = vector.shape_cast %201 : vector<1x256x128xbf16> to vector<256x128xbf16>
    %c1_72 = arith.constant 1 : index
    %c0_73 = arith.constant 0 : index
    %c0_74 = arith.constant 0 : index
    %203 = vector.load %arg6[%c1_72, %c0_73, %c0_74] : memref<2x8x384xf32, #tpu.memory_space<vmem>>, vector<1x8x384xf32>
    %204 = vector.shape_cast %203 : vector<1x8x384xf32> to vector<8x384xf32>
    %205 = vector.extract_strided_slice %204 {offsets = [0, 0], sizes = [1, 384], strides = [1, 1]} : vector<8x384xf32> to vector<1x384xf32>
    %206 = vector.extract_strided_slice %204 {offsets = [1, 0], sizes = [1, 128], strides = [1, 1]} : vector<8x384xf32> to vector<1x128xf32>
    %207 = vector.extract_strided_slice %204 {offsets = [2, 0], sizes = [1, 128], strides = [1, 1]} : vector<8x384xf32> to vector<1x128xf32>
    %208 = vector.extract_strided_slice %204 {offsets = [3, 0], sizes = [1, 128], strides = [1, 1]} : vector<8x384xf32> to vector<1x128xf32>
    %209 = vector.extract_strided_slice %204 {offsets = [4, 0], sizes = [1, 256], strides = [1, 1]} : vector<8x384xf32> to vector<1x256xf32>
    %210 = vector.extract_strided_slice %204 {offsets = [5, 0], sizes = [1, 128], strides = [1, 1]} : vector<8x384xf32> to vector<1x128xf32>
    %211 = vector.extract_strided_slice %204 {offsets = [6, 0], sizes = [1, 128], strides = [1, 1]} : vector<8x384xf32> to vector<1x128xf32>
    %212 = vector.extract_strided_slice %204 {offsets = [7, 0], sizes = [1, 128], strides = [1, 1]} : vector<8x384xf32> to vector<1x128xf32>
    %213 = arith.truncf %194 : vector<16x128xf32> to vector<16x128xbf16>
    %cst_75 = arith.constant dense<0.000000e+00> : vector<16x384xf32>
    %214 = tpu.matmul %213, %196, %cst_75 {dimension_numbers = #tpu.dot_dimension_numbers<[1], [0], [0], [1], [0, 0, 1, 1], [], []>} : vector<16x128xbf16>, vector<128x384xbf16>, vector<16x384xf32> -> vector<16x384xf32>
    %215 = vector.broadcast %205 : vector<1x384xf32> to vector<16x384xf32>
    %216 = arith.addf %214, %215 : vector<16x384xf32>
    %217 = arith.truncf %216 : vector<16x384xf32> to vector<16x384xbf16>
    %218 = vector.extract_strided_slice %217 {offsets = [0, 0], sizes = [16, 32], strides = [1, 1]} : vector<16x384xbf16> to vector<16x32xbf16>
    %219 = vector.extract_strided_slice %217 {offsets = [0, 128], sizes = [16, 32], strides = [1, 1]} : vector<16x384xbf16> to vector<16x32xbf16>
    %220 = vector.extract_strided_slice %217 {offsets = [0, 256], sizes = [16, 32], strides = [1, 1]} : vector<16x384xbf16> to vector<16x32xbf16>
    %cst_76 = arith.constant dense<0.000000e+00> : vector<16x16xf32>
    %221 = tpu.matmul %218, %219, %cst_76 {dimension_numbers = #tpu.dot_dimension_numbers<[1], [1], [0], [0], [0, 0, 1, 0], [], []>} : vector<16x32xbf16>, vector<16x32xbf16>, vector<16x16xf32> -> vector<16x16xf32>
    %cst_77 = arith.constant 0.176776692 : f32
    %222 = vector.broadcast %cst_77 : f32 to vector<16x16xf32>
    %223 = arith.mulf %221, %222 : vector<16x16xf32>
    %224 = arith.addf %223, %38 : vector<16x16xf32>
    %cst_78 = arith.constant dense<0xFF800000> : vector<16xf32>
    %225 = vector.multi_reduction <maximumf>, %224, %cst_78 [1] : vector<16x16xf32> to vector<16xf32>
    %226 = vector.shape_cast %225 : vector<16xf32> to vector<16x1xf32>
    %227 = vector.broadcast %226 : vector<16x1xf32> to vector<16x16xf32>
    %228 = arith.subf %224, %227 : vector<16x16xf32>
    %229 = math.exp %228 : vector<16x16xf32>
    %cst_79 = arith.constant dense<0.000000e+00> : vector<16xf32>
    %230 = vector.multi_reduction <add>, %229, %cst_79 [1] : vector<16x16xf32> to vector<16xf32>
    %231 = vector.shape_cast %230 : vector<16xf32> to vector<16x1xf32>
    %232 = tpu.reciprocal %231 {approx = true} : vector<16x1xf32> -> vector<16x1xf32>
    %233 = vector.broadcast %232 : vector<16x1xf32> to vector<16x16xf32>
    %234 = arith.mulf %229, %233 : vector<16x16xf32>
    %235 = arith.truncf %234 : vector<16x16xf32> to vector<16x16xbf16>
    %cst_80 = arith.constant dense<0.000000e+00> : vector<16x32xf32>
    %236 = tpu.matmul %235, %220, %cst_80 {dimension_numbers = #tpu.dot_dimension_numbers<[1], [0], [0], [1], [0, 0, 1, 1], [], []>} : vector<16x16xbf16>, vector<16x32xbf16>, vector<16x32xf32> -> vector<16x32xf32>
    %237 = vector.extract_strided_slice %217 {offsets = [0, 32], sizes = [16, 32], strides = [1, 1]} : vector<16x384xbf16> to vector<16x32xbf16>
    %238 = vector.extract_strided_slice %217 {offsets = [0, 160], sizes = [16, 32], strides = [1, 1]} : vector<16x384xbf16> to vector<16x32xbf16>
    %239 = vector.extract_strided_slice %217 {offsets = [0, 288], sizes = [16, 32], strides = [1, 1]} : vector<16x384xbf16> to vector<16x32xbf16>
    %cst_81 = arith.constant dense<0.000000e+00> : vector<16x16xf32>
    %240 = tpu.matmul %237, %238, %cst_81 {dimension_numbers = #tpu.dot_dimension_numbers<[1], [1], [0], [0], [0, 0, 1, 0], [], []>} : vector<16x32xbf16>, vector<16x32xbf16>, vector<16x16xf32> -> vector<16x16xf32>
    %cst_82 = arith.constant 0.176776692 : f32
    %241 = vector.broadcast %cst_82 : f32 to vector<16x16xf32>
    %242 = arith.mulf %240, %241 : vector<16x16xf32>
    %243 = arith.addf %242, %38 : vector<16x16xf32>
    %cst_83 = arith.constant dense<0xFF800000> : vector<16xf32>
    %244 = vector.multi_reduction <maximumf>, %243, %cst_83 [1] : vector<16x16xf32> to vector<16xf32>
    %245 = vector.shape_cast %244 : vector<16xf32> to vector<16x1xf32>
    %246 = vector.broadcast %245 : vector<16x1xf32> to vector<16x16xf32>
    %247 = arith.subf %243, %246 : vector<16x16xf32>
    %248 = math.exp %247 : vector<16x16xf32>
    %cst_84 = arith.constant dense<0.000000e+00> : vector<16xf32>
    %249 = vector.multi_reduction <add>, %248, %cst_84 [1] : vector<16x16xf32> to vector<16xf32>
    %250 = vector.shape_cast %249 : vector<16xf32> to vector<16x1xf32>
    %251 = tpu.reciprocal %250 {approx = true} : vector<16x1xf32> -> vector<16x1xf32>
    %252 = vector.broadcast %251 : vector<16x1xf32> to vector<16x16xf32>
    %253 = arith.mulf %248, %252 : vector<16x16xf32>
    %254 = arith.truncf %253 : vector<16x16xf32> to vector<16x16xbf16>
    %cst_85 = arith.constant dense<0.000000e+00> : vector<16x32xf32>
    %255 = tpu.matmul %254, %239, %cst_85 {dimension_numbers = #tpu.dot_dimension_numbers<[1], [0], [0], [1], [0, 0, 1, 1], [], []>} : vector<16x16xbf16>, vector<16x32xbf16>, vector<16x32xf32> -> vector<16x32xf32>
    %256 = vector.extract_strided_slice %217 {offsets = [0, 64], sizes = [16, 32], strides = [1, 1]} : vector<16x384xbf16> to vector<16x32xbf16>
    %257 = vector.extract_strided_slice %217 {offsets = [0, 192], sizes = [16, 32], strides = [1, 1]} : vector<16x384xbf16> to vector<16x32xbf16>
    %258 = vector.extract_strided_slice %217 {offsets = [0, 320], sizes = [16, 32], strides = [1, 1]} : vector<16x384xbf16> to vector<16x32xbf16>
    %cst_86 = arith.constant dense<0.000000e+00> : vector<16x16xf32>
    %259 = tpu.matmul %256, %257, %cst_86 {dimension_numbers = #tpu.dot_dimension_numbers<[1], [1], [0], [0], [0, 0, 1, 0], [], []>} : vector<16x32xbf16>, vector<16x32xbf16>, vector<16x16xf32> -> vector<16x16xf32>
    %cst_87 = arith.constant 0.176776692 : f32
    %260 = vector.broadcast %cst_87 : f32 to vector<16x16xf32>
    %261 = arith.mulf %259, %260 : vector<16x16xf32>
    %262 = arith.addf %261, %38 : vector<16x16xf32>
    %cst_88 = arith.constant dense<0xFF800000> : vector<16xf32>
    %263 = vector.multi_reduction <maximumf>, %262, %cst_88 [1] : vector<16x16xf32> to vector<16xf32>
    %264 = vector.shape_cast %263 : vector<16xf32> to vector<16x1xf32>
    %265 = vector.broadcast %264 : vector<16x1xf32> to vector<16x16xf32>
    %266 = arith.subf %262, %265 : vector<16x16xf32>
    %267 = math.exp %266 : vector<16x16xf32>
    %cst_89 = arith.constant dense<0.000000e+00> : vector<16xf32>
    %268 = vector.multi_reduction <add>, %267, %cst_89 [1] : vector<16x16xf32> to vector<16xf32>
    %269 = vector.shape_cast %268 : vector<16xf32> to vector<16x1xf32>
    %270 = tpu.reciprocal %269 {approx = true} : vector<16x1xf32> -> vector<16x1xf32>
    %271 = vector.broadcast %270 : vector<16x1xf32> to vector<16x16xf32>
    %272 = arith.mulf %267, %271 : vector<16x16xf32>
    %273 = arith.truncf %272 : vector<16x16xf32> to vector<16x16xbf16>
    %cst_90 = arith.constant dense<0.000000e+00> : vector<16x32xf32>
    %274 = tpu.matmul %273, %258, %cst_90 {dimension_numbers = #tpu.dot_dimension_numbers<[1], [0], [0], [1], [0, 0, 1, 1], [], []>} : vector<16x16xbf16>, vector<16x32xbf16>, vector<16x32xf32> -> vector<16x32xf32>
    %275 = vector.extract_strided_slice %217 {offsets = [0, 96], sizes = [16, 32], strides = [1, 1]} : vector<16x384xbf16> to vector<16x32xbf16>
    %276 = vector.extract_strided_slice %217 {offsets = [0, 224], sizes = [16, 32], strides = [1, 1]} : vector<16x384xbf16> to vector<16x32xbf16>
    %277 = vector.extract_strided_slice %217 {offsets = [0, 352], sizes = [16, 32], strides = [1, 1]} : vector<16x384xbf16> to vector<16x32xbf16>
    %cst_91 = arith.constant dense<0.000000e+00> : vector<16x16xf32>
    %278 = tpu.matmul %275, %276, %cst_91 {dimension_numbers = #tpu.dot_dimension_numbers<[1], [1], [0], [0], [0, 0, 1, 0], [], []>} : vector<16x32xbf16>, vector<16x32xbf16>, vector<16x16xf32> -> vector<16x16xf32>
    %cst_92 = arith.constant 0.176776692 : f32
    %279 = vector.broadcast %cst_92 : f32 to vector<16x16xf32>
    %280 = arith.mulf %278, %279 : vector<16x16xf32>
    %281 = arith.addf %280, %38 : vector<16x16xf32>
    %cst_93 = arith.constant dense<0xFF800000> : vector<16xf32>
    %282 = vector.multi_reduction <maximumf>, %281, %cst_93 [1] : vector<16x16xf32> to vector<16xf32>
    %283 = vector.shape_cast %282 : vector<16xf32> to vector<16x1xf32>
    %284 = vector.broadcast %283 : vector<16x1xf32> to vector<16x16xf32>
    %285 = arith.subf %281, %284 : vector<16x16xf32>
    %286 = math.exp %285 : vector<16x16xf32>
    %cst_94 = arith.constant dense<0.000000e+00> : vector<16xf32>
    %287 = vector.multi_reduction <add>, %286, %cst_94 [1] : vector<16x16xf32> to vector<16xf32>
    %288 = vector.shape_cast %287 : vector<16xf32> to vector<16x1xf32>
    %289 = tpu.reciprocal %288 {approx = true} : vector<16x1xf32> -> vector<16x1xf32>
    %290 = vector.broadcast %289 : vector<16x1xf32> to vector<16x16xf32>
    %291 = arith.mulf %286, %290 : vector<16x16xf32>
    %292 = arith.truncf %291 : vector<16x16xf32> to vector<16x16xbf16>
    %cst_95 = arith.constant dense<0.000000e+00> : vector<16x32xf32>
    %293 = tpu.matmul %292, %277, %cst_95 {dimension_numbers = #tpu.dot_dimension_numbers<[1], [0], [0], [1], [0, 0, 1, 1], [], []>} : vector<16x16xbf16>, vector<16x32xbf16>, vector<16x32xf32> -> vector<16x32xf32>
    %294 = tpu.concatenate %236, %255, %274, %293 in 1 : vector<16x32xf32>, vector<16x32xf32>, vector<16x32xf32>, vector<16x32xf32> -> vector<16x128xf32>
    %295 = arith.truncf %294 : vector<16x128xf32> to vector<16x128xbf16>
    %cst_96 = arith.constant dense<0.000000e+00> : vector<16x128xf32>
    %296 = tpu.matmul %295, %198, %cst_96 {dimension_numbers = #tpu.dot_dimension_numbers<[1], [0], [0], [1], [0, 0, 1, 1], [], []>} : vector<16x128xbf16>, vector<128x128xbf16>, vector<16x128xf32> -> vector<16x128xf32>
    %297 = vector.broadcast %206 : vector<1x128xf32> to vector<16x128xf32>
    %298 = arith.addf %296, %297 : vector<16x128xf32>
    %299 = arith.addf %194, %298 : vector<16x128xf32>
    %cst_97 = arith.constant dense<0.000000e+00> : vector<16xf32>
    %300 = vector.multi_reduction <add>, %299, %cst_97 [1] : vector<16x128xf32> to vector<16xf32>
    %301 = vector.shape_cast %300 : vector<16xf32> to vector<16x1xf32>
    %cst_98 = arith.constant 1.280000e+02 : f32
    %302 = vector.broadcast %cst_98 : f32 to vector<16x1xf32>
    %303 = arith.divf %301, %302 : vector<16x1xf32>
    %304 = vector.broadcast %303 : vector<16x1xf32> to vector<16x128xf32>
    %305 = arith.subf %299, %304 : vector<16x128xf32>
    %306 = arith.mulf %305, %305 : vector<16x128xf32>
    %cst_99 = arith.constant dense<0.000000e+00> : vector<16xf32>
    %307 = vector.multi_reduction <add>, %306, %cst_99 [1] : vector<16x128xf32> to vector<16xf32>
    %308 = vector.shape_cast %307 : vector<16xf32> to vector<16x1xf32>
    %cst_100 = arith.constant 1.280000e+02 : f32
    %309 = vector.broadcast %cst_100 : f32 to vector<16x1xf32>
    %310 = arith.divf %308, %309 : vector<16x1xf32>
    %cst_101 = arith.constant 9.99999974E-6 : f32
    %311 = vector.broadcast %cst_101 : f32 to vector<16x1xf32>
    %312 = arith.addf %310, %311 : vector<16x1xf32>
    %313 = math.rsqrt %312 : vector<16x1xf32>
    %314 = vector.broadcast %313 : vector<16x1xf32> to vector<16x128xf32>
    %315 = arith.mulf %305, %314 : vector<16x128xf32>
    %316 = vector.broadcast %207 : vector<1x128xf32> to vector<16x128xf32>
    %317 = arith.mulf %315, %316 : vector<16x128xf32>
    %318 = vector.broadcast %208 : vector<1x128xf32> to vector<16x128xf32>
    %319 = arith.addf %317, %318 : vector<16x128xf32>
    %320 = arith.truncf %319 : vector<16x128xf32> to vector<16x128xbf16>
    %cst_102 = arith.constant dense<0.000000e+00> : vector<16x256xf32>
    %321 = tpu.matmul %320, %200, %cst_102 {dimension_numbers = #tpu.dot_dimension_numbers<[1], [0], [0], [1], [0, 0, 1, 1], [], []>} : vector<16x128xbf16>, vector<128x256xbf16>, vector<16x256xf32> -> vector<16x256xf32>
    %322 = vector.broadcast %209 : vector<1x256xf32> to vector<16x256xf32>
    %323 = arith.addf %321, %322 : vector<16x256xf32>
    %cst_103 = arith.constant 0.000000e+00 : f32
    %324 = vector.broadcast %cst_103 : f32 to vector<16x256xf32>
    %325 = arith.maximumf %323, %324 : vector<16x256xf32>
    %326 = arith.truncf %325 : vector<16x256xf32> to vector<16x256xbf16>
    %cst_104 = arith.constant dense<0.000000e+00> : vector<16x128xf32>
    %327 = tpu.matmul %326, %202, %cst_104 {dimension_numbers = #tpu.dot_dimension_numbers<[1], [0], [0], [1], [0, 0, 1, 1], [], []>} : vector<16x256xbf16>, vector<256x128xbf16>, vector<16x128xf32> -> vector<16x128xf32>
    %328 = vector.broadcast %210 : vector<1x128xf32> to vector<16x128xf32>
    %329 = arith.addf %327, %328 : vector<16x128xf32>
    %330 = arith.addf %319, %329 : vector<16x128xf32>
    %cst_105 = arith.constant dense<0.000000e+00> : vector<16xf32>
    %331 = vector.multi_reduction <add>, %330, %cst_105 [1] : vector<16x128xf32> to vector<16xf32>
    %332 = vector.shape_cast %331 : vector<16xf32> to vector<16x1xf32>
    %cst_106 = arith.constant 1.280000e+02 : f32
    %333 = vector.broadcast %cst_106 : f32 to vector<16x1xf32>
    %334 = arith.divf %332, %333 : vector<16x1xf32>
    %335 = vector.broadcast %334 : vector<16x1xf32> to vector<16x128xf32>
    %336 = arith.subf %330, %335 : vector<16x128xf32>
    %337 = arith.mulf %336, %336 : vector<16x128xf32>
    %cst_107 = arith.constant dense<0.000000e+00> : vector<16xf32>
    %338 = vector.multi_reduction <add>, %337, %cst_107 [1] : vector<16x128xf32> to vector<16xf32>
    %339 = vector.shape_cast %338 : vector<16xf32> to vector<16x1xf32>
    %cst_108 = arith.constant 1.280000e+02 : f32
    %340 = vector.broadcast %cst_108 : f32 to vector<16x1xf32>
    %341 = arith.divf %339, %340 : vector<16x1xf32>
    %cst_109 = arith.constant 9.99999974E-6 : f32
    %342 = vector.broadcast %cst_109 : f32 to vector<16x1xf32>
    %343 = arith.addf %341, %342 : vector<16x1xf32>
    %344 = math.rsqrt %343 : vector<16x1xf32>
    %345 = vector.broadcast %344 : vector<16x1xf32> to vector<16x128xf32>
    %346 = arith.mulf %336, %345 : vector<16x128xf32>
    %347 = vector.broadcast %211 : vector<1x128xf32> to vector<16x128xf32>
    %348 = arith.mulf %346, %347 : vector<16x128xf32>
    %349 = vector.broadcast %212 : vector<1x128xf32> to vector<16x128xf32>
    %350 = arith.addf %348, %349 : vector<16x128xf32>
    %351 = vector.extract_strided_slice %350 {offsets = [14, 0], sizes = [2, 128], strides = [1, 1]} : vector<16x128xf32> to vector<2x128xf32>
    %c0_110 = arith.constant 0 : index
    %c0_111 = arith.constant 0 : index
    %352 = vector.load %arg8[%c0_110, %c0_111] : memref<160x128xbf16, #tpu.memory_space<vmem>>, vector<160x128xbf16>
    %c0_112 = arith.constant 0 : index
    %c0_113 = arith.constant 0 : index
    %353 = vector.load %arg9[%c0_112, %c0_113] : memref<8x192xf32, #tpu.memory_space<vmem>>, vector<8x192xf32>
    %354 = vector.extract_strided_slice %352 {offsets = [0, 0], sizes = [32, 32], strides = [1, 1]} : vector<160x128xbf16> to vector<32x32xbf16>
    %355 = vector.extract_strided_slice %352 {offsets = [32, 0], sizes = [32, 32], strides = [1, 1]} : vector<160x128xbf16> to vector<32x32xbf16>
    %356 = vector.extract_strided_slice %352 {offsets = [64, 0], sizes = [32, 64], strides = [1, 1]} : vector<160x128xbf16> to vector<32x64xbf16>
    %357 = vector.extract_strided_slice %352 {offsets = [96, 0], sizes = [64, 128], strides = [1, 1]} : vector<160x128xbf16> to vector<64x128xbf16>
    %358 = vector.extract_strided_slice %353 {offsets = [0, 0], sizes = [1, 192], strides = [1, 1]} : vector<8x192xf32> to vector<1x192xf32>
    %359 = vector.extract_strided_slice %353 {offsets = [1, 0], sizes = [1, 32], strides = [1, 1]} : vector<8x192xf32> to vector<1x32xf32>
    %360 = vector.extract_strided_slice %353 {offsets = [2, 0], sizes = [1, 32], strides = [1, 1]} : vector<8x192xf32> to vector<1x32xf32>
    %361 = vector.extract_strided_slice %353 {offsets = [3, 0], sizes = [1, 64], strides = [1, 1]} : vector<8x192xf32> to vector<1x64xf32>
    %362 = vector.extract_strided_slice %353 {offsets = [4, 0], sizes = [1, 128], strides = [1, 1]} : vector<8x192xf32> to vector<1x128xf32>
    %363 = vector.extract_strided_slice %353 {offsets = [5, 0], sizes = [1, 128], strides = [1, 1]} : vector<8x192xf32> to vector<1x128xf32>
    %364 = vector.extract_strided_slice %353 {offsets = [6, 0], sizes = [1, 1], strides = [1, 1]} : vector<8x192xf32> to vector<1x1xf32>
    %365 = arith.truncf %351 : vector<2x128xf32> to vector<2x128xbf16>
    %c0_114 = arith.constant 0 : index
    %c0_115 = arith.constant 0 : index
    %366 = vector.load %arg7[%c0_114, %c0_115] : memref<128x192xbf16, #tpu.memory_space<vmem>>, vector<128x192xbf16>
    %cst_116 = arith.constant dense<0.000000e+00> : vector<2x192xf32>
    %367 = tpu.matmul %365, %366, %cst_116 {dimension_numbers = #tpu.dot_dimension_numbers<[1], [0], [0], [1], [0, 0, 1, 1], [], []>} : vector<2x128xbf16>, vector<128x192xbf16>, vector<2x192xf32> -> vector<2x192xf32>
    %368 = vector.broadcast %358 : vector<1x192xf32> to vector<2x192xf32>
    %369 = arith.addf %367, %368 : vector<2x192xf32>
    %370 = vector.extract_strided_slice %369 {offsets = [0, 0], sizes = [2, 128], strides = [1, 1]} : vector<2x192xf32> to vector<2x128xf32>
    %371 = vector.extract_strided_slice %369 {offsets = [0, 128], sizes = [2, 32], strides = [1, 1]} : vector<2x192xf32> to vector<2x32xf32>
    %372 = vector.extract_strided_slice %369 {offsets = [0, 160], sizes = [2, 32], strides = [1, 1]} : vector<2x192xf32> to vector<2x32xf32>
    %cst_117 = arith.constant 5.000000e-01 : f32
    %373 = vector.broadcast %cst_117 : f32 to vector<2x32xf32>
    %374 = arith.mulf %373, %372 : vector<2x32xf32>
    %375 = math.exp %374 : vector<2x32xf32>
    %c0_118 = arith.constant 0 : index
    %c0_119 = arith.constant 0 : index
    %376 = vector.load %arg1[%c0_118, %c0_119] : memref<2x32xf32, #tpu.memory_space<vmem>>, vector<2x32xf32>
    %377 = arith.mulf %376, %375 : vector<2x32xf32>
    %378 = arith.addf %371, %377 : vector<2x32xf32>
    %379 = arith.truncf %378 : vector<2x32xf32> to vector<2x32xbf16>
    %cst_120 = arith.constant dense<0.000000e+00> : vector<2x32xf32>
    %380 = tpu.matmul %379, %354, %cst_120 {dimension_numbers = #tpu.dot_dimension_numbers<[1], [0], [0], [1], [0, 0, 1, 1], [], []>} : vector<2x32xbf16>, vector<32x32xbf16>, vector<2x32xf32> -> vector<2x32xf32>
    %381 = vector.broadcast %359 : vector<1x32xf32> to vector<2x32xf32>
    %382 = arith.addf %380, %381 : vector<2x32xf32>
    %383 = math.tanh %382 : vector<2x32xf32>
    %384 = arith.truncf %383 : vector<2x32xf32> to vector<2x32xbf16>
    %cst_121 = arith.constant dense<0.000000e+00> : vector<2x32xf32>
    %385 = tpu.matmul %384, %355, %cst_121 {dimension_numbers = #tpu.dot_dimension_numbers<[1], [0], [0], [1], [0, 0, 1, 1], [], []>} : vector<2x32xbf16>, vector<32x32xbf16>, vector<2x32xf32> -> vector<2x32xf32>
    %386 = vector.broadcast %360 : vector<1x32xf32> to vector<2x32xf32>
    %387 = arith.addf %385, %386 : vector<2x32xf32>
    %388 = arith.truncf %387 : vector<2x32xf32> to vector<2x32xbf16>
    %cst_122 = arith.constant dense<0.000000e+00> : vector<2x64xf32>
    %389 = tpu.matmul %388, %356, %cst_122 {dimension_numbers = #tpu.dot_dimension_numbers<[1], [0], [0], [1], [0, 0, 1, 1], [], []>} : vector<2x32xbf16>, vector<32x64xbf16>, vector<2x64xf32> -> vector<2x64xf32>
    %390 = vector.broadcast %361 : vector<1x64xf32> to vector<2x64xf32>
    %391 = arith.addf %389, %390 : vector<2x64xf32>
    %cst_123 = arith.constant 0.000000e+00 : f32
    %392 = vector.broadcast %cst_123 : f32 to vector<2x64xf32>
    %393 = arith.cmpf oge, %391, %392 : vector<2x64xf32>
    %cst_124 = arith.constant 0.00999999977 : f32
    %394 = vector.broadcast %cst_124 : f32 to vector<2x64xf32>
    %395 = arith.mulf %394, %391 : vector<2x64xf32>
    %396 = arith.select %393, %391, %395 : vector<2x64xi1>, vector<2x64xf32>
    %397 = arith.truncf %396 : vector<2x64xf32> to vector<2x64xbf16>
    %cst_125 = arith.constant dense<0.000000e+00> : vector<2x128xf32>
    %398 = tpu.matmul %397, %357, %cst_125 {dimension_numbers = #tpu.dot_dimension_numbers<[1], [0], [0], [1], [0, 0, 1, 1], [], []>} : vector<2x64xbf16>, vector<64x128xbf16>, vector<2x128xf32> -> vector<2x128xf32>
    %399 = vector.broadcast %362 : vector<1x128xf32> to vector<2x128xf32>
    %400 = arith.addf %398, %399 : vector<2x128xf32>
    %401 = arith.addf %400, %370 : vector<2x128xf32>
    %402 = vector.broadcast %363 : vector<1x128xf32> to vector<2x128xf32>
    %403 = arith.mulf %401, %402 : vector<2x128xf32>
    %cst_126 = arith.constant dense<0.000000e+00> : vector<2xf32>
    %404 = vector.multi_reduction <add>, %403, %cst_126 [1] : vector<2x128xf32> to vector<2xf32>
    %405 = vector.shape_cast %404 : vector<2xf32> to vector<2x1xf32>
    %406 = vector.broadcast %364 : vector<1x1xf32> to vector<2x1xf32>
    %407 = arith.addf %405, %406 : vector<2x1xf32>
    %cst_127 = arith.constant 0.000000e+00 : f32
    %408 = vector.broadcast %cst_127 : f32 to vector<2x1xf32>
    %409 = arith.subf %408, %407 : vector<2x1xf32>
    %410 = math.exp %409 : vector<2x1xf32>
    %cst_128 = arith.constant 1.000000e+00 : f32
    %411 = vector.broadcast %cst_128 : f32 to vector<2x1xf32>
    %412 = arith.addf %411, %410 : vector<2x1xf32>
    %cst_129 = arith.constant 1.000000e+00 : f32
    %413 = vector.broadcast %cst_129 : f32 to vector<2x1xf32>
    %414 = arith.divf %413, %412 : vector<2x1xf32>
    %c0_130 = arith.constant 0 : index
    %c0_131 = arith.constant 0 : index
    %415 = vector.load %arg10[%c0_130, %c0_131] : memref<2x128xf32, #tpu.memory_space<vmem>>, vector<2x128xf32>
    tpu.vector_store %arg10[%c0_130, %c0_131], %401 {strides = array<i32>} : memref<2x128xf32, #tpu.memory_space<vmem>>, vector<2x128xf32>,
    %416 = tpu.iota {dimensions = array<i32: 1>} : vector<2x64xi32>
    %c0_i32_132 = arith.constant 0 : i32
    %417 = vector.broadcast %c0_i32_132 : i32 to vector<2x64xi32>
    %418 = arith.cmpi eq, %416, %417 : vector<2x64xi32>
    %cst_133 = arith.constant 0.000000e+00 : f32
    %419 = vector.shape_cast %414 : vector<2x1xf32> to vector<2x1xf32>
    %420 = vector.broadcast %419 : vector<2x1xf32> to vector<2x64xf32>
    %421 = vector.broadcast %cst_133 : f32 to vector<2x64xf32>
    %422 = arith.select %418, %420, %421 : vector<2x64xi1>, vector<2x64xf32>
    %423 = tpu.concatenate %371, %372, %422 in 1 : vector<2x32xf32>, vector<2x32xf32>, vector<2x64xf32> -> vector<2x128xf32>
    %c0_134 = arith.constant 0 : index
    %c0_135 = arith.constant 0 : index
    %424 = vector.load %arg11[%c0_134, %c0_135] : memref<2x128xf32, #tpu.memory_space<vmem>>, vector<2x128xf32>
    tpu.vector_store %arg11[%c0_134, %c0_135], %423 {strides = array<i32>} : memref<2x128xf32, #tpu.memory_space<vmem>>, vector<2x128xf32>,
    return
  }
}

</mosaic_0001>

<llo_original>
// kernel: _lambda_.1
$region0: #{_lambda_.1}
  #allocation0 [shape = 'u32[]', space=smem, size = 0x4, offset = 0x4, fixed_abs, tag = 'smem constant byte address 0x4 - core index']
  #allocation1 [shape = 'u32[144,128]{1,0:T(1,128)}', space=vmem, size = 0x12000, scoped, tag = 'internal scratch']
  %s0 = inlined_call_operand.vmem [shape: f32[16,128], index: 0, kind: input, shape index: {}]
  %s1 = inlined_call_operand.vmem [shape: f32[2,32], index: 1, kind: input, shape index: {}]
  %s2 = inlined_call_operand.vmem [shape: bf16[2,128,384], index: 2, kind: input, shape index: {}]
  %s3 = inlined_call_operand.vmem [shape: bf16[2,128,128], index: 3, kind: input, shape index: {}]
  %s4 = inlined_call_operand.vmem [shape: bf16[2,128,256], index: 4, kind: input, shape index: {}]
  %s5 = inlined_call_operand.vmem [shape: bf16[2,256,128], index: 5, kind: input, shape index: {}]
  %s6 = inlined_call_operand.vmem [shape: f32[2,8,384], index: 6, kind: input, shape index: {}]
  %s7 = inlined_call_operand.vmem [shape: bf16[128,192], index: 7, kind: input, shape index: {}]
  %s8 = inlined_call_operand.vmem [shape: bf16[160,128], index: 8, kind: input, shape index: {}]
  %s9 = inlined_call_operand.vmem [shape: f32[8,192], index: 9, kind: input, shape index: {}]
  %s10 = inlined_call_operand.hbm [shape: f32[2,128], index: 10, kind: output, shape index: {0}]
  %s11 = inlined_call_operand.vmem [shape: f32[2,128], index: 11, kind: output, shape index: {1}]
  %12 = xla_tuple %s10, %s11
  %s13 = sld [smem:[#allocation0]]
  $region58: #{_lambda_.1} parent=0
    _
  %s15 = ssub.s32 1, %s13
  %s16 = scalar_select 0, %s15, %s13
  $region1: #{_lambda_.1} parent=0
    #allocation2 [shape = 'u8[1024]{0}', space=vmem, size = 0x400, scoped, tag = 'output window, operand 0, single buffered']
    #allocation3 [shape = 's32[1]{0}', space=sflag, size = 0x4, scoped, tag = 'scoped memory for _lambda_.1']
    %17 = vsyncpa [#allocation3], 0
    // Predicated region
    $region2: #{_lambda_.1} parent=1 // pred_check
      _
    $region3: #{_lambda_.1} parent=1 // pred_check_branch
      %19 = sbr.rel (0) target = $region5
    $region4: #{_lambda_.1} parent=1 // pred_region
      _
    $region5: #{_lambda_.1} parent=1 // pred_fallthru
      _
    // Predicated region
    $region6: #{_lambda_.1} parent=1 // pred_check
      _
    $region7: #{_lambda_.1} parent=1 // pred_check_branch
      %21 = sbr.rel (0) target = $region9
    $region8: #{_lambda_.1} parent=1 // pred_region
      _
    $region9: #{_lambda_.1} parent=1 // pred_fallthru
      _
    // Predicated region
    $region10: #{_lambda_.1} parent=1 // pred_check
      _
    $region11: #{_lambda_.1} parent=1 // pred_check_branch
      %23 = sbr.rel (0) target = $region13
    $region12: #{_lambda_.1} parent=1 // pred_region
      _
    $region13: #{_lambda_.1} parent=1 // pred_fallthru
      _
    // Predicated region
    $region14: #{_lambda_.1} parent=1 // pred_check
      _
    $region15: #{_lambda_.1} parent=1 // pred_check_branch
      %25 = sbr.rel (0) target = $region17
    $region16: #{_lambda_.1} parent=1 // pred_region
      _
    $region17: #{_lambda_.1} parent=1 // pred_fallthru
      _
    // Predicated region
    $region18: #{_lambda_.1} parent=1 // pred_check
      _
    $region19: #{_lambda_.1} parent=1 // pred_check_branch
      %27 = sbr.rel (0) target = $region21
    $region20: #{_lambda_.1} parent=1 // pred_region
      _
    $region21: #{_lambda_.1} parent=1 // pred_fallthru
      _
    // Predicated region
    $region22: #{_lambda_.1} parent=1 // pred_check
      _
    $region23: #{_lambda_.1} parent=1 // pred_check_branch
      %29 = sbr.rel (0) target = $region25
    $region24: #{_lambda_.1} parent=1 // pred_region
      _
    $region25: #{_lambda_.1} parent=1 // pred_fallthru
      _
    // Predicated region
    $region26: #{_lambda_.1} parent=1 // pred_check
      _
    $region27: #{_lambda_.1} parent=1 // pred_check_branch
      %31 = sbr.rel (0) target = $region29
    $region28: #{_lambda_.1} parent=1 // pred_region
      _
    $region29: #{_lambda_.1} parent=1 // pred_fallthru
      _
    // Predicated region
    $region30: #{_lambda_.1} parent=1 // pred_check
      _
    $region31: #{_lambda_.1} parent=1 // pred_check_branch
      %33 = sbr.rel (0) target = $region33
    $region32: #{_lambda_.1} parent=1 // pred_region
      _
    $region33: #{_lambda_.1} parent=1 // pred_fallthru
      _
    // Predicated region
    $region34: #{_lambda_.1} parent=1 // pred_check
      _
    $region35: #{_lambda_.1} parent=1 // pred_check_branch
      %35 = sbr.rel (0) target = $region37
    $region36: #{_lambda_.1} parent=1 // pred_region
      _
    $region37: #{_lambda_.1} parent=1 // pred_fallthru
      _
    // Predicated region
    $region38: #{_lambda_.1} parent=1 // pred_check
      _
    $region39: #{_lambda_.1} parent=1 // pred_check_branch
      %37 = sbr.rel (0) target = $region41
    $region40: #{_lambda_.1} parent=1 // pred_region
      _
    $region41: #{_lambda_.1} parent=1 // pred_fallthru
      _
    %v39 = vld [vmem:[%s0] sm:$0xff]
    %v40 = vld [vmem:[%s0 + $0x8] sm:$0xff]
    %v41 = vlaneseq
    %v42 = vshrl.u32 %v41, 7
    %v43 = vadd.s32 %v42, 8
    %v44 = vlaneseq
    %v45 = vand.u32 %v44, 127
    %vm46 = vcmp.lt.s32.totalorder %v42, 0
    %v47 = vsub.s32 0, %v42
    %v48 = vsel %vm46, %v47, %v42
    %v49 = vshrl.u32 %v48, 1
    %v50 = vand.u32 %v48, 1
    %v51 = vsub.s32 0, %v50
    %v52 = vsel %vm46, %v51, %v50
    %vm53 = vcmp.lt.s32.totalorder %v43, 0
    %v54 = vsub.s32 0, %v43
    %v55 = vsel %vm53, %v54, %v43
    %v56 = vshrl.u32 %v55, 1
    %v57 = vand.u32 %v55, 1
    %v58 = vsub.s32 0, %v57
    %v59 = vsel %vm53, %v58, %v57
    %vm60 = vcmp.ne.s32.totalorder %v52, 0
    %vm61 = vcmp.ne.s32.totalorder %v59, 0
    %vm62 = vcmp.lt.s32.totalorder %v52, 0
    %vm63 = vcmp.lt.s32.totalorder %v59, 0
    %vm64 = vmand %vm62, %vm60
    %vm65 = vmand %vm63, %vm61
    %v66 = vadd.s32 %v52, 2
    %v67 = vadd.s32 %v59, 2
    %v68 = vsel %vm64, %v66, %v52
    %v69 = vsel %vm65, %v67, %v59
    %vm70 = vcmp.lt.s32.totalorder %v45, 0
    %v71 = vsub.s32 0, %v45
    %v72 = vsel %vm70, %v71, %v45
    %v73 = vshrl.u32 %v72, 1
    %v74 = vand.u32 %v72, 1
    %v75 = vsub.s32 0, %v74
    %v76 = vsel %vm70, %v75, %v74
    %vm77 = vcmp.ne.s32.totalorder %v76, 0
    %vm78 = vcmp.lt.s32.totalorder %v76, 0
    %vm79 = vmand %vm78, %vm77
    %v80 = vadd.s32 %v76, 2
    %v81 = vsel %vm79, %v80, %v76
    %vm82 = vcmp.eq.s32.totalorder %v68, %v81
    %vm83 = vcmp.eq.s32.totalorder %v69, %v81
    %v84 = vsel %vm82, 0.0, -1e+30
    %v85 = vsel %vm83, 0.0, -1e+30
    %v86 = vld [vmem:[%s2] sm:$0xff]
    %v87 = vld [vmem:[%s2 + $0x8] sm:$0xf]
    %v88 = vld [vmem:[%s2 + $0xc] sm:$0xff]
    %v89 = vld [vmem:[%s2 + $0x14] sm:$0xf]
    %v90 = vld [vmem:[%s2 + $0x18] sm:$0xff]
    %v91 = vld [vmem:[%s2 + $0x20] sm:$0xf]
    %v92 = vld [vmem:[%s2 + $0x24] sm:$0xff]
    %v93 = vld [vmem:[%s2 + $0x2c] sm:$0xf]
    %v94 = vld [vmem:[%s2 + $0x30] sm:$0xff]
    %v95 = vld [vmem:[%s2 + $0x38] sm:$0xf]
    %v96 = vld [vmem:[%s2 + $0x3c] sm:$0xff]
    %v97 = vld [vmem:[%s2 + $0x44] sm:$0xf]
    %v98 = vld [vmem:[%s2 + $0x48] sm:$0xff]
    %v99 = vld [vmem:[%s2 + $0x50] sm:$0xf]
    %v100 = vld [vmem:[%s2 + $0x54] sm:$0xff]
    %v101 = vld [vmem:[%s2 + $0x5c] sm:$0xf]
    %v102 = vld [vmem:[%s2 + $0x60] sm:$0xff]
    %v103 = vld [vmem:[%s2 + $0x68] sm:$0xf]
    %v104 = vld [vmem:[%s2 + $0x6c] sm:$0xff]
    %v105 = vld [vmem:[%s2 + $0x74] sm:$0xf]
    %v106 = vld [vmem:[%s2 + $0x78] sm:$0xff]
    %v107 = vld [vmem:[%s2 + $0x80] sm:$0xf]
    %v108 = vld [vmem:[%s2 + $0x84] sm:$0xff]
    %v109 = vld [vmem:[%s2 + $0x8c] sm:$0xf]
    %v110 = vld [vmem:[%s2 + $0x90] sm:$0xff]
    %v111 = vld [vmem:[%s2 + $0x98] sm:$0xf]
    %v112 = vld [vmem:[%s2 + $0x9c] sm:$0xff]
    %v113 = vld [vmem:[%s2 + $0xa4] sm:$0xf]
    %v114 = vld [vmem:[%s2 + $0xa8] sm:$0xff]
    %v115 = vld [vmem:[%s2 + $0xb0] sm:$0xf]
    %v116 = vld [vmem:[%s2 + $0xb4] sm:$0xff]
    %v117 = vld [vmem:[%s2 + $0xbc] sm:$0xf]
    %v118 = vld [vmem:[%s3] sm:$0xf]
    %v119 = vld [vmem:[%s3 + $0x4] sm:$0xf]
    %v120 = vld [vmem:[%s3 + $0x8] sm:$0xf]
    %v121 = vld [vmem:[%s3 + $0xc] sm:$0xf]
    %v122 = vld [vmem:[%s3 + $0x10] sm:$0xf]
    %v123 = vld [vmem:[%s3 + $0x14] sm:$0xf]
    %v124 = vld [vmem:[%s3 + $0x18] sm:$0xf]
    %v125 = vld [vmem:[%s3 + $0x1c] sm:$0xf]
    %v126 = vld [vmem:[%s3 + $0x20] sm:$0xf]
    %v127 = vld [vmem:[%s3 + $0x24] sm:$0xf]
    %v128 = vld [vmem:[%s3 + $0x28] sm:$0xf]
    %v129 = vld [vmem:[%s3 + $0x2c] sm:$0xf]
    %v130 = vld [vmem:[%s3 + $0x30] sm:$0xf]
    %v131 = vld [vmem:[%s3 + $0x34] sm:$0xf]
    %v132 = vld [vmem:[%s3 + $0x38] sm:$0xf]
    %v133 = vld [vmem:[%s3 + $0x3c] sm:$0xf]
    %v134 = vld [vmem:[%s4] sm:$0xff]
    %v135 = vld [vmem:[%s4 + $0x8] sm:$0xff]
    %v136 = vld [vmem:[%s4 + $0x10] sm:$0xff]
    %v137 = vld [vmem:[%s4 + $0x18] sm:$0xff]
    %v138 = vld [vmem:[%s4 + $0x20] sm:$0xff]
    %v139 = vld [vmem:[%s4 + $0x28] sm:$0xff]
    %v140 = vld [vmem:[%s4 + $0x30] sm:$0xff]
    %v141 = vld [vmem:[%s4 + $0x38] sm:$0xff]
    %v142 = vld [vmem:[%s4 + $0x40] sm:$0xff]
    %v143 = vld [vmem:[%s4 + $0x48] sm:$0xff]
    %v144 = vld [vmem:[%s4 + $0x50] sm:$0xff]
    %v145 = vld [vmem:[%s4 + $0x58] sm:$0xff]
    %v146 = vld [vmem:[%s4 + $0x60] sm:$0xff]
    %v147 = vld [vmem:[%s4 + $0x68] sm:$0xff]
    %v148 = vld [vmem:[%s4 + $0x70] sm:$0xff]
    %v149 = vld [vmem:[%s4 + $0x78] sm:$0xff]
    %v150 = vld [vmem:[%s5] sm:$0xf]
    %v151 = vld [vmem:[%s5 + $0x4] sm:$0xf]
    %v152 = vld [vmem:[%s5 + $0x8] sm:$0xf]
    %v153 = vld [vmem:[%s5 + $0xc] sm:$0xf]
    %v154 = vld [vmem:[%s5 + $0x10] sm:$0xf]
    %v155 = vld [vmem:[%s5 + $0x14] sm:$0xf]
    %v156 = vld [vmem:[%s5 + $0x18] sm:$0xf]
    %v157 = vld [vmem:[%s5 + $0x1c] sm:$0xf]
    %v158 = vld [vmem:[%s5 + $0x20] sm:$0xf]
    %v159 = vld [vmem:[%s5 + $0x24] sm:$0xf]
    %v160 = vld [vmem:[%s5 + $0x28] sm:$0xf]
    %v161 = vld [vmem:[%s5 + $0x2c] sm:$0xf]
    %v162 = vld [vmem:[%s5 + $0x30] sm:$0xf]
    %v163 = vld [vmem:[%s5 + $0x34] sm:$0xf]
    %v164 = vld [vmem:[%s5 + $0x38] sm:$0xf]
    %v165 = vld [vmem:[%s5 + $0x3c] sm:$0xf]
    %v166 = vld [vmem:[%s5 + $0x40] sm:$0xf]
    %v167 = vld [vmem:[%s5 + $0x44] sm:$0xf]
    %v168 = vld [vmem:[%s5 + $0x48] sm:$0xf]
    %v169 = vld [vmem:[%s5 + $0x4c] sm:$0xf]
    %v170 = vld [vmem:[%s5 + $0x50] sm:$0xf]
    %v171 = vld [vmem:[%s5 + $0x54] sm:$0xf]
    %v172 = vld [vmem:[%s5 + $0x58] sm:$0xf]
    %v173 = vld [vmem:[%s5 + $0x5c] sm:$0xf]
    %v174 = vld [vmem:[%s5 + $0x60] sm:$0xf]
    %v175 = vld [vmem:[%s5 + $0x64] sm:$0xf]
    %v176 = vld [vmem:[%s5 + $0x68] sm:$0xf]
    %v177 = vld [vmem:[%s5 + $0x6c] sm:$0xf]
    %v178 = vld [vmem:[%s5 + $0x70] sm:$0xf]
    %v179 = vld [vmem:[%s5 + $0x74] sm:$0xf]
    %v180 = vld [vmem:[%s5 + $0x78] sm:$0xf]
    %v181 = vld [vmem:[%s5 + $0x7c] sm:$0xf]
    %v182 = vld [vmem:[%s6] sm:$0xff]
    %v183 = vld [vmem:[%s6 + $0x8] sm:$0xff]
    %v184 = vld [vmem:[%s6 + $0x10] sm:$0xff]
    %v185 = vpack.c.bf16 %v40, %v39
    %v186 = vlaneseq
    %v187 = vshrl.u32 %v186, 7
    %v188 = vsub.s32 0, %v187
    %v189 = vrot.slane %v182, %v188
    %v190 = vlaneseq
    %v191 = vshrl.u32 %v190, 7
    %v192 = vsub.s32 0, %v191
    %v193 = vrot.slane %v183, %v192
    %v194 = vlaneseq
    %v195 = vshrl.u32 %v194, 7
    %v196 = vsub.s32 0, %v195
    %v197 = vrot.slane %v184, %v196
    %v230 = vunpack.c.l.b16 %v86
    %v231 = vunpack.c.h.b16 %v86
    %v232 = vunpack.c.l.b16 %v87
    %v233 = vunpack.c.l.b16 %v88
    %v234 = vunpack.c.h.b16 %v88
    %v235 = vunpack.c.l.b16 %v89
    %v236 = vunpack.c.l.b16 %v90
    %v237 = vunpack.c.h.b16 %v90
    %v238 = vunpack.c.l.b16 %v91
    %v239 = vunpack.c.l.b16 %v92
    %v240 = vunpack.c.h.b16 %v92
    %v241 = vunpack.c.l.b16 %v93
    %v242 = vunpack.c.l.b16 %v94
    %v243 = vunpack.c.h.b16 %v94
    %v244 = vunpack.c.l.b16 %v95
    %v245 = vunpack.c.l.b16 %v96
    %v246 = vunpack.c.h.b16 %v96
    %v247 = vunpack.c.l.b16 %v97
    %v248 = vunpack.c.l.b16 %v98
    %v249 = vunpack.c.h.b16 %v98
    %v250 = vunpack.c.l.b16 %v99
    %v251 = vunpack.c.l.b16 %v100
    %v252 = vunpack.c.h.b16 %v100
    %v253 = vunpack.c.l.b16 %v101
    %v254 = vunpack.c.l.b16 %v102
    %v255 = vunpack.c.h.b16 %v102
    %v256 = vunpack.c.l.b16 %v103
    %v257 = vunpack.c.l.b16 %v104
    %v258 = vunpack.c.h.b16 %v104
    %v259 = vunpack.c.l.b16 %v105
    %v260 = vunpack.c.l.b16 %v106
    %v261 = vunpack.c.h.b16 %v106
    %v262 = vunpack.c.l.b16 %v107
    %v263 = vunpack.c.l.b16 %v108
    %v264 = vunpack.c.h.b16 %v108
    %v265 = vunpack.c.l.b16 %v109
    %v266 = vunpack.c.l.b16 %v110
    %v267 = vunpack.c.h.b16 %v110
    %v268 = vunpack.c.l.b16 %v111
    %v269 = vunpack.c.l.b16 %v112
    %v270 = vunpack.c.h.b16 %v112
    %v271 = vunpack.c.l.b16 %v113
    %v272 = vunpack.c.l.b16 %v114
    %v273 = vunpack.c.h.b16 %v114
    %v274 = vunpack.c.l.b16 %v115
    %v275 = vunpack.c.l.b16 %v116
    %v276 = vunpack.c.h.b16 %v116
    %v277 = vunpack.c.l.b16 %v117
    %v278 = vpack.c.b16 %v233, %v230
    %v279 = vpack.c.b16 %v234, %v231
    %v280 = vpack.c.b16 %v235, %v232
    %v281 = vpack.c.b16 %v239, %v236
    %v282 = vpack.c.b16 %v240, %v237
    %v283 = vpack.c.b16 %v241, %v238
    %v284 = vpack.c.b16 %v245, %v242
    %v285 = vpack.c.b16 %v246, %v243
    %v286 = vpack.c.b16 %v247, %v244
    %v287 = vpack.c.b16 %v251, %v248
    %v288 = vpack.c.b16 %v252, %v249
    %v289 = vpack.c.b16 %v253, %v250
    %v290 = vpack.c.b16 %v257, %v254
    %v291 = vpack.c.b16 %v258, %v255
    %v292 = vpack.c.b16 %v259, %v256
    %v293 = vpack.c.b16 %v263, %v260
    %v294 = vpack.c.b16 %v264, %v261
    %v295 = vpack.c.b16 %v265, %v262
    %v296 = vpack.c.b16 %v269, %v266
    %v297 = vpack.c.b16 %v270, %v267
    %v298 = vpack.c.b16 %v271, %v268
    %v299 = vpack.c.b16 %v275, %v272
    %v300 = vpack.c.b16 %v276, %v273
    %v301 = vpack.c.b16 %v277, %v274
    %326 = vmatprep.subr.bf16.mxu0 %v279
    %327 = vmatpush1.bf16.msra.mxu0 %v278
    %328 = vmatprep.subr.bf16.mxu0 %v282
    %329 = vmatpush1.bf16.msra.mxu0 %v281
    %330 = vmatprep.subr.bf16.mxu0 %v285
    %331 = vmatpush1.bf16.msra.mxu0 %v284
    %332 = vmatprep.subr.bf16.mxu0 %v288
    %333 = vmatpush1.bf16.msra.mxu0 %v287
    %334 = vmatprep.subr.bf16.mxu0 %v291
    %335 = vmatpush1.bf16.msra.mxu0 %v290
    %336 = vmatprep.subr.bf16.mxu0 %v294
    %337 = vmatpush1.bf16.msra.mxu0 %v293
    %338 = vmatprep.subr.bf16.mxu0 %v297
    %339 = vmatpush1.bf16.msra.mxu0 %v296
    %340 = vmatprep.subr.bf16.mxu0 %v300
    %341 = vmatpush1.bf16.msra.mxu0 %v299
    %342 = vmatprep.subr.bf16.mxu0 0
    %343 = vmatpush1.bf16.msra.mxu0 0
    %344 = vmatprep.subr.bf16.mxu0 0
    %345 = vmatpush1.bf16.msra.mxu0 0
    %346 = vmatprep.subr.bf16.mxu0 0
    %347 = vmatpush1.bf16.msra.mxu0 0
    %348 = vmatprep.subr.bf16.mxu0 0
    %349 = vmatpush1.bf16.msra.mxu0 0
    %350 = vmatprep.subr.bf16.mxu0 0
    %351 = vmatpush1.bf16.msra.mxu0 0
    %352 = vmatprep.subr.bf16.mxu0 0
    %353 = vmatpush1.bf16.msra.mxu0 0
    %354 = vmatprep.subr.bf16.mxu0 0
    %355 = vmatpush1.bf16.msra.mxu0 0
    %356 = vmatprep.subr.bf16.mxu0 0
    %357 = vmatpush1.bf16.msra.mxu0 0
    %358 = vmatprep.mubr.bf16.mxu0 0
    %359 = vmatmul.mubr.bf16.gmra.mrb[0].mxu0 %v185
    %v360 = vpop.f32.mrb[0].mxu0
    %v361 = vadd.f32 %v189, %v360
    %v362 = vpop.f32.mrb[0].mxu0
    %v363 = vadd.f32 %v193, %v362
    %v364 = vpop.f32.mrb[0].mxu0
    %v365 = vadd.f32 %v189, %v364
    %v366 = vpop.f32.mrb[0].mxu0
    %v367 = vadd.f32 %v193, %v366
    %368 = vdwg.mxu0
    %369 = vmatprep.subr.bf16.mxu0 0
    %370 = vmatpush1.bf16.msra.mxu0 %v280
    %371 = vmatprep.subr.bf16.mxu0 0
    %372 = vmatpush1.bf16.msra.mxu0 %v283
    %373 = vmatprep.subr.bf16.mxu0 0
    %374 = vmatpush1.bf16.msra.mxu0 %v286
    %375 = vmatprep.subr.bf16.mxu0 0
    %376 = vmatpush1.bf16.msra.mxu0 %v289
    %377 = vmatprep.subr.bf16.mxu0 0
    %378 = vmatpush1.bf16.msra.mxu0 %v292
    %379 = vmatprep.subr.bf16.mxu0 0
    %380 = vmatpush1.bf16.msra.mxu0 %v295
    %381 = vmatprep.subr.bf16.mxu0 0
    %382 = vmatpush1.bf16.msra.mxu0 %v298
    %383 = vmatprep.subr.bf16.mxu0 0
    %384 = vmatpush1.bf16.msra.mxu0 %v301
    %385 = vmatprep.subr.bf16.mxu0 0
    %386 = vmatpush1.bf16.msra.mxu0 0
    %387 = vmatprep.subr.bf16.mxu0 0
    %388 = vmatpush1.bf16.msra.mxu0 0
    %389 = vmatprep.subr.bf16.mxu0 0
    %390 = vmatpush1.bf16.msra.mxu0 0
    %391 = vmatprep.subr.bf16.mxu0 0
    %392 = vmatpush1.bf16.msra.mxu0 0
    %393 = vmatprep.subr.bf16.mxu0 0
    %394 = vmatpush1.bf16.msra.mxu0 0
    %395 = vmatprep.subr.bf16.mxu0 0
    %396 = vmatpush1.bf16.msra.mxu0 0
    %397 = vmatprep.subr.bf16.mxu0 0
    %398 = vmatpush1.bf16.msra.mxu0 0
    %399 = vmatprep.subr.bf16.mxu0 0
    %400 = vmatpush1.bf16.msra.mxu0 0
    %401 = vmatprep.mubr.bf16.mxu0 0
    %402 = vmatmul.mubr.bf16.gmra.mrb[0].mxu0 %v185
    %v403 = vpop.f32.mrb[0].mxu0
    %v404 = vadd.f32 %v197, %v403
    %v405 = vpop.f32.mrb[0].mxu0
    %v406 = vpop.f32.mrb[0].mxu0
    %v407 = vadd.f32 %v197, %v406
    %v408 = vpop.f32.mrb[0].mxu0
    %409 = vdwg.mxu0
    %v410 = vpack.c.bf16 %v365, %v361
    %v411 = vpack.c.bf16 %v367, %v363
    %v412 = vpack.c.bf16 %v407, %v404
    %vm413 = vcmask 261120
    %v415 = vsel %vm413, %v410, 0
    %v418 = vsel %vm413, %v411, 0
    %420 = vmatprep.subr.bf16.mxu0 0
    %421 = vmatpush1.bf16.xpose.msra.mxu0 %v418
    %422 = vmatprep.subr.bf16.mxu0 0
    %423 = vmatpush1.bf16.xpose.msra.mxu0 0
    %424 = vmatprep.subr.bf16.mxu0 0
    %425 = vmatpush1.bf16.xpose.msra.mxu0 0
    %426 = vmatprep.subr.bf16.mxu0 0
    %427 = vmatpush1.bf16.xpose.msra.mxu0 0
    %428 = vmatprep.subr.bf16.mxu0 0
    %429 = vmatpush1.bf16.xpose.msra.mxu0 0
    %430 = vmatprep.subr.bf16.mxu0 0
    %431 = vmatpush1.bf16.xpose.msra.mxu0 0
    %432 = vmatprep.subr.bf16.mxu0 0
    %433 = vmatpush1.bf16.xpose.msra.mxu0 0
    %434 = vmatprep.subr.bf16.mxu0 0
    %435 = vmatpush1.bf16.xpose.msra.mxu0 0
    %436 = vmatprep.subr.bf16.mxu0 0
    %437 = vmatpush1.bf16.xpose.msra.mxu0 0
    %438 = vmatprep.subr.bf16.mxu0 0
    %439 = vmatpush1.bf16.xpose.msra.mxu0 0
    %440 = vmatprep.subr.bf16.mxu0 0
    %441 = vmatpush1.bf16.xpose.msra.mxu0 0
    %442 = vmatprep.subr.bf16.mxu0 0
    %443 = vmatpush1.bf16.xpose.msra.mxu0 0
    %444 = vmatprep.subr.bf16.mxu0 0
    %445 = vmatpush1.bf16.xpose.msra.mxu0 0
    %446 = vmatprep.subr.bf16.mxu0 0
    %447 = vmatpush1.bf16.xpose.msra.mxu0 0
    %448 = vmatprep.subr.bf16.mxu0 0
    %449 = vmatpush1.bf16.xpose.msra.mxu0 0
    %450 = vmatprep.subr.bf16.mxu0 0
    %451 = vmatpush1.bf16.xpose.msra.mxu0 0
    %452 = vmatprep.mubr.bf16.mxu0 0
    %453 = vmatmul.mubr.bf16.gmra.mrb[0].mxu0 %v415
    %v454 = vpop.f32.mrb[0].mxu0
    %v455 = vadd.f32 0.0, %v454
    %v456 = vpop.f32.mrb[0].mxu0
    %v457 = vpop.f32.mrb[0].mxu0
    %v458 = vadd.f32 0.0, %v457
    %v459 = vpop.f32.mrb[0].mxu0
    %460 = vdwg.mxu0
    %v461 = vmul.f32 %v455, 0.17677669
    %v462 = vmul.f32 %v458, 0.17677669
    %v463 = vadd.f32 %v461, %v84
    %v464 = vadd.f32 %v462, %v85
    %vm465 = vcmask 130048
    %v466 = vsel %vm465, %v463, -inf
    %467 = vmax.xlane.f32.xlu0 %v466
    %v468 = vpop.xlane.xlu0 %467
    %v469 = vsel %vm465, %v464, -inf
    %470 = vmax.xlane.f32.xlu0 %v469
    %v471 = vpop.xlane.xlu0 %470
    %v472 = vsub.f32 %v463, %v468
    %v473 = vsub.f32 %v464, %v471
    %v474 = vmul.f32 %v472, 1.442695
    %v475 = vpow.pop %v474
    %v476 = vmul.f32 %v473, 1.442695
    %v477 = vpow.pop %v476
    %v478 = vsel %vm465, %v475, 0.0
    %479 = vadd.xlane.f32.xlu0 %v478
    %v480 = vpop.xlane.xlu0 %479
    %v481 = vsel %vm465, %v477, 0.0
    %482 = vadd.xlane.f32.xlu0 %v481
    %v483 = vpop.xlane.xlu0 %482
    %v484 = vrcp.pop %v480
    %v485 = vrcp.pop %v483
    %v486 = vmul.f32 %v475, %v484
    %v487 = vmul.f32 %v477, %v485
    %v488 = vpack.c.bf16 %v487, %v486
    %v490 = vsel %vm465, %v488, 0
    %492 = vmatprep.subr.bf16.mxu0 0
    %493 = vmatpush1.bf16.msra.mxu0 %v412
    %494 = vmatprep.subr.bf16.mxu0 0
    %495 = vmatpush1.bf16.msra.mxu0 0
    %496 = vmatprep.subr.bf16.mxu0 0
    %497 = vmatpush1.bf16.msra.mxu0 0
    %498 = vmatprep.subr.bf16.mxu0 0
    %499 = vmatpush1.bf16.msra.mxu0 0
    %500 = vmatprep.subr.bf16.mxu0 0
    %501 = vmatpush1.bf16.msra.mxu0 0
    %502 = vmatprep.subr.bf16.mxu0 0
    %503 = vmatpush1.bf16.msra.mxu0 0
    %504 = vmatprep.subr.bf16.mxu0 0
    %505 = vmatpush1.bf16.msra.mxu0 0
    %506 = vmatprep.subr.bf16.mxu0 0
    %507 = vmatpush1.bf16.msra.mxu0 0
    %508 = vmatprep.subr.bf16.mxu0 0
    %509 = vmatpush1.bf16.msra.mxu0 0
    %510 = vmatprep.subr.bf16.mxu0 0
    %511 = vmatpush1.bf16.msra.mxu0 0
    %512 = vmatprep.subr.bf16.mxu0 0
    %513 = vmatpush1.bf16.msra.mxu0 0
    %514 = vmatprep.subr.bf16.mxu0 0
    %515 = vmatpush1.bf16.msra.mxu0 0
    %516 = vmatprep.subr.bf16.mxu0 0
    %517 = vmatpush1.bf16.msra.mxu0 0
    %518 = vmatprep.subr.bf16.mxu0 0
    %519 = vmatpush1.bf16.msra.mxu0 0
    %520 = vmatprep.subr.bf16.mxu0 0
    %521 = vmatpush1.bf16.msra.mxu0 0
    %522 = vmatprep.subr.bf16.mxu0 0
    %523 = vmatpush1.bf16.msra.mxu0 0
    %524 = vmatprep.mubr.bf16.mxu0 0
    %525 = vmatmul.mubr.bf16.gmra.mrb[0].mxu0 %v490
    %v526 = vpop.f32.mrb[0].mxu0
    %v527 = vadd.f32 0.0, %v526
    %v528 = vpop.f32.mrb[0].mxu0
    %v529 = vpop.f32.mrb[0].mxu0
    %v530 = vadd.f32 0.0, %v529
    %v531 = vpop.f32.mrb[0].mxu0
    %532 = vdwg.mxu0
    %534 = vrot.lane.b32.xlu0 %v410, 96
    %v535 = vpop.permute.xlu0 %534
    %537 = vrot.lane.b32.xlu0 %v411, 96
    %v538 = vpop.permute.xlu0 %537
    %v540 = vsel %vm413, %v535, 0
    %v543 = vsel %vm413, %v538, 0
    %545 = vmatprep.subr.bf16.mxu0 0
    %546 = vmatpush1.bf16.xpose.msra.mxu0 %v543
    %547 = vmatprep.subr.bf16.mxu0 0
    %548 = vmatpush1.bf16.xpose.msra.mxu0 0
    %549 = vmatprep.subr.bf16.mxu0 0
    %550 = vmatpush1.bf16.xpose.msra.mxu0 0
    %551 = vmatprep.subr.bf16.mxu0 0
    %552 = vmatpush1.bf16.xpose.msra.mxu0 0
    %553 = vmatprep.subr.bf16.mxu0 0
    %554 = vmatpush1.bf16.xpose.msra.mxu0 0
    %555 = vmatprep.subr.bf16.mxu0 0
    %556 = vmatpush1.bf16.xpose.msra.mxu0 0
    %557 = vmatprep.subr.bf16.mxu0 0
    %558 = vmatpush1.bf16.xpose.msra.mxu0 0
    %559 = vmatprep.subr.bf16.mxu0 0
    %560 = vmatpush1.bf16.xpose.msra.mxu0 0
    %561 = vmatprep.subr.bf16.mxu0 0
    %562 = vmatpush1.bf16.xpose.msra.mxu0 0
    %563 = vmatprep.subr.bf16.mxu0 0
    %564 = vmatpush1.bf16.xpose.msra.mxu0 0
    %565 = vmatprep.subr.bf16.mxu0 0
    %566 = vmatpush1.bf16.xpose.msra.mxu0 0
    %567 = vmatprep.subr.bf16.mxu0 0
    %568 = vmatpush1.bf16.xpose.msra.mxu0 0
    %569 = vmatprep.subr.bf16.mxu0 0
    %570 = vmatpush1.bf16.xpose.msra.mxu0 0
    %571 = vmatprep.subr.bf16.mxu0 0
    %572 = vmatpush1.bf16.xpose.msra.mxu0 0
    %573 = vmatprep.subr.bf16.mxu0 0
    %574 = vmatpush1.bf16.xpose.msra.mxu0 0
    %575 = vmatprep.subr.bf16.mxu0 0
    %576 = vmatpush1.bf16.xpose.msra.mxu0 0
    %577 = vmatprep.mubr.bf16.mxu0 0
    %578 = vmatmul.mubr.bf16.gmra.mrb[0].mxu0 %v540
    %v579 = vpop.f32.mrb[0].mxu0
    %v580 = vadd.f32 0.0, %v579
    %v581 = vpop.f32.mrb[0].mxu0
    %v582 = vpop.f32.mrb[0].mxu0
    %v583 = vadd.f32 0.0, %v582
    %v584 = vpop.f32.mrb[0].mxu0
    %585 = vdwg.mxu0
    %v586 = vmul.f32 %v580, 0.17677669
    %v587 = vmul.f32 %v583, 0.17677669
    %v588 = vadd.f32 %v586, %v84
    %v589 = vadd.f32 %v587, %v85
    %v590 = vsel %vm465, %v588, -inf
    %591 = vmax.xlane.f32.xlu0 %v590
    %v592 = vpop.xlane.xlu0 %591
    %v593 = vsel %vm465, %v589, -inf
    %594 = vmax.xlane.f32.xlu0 %v593
    %v595 = vpop.xlane.xlu0 %594
    %v596 = vsub.f32 %v588, %v592
    %v597 = vsub.f32 %v589, %v595
    %v598 = vmul.f32 %v596, 1.442695
    %v599 = vpow.pop %v598
    %v600 = vmul.f32 %v597, 1.442695
    %v601 = vpow.pop %v600
    %v602 = vsel %vm465, %v599, 0.0
    %603 = vadd.xlane.f32.xlu0 %v602
    %v604 = vpop.xlane.xlu0 %603
    %v605 = vsel %vm465, %v601, 0.0
    %606 = vadd.xlane.f32.xlu0 %v605
    %v607 = vpop.xlane.xlu0 %606
    %v608 = vrcp.pop %v604
    %v609 = vrcp.pop %v607
    %v610 = vmul.f32 %v599, %v608
    %v611 = vmul.f32 %v601, %v609
    %v612 = vpack.c.bf16 %v611, %v610
    %614 = vrot.lane.b32.xlu0 %v412, 96
    %v615 = vpop.permute.xlu0 %614
    %v618 = vsel %vm465, %v612, 0
    %620 = vmatprep.subr.bf16.mxu0 0
    %621 = vmatpush1.bf16.msra.mxu0 %v615
    %622 = vmatprep.subr.bf16.mxu0 0
    %623 = vmatpush1.bf16.msra.mxu0 0
    %624 = vmatprep.subr.bf16.mxu0 0
    %625 = vmatpush1.bf16.msra.mxu0 0
    %626 = vmatprep.subr.bf16.mxu0 0
    %627 = vmatpush1.bf16.msra.mxu0 0
    %628 = vmatprep.subr.bf16.mxu0 0
    %629 = vmatpush1.bf16.msra.mxu0 0
    %630 = vmatprep.subr.bf16.mxu0 0
    %631 = vmatpush1.bf16.msra.mxu0 0
    %632 = vmatprep.subr.bf16.mxu0 0
    %633 = vmatpush1.bf16.msra.mxu0 0
    %634 = vmatprep.subr.bf16.mxu0 0
    %635 = vmatpush1.bf16.msra.mxu0 0
    %636 = vmatprep.subr.bf16.mxu0 0
    %637 = vmatpush1.bf16.msra.mxu0 0
    %638 = vmatprep.subr.bf16.mxu0 0
    %639 = vmatpush1.bf16.msra.mxu0 0
    %640 = vmatprep.subr.bf16.mxu0 0
    %641 = vmatpush1.bf16.msra.mxu0 0
    %642 = vmatprep.subr.bf16.mxu0 0
    %643 = vmatpush1.bf16.msra.mxu0 0
    %644 = vmatprep.subr.bf16.mxu0 0
    %645 = vmatpush1.bf16.msra.mxu0 0
    %646 = vmatprep.subr.bf16.mxu0 0
    %647 = vmatpush1.bf16.msra.mxu0 0
    %648 = vmatprep.subr.bf16.mxu0 0
    %649 = vmatpush1.bf16.msra.mxu0 0
    %650 = vmatprep.subr.bf16.mxu0 0
    %651 = vmatpush1.bf16.msra.mxu0 0
    %652 = vmatprep.mubr.bf16.mxu0 0
    %653 = vmatmul.mubr.bf16.gmra.mrb[0].mxu0 %v618
    %v654 = vpop.f32.mrb[0].mxu0
    %v655 = vadd.f32 0.0, %v654
    %v656 = vpop.f32.mrb[0].mxu0
    %v657 = vpop.f32.mrb[0].mxu0
    %v658 = vadd.f32 0.0, %v657
    %v659 = vpop.f32.mrb[0].mxu0
    %660 = vdwg.mxu0
    %661 = vrot.lane.b32.xlu0 %v410, 64
    %v662 = vpop.permute.xlu0 %661
    %663 = vrot.lane.b32.xlu0 %v411, 64
    %v664 = vpop.permute.xlu0 %663
    %v666 = vsel %vm413, %v662, 0
    %v669 = vsel %vm413, %v664, 0
    %671 = vmatprep.subr.bf16.mxu0 0
    %672 = vmatpush1.bf16.xpose.msra.mxu0 %v669
    %673 = vmatprep.subr.bf16.mxu0 0
    %674 = vmatpush1.bf16.xpose.msra.mxu0 0
    %675 = vmatprep.subr.bf16.mxu0 0
    %676 = vmatpush1.bf16.xpose.msra.mxu0 0
    %677 = vmatprep.subr.bf16.mxu0 0
    %678 = vmatpush1.bf16.xpose.msra.mxu0 0
    %679 = vmatprep.subr.bf16.mxu0 0
    %680 = vmatpush1.bf16.xpose.msra.mxu0 0
    %681 = vmatprep.subr.bf16.mxu0 0
    %682 = vmatpush1.bf16.xpose.msra.mxu0 0
    %683 = vmatprep.subr.bf16.mxu0 0
    %684 = vmatpush1.bf16.xpose.msra.mxu0 0
    %685 = vmatprep.subr.bf16.mxu0 0
    %686 = vmatpush1.bf16.xpose.msra.mxu0 0
    %687 = vmatprep.subr.bf16.mxu0 0
    %688 = vmatpush1.bf16.xpose.msra.mxu0 0
    %689 = vmatprep.subr.bf16.mxu0 0
    %690 = vmatpush1.bf16.xpose.msra.mxu0 0
    %691 = vmatprep.subr.bf16.mxu0 0
    %692 = vmatpush1.bf16.xpose.msra.mxu0 0
    %693 = vmatprep.subr.bf16.mxu0 0
    %694 = vmatpush1.bf16.xpose.msra.mxu0 0
    %695 = vmatprep.subr.bf16.mxu0 0
    %696 = vmatpush1.bf16.xpose.msra.mxu0 0
    %697 = vmatprep.subr.bf16.mxu0 0
    %698 = vmatpush1.bf16.xpose.msra.mxu0 0
    %699 = vmatprep.subr.bf16.mxu0 0
    %700 = vmatpush1.bf16.xpose.msra.mxu0 0
    %701 = vmatprep.subr.bf16.mxu0 0
    %702 = vmatpush1.bf16.xpose.msra.mxu0 0
    %703 = vmatprep.mubr.bf16.mxu0 0
    %704 = vmatmul.mubr.bf16.gmra.mrb[0].mxu0 %v666
    %v705 = vpop.f32.mrb[0].mxu0
    %v706 = vadd.f32 0.0, %v705
    %v707 = vpop.f32.mrb[0].mxu0
    %v708 = vpop.f32.mrb[0].mxu0
    %v709 = vadd.f32 0.0, %v708
    %v710 = vpop.f32.mrb[0].mxu0
    %711 = vdwg.mxu0
    %v712 = vmul.f32 %v706, 0.17677669
    %v713 = vmul.f32 %v709, 0.17677669
    %v714 = vadd.f32 %v712, %v84
    %v715 = vadd.f32 %v713, %v85
    %v716 = vsel %vm465, %v714, -inf
    %717 = vmax.xlane.f32.xlu0 %v716
    %v718 = vpop.xlane.xlu0 %717
    %v719 = vsel %vm465, %v715, -inf
    %720 = vmax.xlane.f32.xlu0 %v719
    %v721 = vpop.xlane.xlu0 %720
    %v722 = vsub.f32 %v714, %v718
    %v723 = vsub.f32 %v715, %v721
    %v724 = vmul.f32 %v722, 1.442695
    %v725 = vpow.pop %v724
    %v726 = vmul.f32 %v723, 1.442695
    %v727 = vpow.pop %v726
    %v728 = vsel %vm465, %v725, 0.0
    %729 = vadd.xlane.f32.xlu0 %v728
    %v730 = vpop.xlane.xlu0 %729
    %v731 = vsel %vm465, %v727, 0.0
    %732 = vadd.xlane.f32.xlu0 %v731
    %v733 = vpop.xlane.xlu0 %732
    %v734 = vrcp.pop %v730
    %v735 = vrcp.pop %v733
    %v736 = vmul.f32 %v725, %v734
    %v737 = vmul.f32 %v727, %v735
    %v738 = vpack.c.bf16 %v737, %v736
    %739 = vrot.lane.b32.xlu0 %v412, 64
    %v740 = vpop.permute.xlu0 %739
    %v743 = vsel %vm465, %v738, 0
    %745 = vmatprep.subr.bf16.mxu0 0
    %746 = vmatpush1.bf16.msra.mxu0 %v740
    %747 = vmatprep.subr.bf16.mxu0 0
    %748 = vmatpush1.bf16.msra.mxu0 0
    %749 = vmatprep.subr.bf16.mxu0 0
    %750 = vmatpush1.bf16.msra.mxu0 0
    %751 = vmatprep.subr.bf16.mxu0 0
    %752 = vmatpush1.bf16.msra.mxu0 0
    %753 = vmatprep.subr.bf16.mxu0 0
    %754 = vmatpush1.bf16.msra.mxu0 0
    %755 = vmatprep.subr.bf16.mxu0 0
    %756 = vmatpush1.bf16.msra.mxu0 0
    %757 = vmatprep.subr.bf16.mxu0 0
    %758 = vmatpush1.bf16.msra.mxu0 0
    %759 = vmatprep.subr.bf16.mxu0 0
    %760 = vmatpush1.bf16.msra.mxu0 0
    %761 = vmatprep.subr.bf16.mxu0 0
    %762 = vmatpush1.bf16.msra.mxu0 0
    %763 = vmatprep.subr.bf16.mxu0 0
    %764 = vmatpush1.bf16.msra.mxu0 0
    %765 = vmatprep.subr.bf16.mxu0 0
    %766 = vmatpush1.bf16.msra.mxu0 0
    %767 = vmatprep.subr.bf16.mxu0 0
    %768 = vmatpush1.bf16.msra.mxu0 0
    %769 = vmatprep.subr.bf16.mxu0 0
    %770 = vmatpush1.bf16.msra.mxu0 0
    %771 = vmatprep.subr.bf16.mxu0 0
    %772 = vmatpush1.bf16.msra.mxu0 0
    %773 = vmatprep.subr.bf16.mxu0 0
    %774 = vmatpush1.bf16.msra.mxu0 0
    %775 = vmatprep.subr.bf16.mxu0 0
    %776 = vmatpush1.bf16.msra.mxu0 0
    %777 = vmatprep.mubr.bf16.mxu0 0
    %778 = vmatmul.mubr.bf16.gmra.mrb[0].mxu0 %v743
    %v779 = vpop.f32.mrb[0].mxu0
    %v780 = vadd.f32 0.0, %v779
    %v781 = vpop.f32.mrb[0].mxu0
    %v782 = vpop.f32.mrb[0].mxu0
    %v783 = vadd.f32 0.0, %v782
    %v784 = vpop.f32.mrb[0].mxu0
    %785 = vdwg.mxu0
    %786 = vrot.lane.b32.xlu0 %v410, 32
    %v787 = vpop.permute.xlu0 %786
    %788 = vrot.lane.b32.xlu0 %v411, 32
    %v789 = vpop.permute.xlu0 %788
    %v791 = vsel %vm413, %v787, 0
    %v794 = vsel %vm413, %v789, 0
    %796 = vmatprep.subr.bf16.mxu0 0
    %797 = vmatpush1.bf16.xpose.msra.mxu0 %v794
    %798 = vmatprep.subr.bf16.mxu0 0
    %799 = vmatpush1.bf16.xpose.msra.mxu0 0
    %800 = vmatprep.subr.bf16.mxu0 0
    %801 = vmatpush1.bf16.xpose.msra.mxu0 0
    %802 = vmatprep.subr.bf16.mxu0 0
    %803 = vmatpush1.bf16.xpose.msra.mxu0 0
    %804 = vmatprep.subr.bf16.mxu0 0
    %805 = vmatpush1.bf16.xpose.msra.mxu0 0
    %806 = vmatprep.subr.bf16.mxu0 0
    %807 = vmatpush1.bf16.xpose.msra.mxu0 0
    %808 = vmatprep.subr.bf16.mxu0 0
    %809 = vmatpush1.bf16.xpose.msra.mxu0 0
    %810 = vmatprep.subr.bf16.mxu0 0
    %811 = vmatpush1.bf16.xpose.msra.mxu0 0
    %812 = vmatprep.subr.bf16.mxu0 0
    %813 = vmatpush1.bf16.xpose.msra.mxu0 0
    %814 = vmatprep.subr.bf16.mxu0 0
    %815 = vmatpush1.bf16.xpose.msra.mxu0 0
    %816 = vmatprep.subr.bf16.mxu0 0
    %817 = vmatpush1.bf16.xpose.msra.mxu0 0
    %818 = vmatprep.subr.bf16.mxu0 0
    %819 = vmatpush1.bf16.xpose.msra.mxu0 0
    %820 = vmatprep.subr.bf16.mxu0 0
    %821 = vmatpush1.bf16.xpose.msra.mxu0 0
    %822 = vmatprep.subr.bf16.mxu0 0
    %823 = vmatpush1.bf16.xpose.msra.mxu0 0
    %824 = vmatprep.subr.bf16.mxu0 0
    %825 = vmatpush1.bf16.xpose.msra.mxu0 0
    %826 = vmatprep.subr.bf16.mxu0 0
    %827 = vmatpush1.bf16.xpose.msra.mxu0 0
    %828 = vmatprep.mubr.bf16.mxu0 0
    %829 = vmatmul.mubr.bf16.gmra.mrb[0].mxu0 %v791
    %v830 = vpop.f32.mrb[0].mxu0
    %v831 = vadd.f32 0.0, %v830
    %v832 = vpop.f32.mrb[0].mxu0
    %v833 = vpop.f32.mrb[0].mxu0
    %v834 = vadd.f32 0.0, %v833
    %v835 = vpop.f32.mrb[0].mxu0
    %836 = vdwg.mxu0
    %v837 = vmul.f32 %v831, 0.17677669
    %v838 = vmul.f32 %v834, 0.17677669
    %v839 = vadd.f32 %v837, %v84
    %v840 = vadd.f32 %v838, %v85
    %v841 = vsel %vm465, %v839, -inf
    %842 = vmax.xlane.f32.xlu0 %v841
    %v843 = vpop.xlane.xlu0 %842
    %v844 = vsel %vm465, %v840, -inf
    %845 = vmax.xlane.f32.xlu0 %v844
    %v846 = vpop.xlane.xlu0 %845
    %v847 = vsub.f32 %v839, %v843
    %v848 = vsub.f32 %v840, %v846
    %v849 = vmul.f32 %v847, 1.442695
    %v850 = vpow.pop %v849
    %v851 = vmul.f32 %v848, 1.442695
    %v852 = vpow.pop %v851
    %v853 = vsel %vm465, %v850, 0.0
    %854 = vadd.xlane.f32.xlu0 %v853
    %v855 = vpop.xlane.xlu0 %854
    %v856 = vsel %vm465, %v852, 0.0
    %857 = vadd.xlane.f32.xlu0 %v856
    %v858 = vpop.xlane.xlu0 %857
    %v859 = vrcp.pop %v855
    %v860 = vrcp.pop %v858
    %v861 = vmul.f32 %v850, %v859
    %v862 = vmul.f32 %v852, %v860
    %v863 = vpack.c.bf16 %v862, %v861
    %864 = vrot.lane.b32.xlu0 %v412, 32
    %v865 = vpop.permute.xlu0 %864
    %v868 = vsel %vm465, %v863, 0
    %870 = vmatprep.subr.bf16.mxu0 0
    %871 = vmatpush1.bf16.msra.mxu0 %v865
    %872 = vmatprep.subr.bf16.mxu0 0
    %873 = vmatpush1.bf16.msra.mxu0 0
    %874 = vmatprep.subr.bf16.mxu0 0
    %875 = vmatpush1.bf16.msra.mxu0 0
    %876 = vmatprep.subr.bf16.mxu0 0
    %877 = vmatpush1.bf16.msra.mxu0 0
    %878 = vmatprep.subr.bf16.mxu0 0
    %879 = vmatpush1.bf16.msra.mxu0 0
    %880 = vmatprep.subr.bf16.mxu0 0
    %881 = vmatpush1.bf16.msra.mxu0 0
    %882 = vmatprep.subr.bf16.mxu0 0
    %883 = vmatpush1.bf16.msra.mxu0 0
    %884 = vmatprep.subr.bf16.mxu0 0
    %885 = vmatpush1.bf16.msra.mxu0 0
    %886 = vmatprep.subr.bf16.mxu0 0
    %887 = vmatpush1.bf16.msra.mxu0 0
    %888 = vmatprep.subr.bf16.mxu0 0
    %889 = vmatpush1.bf16.msra.mxu0 0
    %890 = vmatprep.subr.bf16.mxu0 0
    %891 = vmatpush1.bf16.msra.mxu0 0
    %892 = vmatprep.subr.bf16.mxu0 0
    %893 = vmatpush1.bf16.msra.mxu0 0
    %894 = vmatprep.subr.bf16.mxu0 0
    %895 = vmatpush1.bf16.msra.mxu0 0
    %896 = vmatprep.subr.bf16.mxu0 0
    %897 = vmatpush1.bf16.msra.mxu0 0
    %898 = vmatprep.subr.bf16.mxu0 0
    %899 = vmatpush1.bf16.msra.mxu0 0
    %900 = vmatprep.subr.bf16.mxu0 0
    %901 = vmatpush1.bf16.msra.mxu0 0
    %902 = vmatprep.mubr.bf16.mxu0 0
    %903 = vmatmul.mubr.bf16.gmra.mrb[0].mxu0 %v868
    %v904 = vpop.f32.mrb[0].mxu0
    %v905 = vadd.f32 0.0, %v904
    %v906 = vpop.f32.mrb[0].mxu0
    %v907 = vpop.f32.mrb[0].mxu0
    %v908 = vadd.f32 0.0, %v907
    %v909 = vpop.f32.mrb[0].mxu0
    %910 = vdwg.mxu0
    %913 = vrot.lane.b32.xlu0 %v655, 32
    %v914 = vpop.permute.xlu0 %913
    %915 = vrot.lane.b32.xlu0 %v658, 32
    %v916 = vpop.permute.xlu0 %915
    %921 = vrot.lane.b32.xlu0 %v780, 64
    %v922 = vpop.permute.xlu0 %921
    %923 = vrot.lane.b32.xlu0 %v783, 64
    %v924 = vpop.permute.xlu0 %923
    %929 = vrot.lane.b32.xlu0 %v905, 96
    %v930 = vpop.permute.xlu0 %929
    %931 = vrot.lane.b32.xlu0 %v908, 96
    %v932 = vpop.permute.xlu0 %931
    %v935 = vsel %vm413, %v527, %v914
    %v936 = vsel %vm413, %v530, %v916
    %vm937 = vcmask 523264
    %v938 = vsel %vm937, %v935, %v922
    %v939 = vsel %vm937, %v936, %v924
    %vm940 = vcmask 785408
    %v941 = vsel %vm940, %v938, %v930
    %v942 = vsel %vm940, %v939, %v932
    %v943 = vpack.c.bf16 %v942, %v941
    %v944 = vlaneseq
    %v945 = vshrl.u32 %v944, 7
    %v946 = vsub.s32 1, %v945
    %v947 = vrot.slane %v182, %v946
    %v964 = vunpack.c.l.b16 %v118
    %v965 = vunpack.c.l.b16 %v119
    %v966 = vunpack.c.l.b16 %v120
    %v967 = vunpack.c.l.b16 %v121
    %v968 = vunpack.c.l.b16 %v122
    %v969 = vunpack.c.l.b16 %v123
    %v970 = vunpack.c.l.b16 %v124
    %v971 = vunpack.c.l.b16 %v125
    %v972 = vunpack.c.l.b16 %v126
    %v973 = vunpack.c.l.b16 %v127
    %v974 = vunpack.c.l.b16 %v128
    %v975 = vunpack.c.l.b16 %v129
    %v976 = vunpack.c.l.b16 %v130
    %v977 = vunpack.c.l.b16 %v131
    %v978 = vunpack.c.l.b16 %v132
    %v979 = vunpack.c.l.b16 %v133
    %v980 = vpack.c.b16 %v965, %v964
    %v981 = vpack.c.b16 %v967, %v966
    %v982 = vpack.c.b16 %v969, %v968
    %v983 = vpack.c.b16 %v971, %v970
    %v984 = vpack.c.b16 %v973, %v972
    %v985 = vpack.c.b16 %v975, %v974
    %v986 = vpack.c.b16 %v977, %v976
    %v987 = vpack.c.b16 %v979, %v978
    %996 = vmatprep.subr.bf16.mxu0 0
    %997 = vmatpush1.bf16.msra.mxu0 %v980
    %998 = vmatprep.subr.bf16.mxu0 0
    %999 = vmatpush1.bf16.msra.mxu0 %v981
    %1000 = vmatprep.subr.bf16.mxu0 0
    %1001 = vmatpush1.bf16.msra.mxu0 %v982
    %1002 = vmatprep.subr.bf16.mxu0 0
    %1003 = vmatpush1.bf16.msra.mxu0 %v983
    %1004 = vmatprep.subr.bf16.mxu0 0
    %1005 = vmatpush1.bf16.msra.mxu0 %v984
    %1006 = vmatprep.subr.bf16.mxu0 0
    %1007 = vmatpush1.bf16.msra.mxu0 %v985
    %1008 = vmatprep.subr.bf16.mxu0 0
    %1009 = vmatpush1.bf16.msra.mxu0 %v986
    %1010 = vmatprep.subr.bf16.mxu0 0
    %1011 = vmatpush1.bf16.msra.mxu0 %v987
    %1012 = vmatprep.subr.bf16.mxu0 0
    %1013 = vmatpush1.bf16.msra.mxu0 0
    %1014 = vmatprep.subr.bf16.mxu0 0
    %1015 = vmatpush1.bf16.msra.mxu0 0
    %1016 = vmatprep.subr.bf16.mxu0 0
    %1017 = vmatpush1.bf16.msra.mxu0 0
    %1018 = vmatprep.subr.bf16.mxu0 0
    %1019 = vmatpush1.bf16.msra.mxu0 0
    %1020 = vmatprep.subr.bf16.mxu0 0
    %1021 = vmatpush1.bf16.msra.mxu0 0
    %1022 = vmatprep.subr.bf16.mxu0 0
    %1023 = vmatpush1.bf16.msra.mxu0 0
    %1024 = vmatprep.subr.bf16.mxu0 0
    %1025 = vmatpush1.bf16.msra.mxu0 0
    %1026 = vmatprep.subr.bf16.mxu0 0
    %1027 = vmatpush1.bf16.msra.mxu0 0
    %1028 = vmatprep.mubr.bf16.mxu0 0
    %1029 = vmatmul.mubr.bf16.gmra.mrb[0].mxu0 %v943
    %v1030 = vpop.f32.mrb[0].mxu0
    %v1031 = vadd.f32 %v947, %v1030
    %v1032 = vpop.f32.mrb[0].mxu0
    %v1033 = vpop.f32.mrb[0].mxu0
    %v1034 = vadd.f32 %v947, %v1033
    %v1035 = vpop.f32.mrb[0].mxu0
    %1036 = vdwg.mxu0
    %v1037 = vadd.f32 %v39, %v1031
    %v1038 = vadd.f32 %v40, %v1034
    %1039 = vadd.xlane.f32.xlu0 %v1037
    %v1040 = vpop.xlane.xlu0 %1039
    %1041 = vadd.xlane.f32.xlu0 %v1038
    %v1042 = vpop.xlane.xlu0 %1041
    %v1043 = vrcp.pop 128.0
    %v1044 = vmul.f32 %v1040, %v1043
    %v1045 = vmul.f32 %v1042, %v1043
    %v1046 = vsub.f32 %v1037, %v1044
    %v1047 = vsub.f32 %v1038, %v1045
    %v1048 = vmul.f32 %v1046, %v1046
    %v1049 = vmul.f32 %v1047, %v1047
    %1050 = vadd.xlane.f32.xlu0 %v1048
    %v1051 = vpop.xlane.xlu0 %1050
    %1052 = vadd.xlane.f32.xlu0 %v1049
    %v1053 = vpop.xlane.xlu0 %1052
    %v1054 = vmul.f32 %v1051, %v1043
    %v1055 = vmul.f32 %v1053, %v1043
    %v1056 = vadd.f32 %v1054, 1e-05
    %v1057 = vadd.f32 %v1055, 1e-05
    %v1058 = vrsqrt.pop %v1056
    %v1059 = vrsqrt.pop %v1057
    %v1060 = vmul.f32 %v1046, %v1058
    %v1061 = vmul.f32 %v1047, %v1059
    %v1062 = vlaneseq
    %v1063 = vshrl.u32 %v1062, 7
    %v1064 = vsub.s32 2, %v1063
    %v1065 = vrot.slane %v182, %v1064
    %v1066 = vmul.f32 %v1060, %v1065
    %v1067 = vmul.f32 %v1061, %v1065
    %v1068 = vlaneseq
    %v1069 = vshrl.u32 %v1068, 7
    %v1070 = vsub.s32 3, %v1069
    %v1071 = vrot.slane %v182, %v1070
    %v1072 = vadd.f32 %v1066, %v1071
    %v1073 = vadd.f32 %v1067, %v1071
    %v1074 = vpack.c.bf16 %v1073, %v1072
    %v1075 = vlaneseq
    %v1076 = vshrl.u32 %v1075, 7
    %v1077 = vsub.s32 4, %v1076
    %v1078 = vrot.slane %v182, %v1077
    %v1079 = vlaneseq
    %v1080 = vshrl.u32 %v1079, 7
    %v1081 = vsub.s32 4, %v1080
    %v1082 = vrot.slane %v183, %v1081
    %v1099 = vunpack.c.l.b16 %v134
    %v1100 = vunpack.c.h.b16 %v134
    %v1101 = vunpack.c.l.b16 %v135
    %v1102 = vunpack.c.h.b16 %v135
    %v1103 = vunpack.c.l.b16 %v136
    %v1104 = vunpack.c.h.b16 %v136
    %v1105 = vunpack.c.l.b16 %v137
    %v1106 = vunpack.c.h.b16 %v137
    %v1107 = vunpack.c.l.b16 %v138
    %v1108 = vunpack.c.h.b16 %v138
    %v1109 = vunpack.c.l.b16 %v139
    %v1110 = vunpack.c.h.b16 %v139
    %v1111 = vunpack.c.l.b16 %v140
    %v1112 = vunpack.c.h.b16 %v140
    %v1113 = vunpack.c.l.b16 %v141
    %v1114 = vunpack.c.h.b16 %v141
    %v1115 = vunpack.c.l.b16 %v142
    %v1116 = vunpack.c.h.b16 %v142
    %v1117 = vunpack.c.l.b16 %v143
    %v1118 = vunpack.c.h.b16 %v143
    %v1119 = vunpack.c.l.b16 %v144
    %v1120 = vunpack.c.h.b16 %v144
    %v1121 = vunpack.c.l.b16 %v145
    %v1122 = vunpack.c.h.b16 %v145
    %v1123 = vunpack.c.l.b16 %v146
    %v1124 = vunpack.c.h.b16 %v146
    %v1125 = vunpack.c.l.b16 %v147
    %v1126 = vunpack.c.h.b16 %v147
    %v1127 = vunpack.c.l.b16 %v148
    %v1128 = vunpack.c.h.b16 %v148
    %v1129 = vunpack.c.l.b16 %v149
    %v1130 = vunpack.c.h.b16 %v149
    %v1131 = vpack.c.b16 %v1101, %v1099
    %v1132 = vpack.c.b16 %v1102, %v1100
    %v1133 = vpack.c.b16 %v1105, %v1103
    %v1134 = vpack.c.b16 %v1106, %v1104
    %v1135 = vpack.c.b16 %v1109, %v1107
    %v1136 = vpack.c.b16 %v1110, %v1108
    %v1137 = vpack.c.b16 %v1113, %v1111
    %v1138 = vpack.c.b16 %v1114, %v1112
    %v1139 = vpack.c.b16 %v1117, %v1115
    %v1140 = vpack.c.b16 %v1118, %v1116
    %v1141 = vpack.c.b16 %v1121, %v1119
    %v1142 = vpack.c.b16 %v1122, %v1120
    %v1143 = vpack.c.b16 %v1125, %v1123
    %v1144 = vpack.c.b16 %v1126, %v1124
    %v1145 = vpack.c.b16 %v1129, %v1127
    %v1146 = vpack.c.b16 %v1130, %v1128
    %1163 = vmatprep.subr.bf16.mxu0 %v1132
    %1164 = vmatpush1.bf16.msra.mxu0 %v1131
    %1165 = vmatprep.subr.bf16.mxu0 %v1134
    %1166 = vmatpush1.bf16.msra.mxu0 %v1133
    %1167 = vmatprep.subr.bf16.mxu0 %v1136
    %1168 = vmatpush1.bf16.msra.mxu0 %v1135
    %1169 = vmatprep.subr.bf16.mxu0 %v1138
    %1170 = vmatpush1.bf16.msra.mxu0 %v1137
    %1171 = vmatprep.subr.bf16.mxu0 %v1140
    %1172 = vmatpush1.bf16.msra.mxu0 %v1139
    %1173 = vmatprep.subr.bf16.mxu0 %v1142
    %1174 = vmatpush1.bf16.msra.mxu0 %v1141
    %1175 = vmatprep.subr.bf16.mxu0 %v1144
    %1176 = vmatpush1.bf16.msra.mxu0 %v1143
    %1177 = vmatprep.subr.bf16.mxu0 %v1146
    %1178 = vmatpush1.bf16.msra.mxu0 %v1145
    %1179 = vmatprep.subr.bf16.mxu0 0
    %1180 = vmatpush1.bf16.msra.mxu0 0
    %1181 = vmatprep.subr.bf16.mxu0 0
    %1182 = vmatpush1.bf16.msra.mxu0 0
    %1183 = vmatprep.subr.bf16.mxu0 0
    %1184 = vmatpush1.bf16.msra.mxu0 0
    %1185 = vmatprep.subr.bf16.mxu0 0
    %1186 = vmatpush1.bf16.msra.mxu0 0
    %1187 = vmatprep.subr.bf16.mxu0 0
    %1188 = vmatpush1.bf16.msra.mxu0 0
    %1189 = vmatprep.subr.bf16.mxu0 0
    %1190 = vmatpush1.bf16.msra.mxu0 0
    %1191 = vmatprep.subr.bf16.mxu0 0
    %1192 = vmatpush1.bf16.msra.mxu0 0
    %1193 = vmatprep.subr.bf16.mxu0 0
    %1194 = vmatpush1.bf16.msra.mxu0 0
    %1195 = vmatprep.mubr.bf16.mxu0 0
    %1196 = vmatmul.mubr.bf16.gmra.mrb[0].mxu0 %v1074
    %v1197 = vpop.f32.mrb[0].mxu0
    %v1198 = vadd.f32 %v1078, %v1197
    %v1199 = vpop.f32.mrb[0].mxu0
    %v1200 = vadd.f32 %v1082, %v1199
    %v1201 = vpop.f32.mrb[0].mxu0
    %v1202 = vadd.f32 %v1078, %v1201
    %v1203 = vpop.f32.mrb[0].mxu0
    %v1204 = vadd.f32 %v1082, %v1203
    %1205 = vdwg.mxu0
    %v1206 = vmax.f32 %v1198, 0.0
    %v1207 = vmax.f32 %v1200, 0.0
    %v1208 = vmax.f32 %v1202, 0.0
    %v1209 = vmax.f32 %v1204, 0.0
    %v1210 = vpack.c.bf16 %v1208, %v1206
    %v1211 = vpack.c.bf16 %v1209, %v1207
    %v1212 = vlaneseq
    %v1213 = vshrl.u32 %v1212, 7
    %v1214 = vsub.s32 5, %v1213
    %v1215 = vrot.slane %v182, %v1214
    %v1248 = vunpack.c.l.b16 %v150
    %v1249 = vunpack.c.l.b16 %v151
    %v1250 = vunpack.c.l.b16 %v152
    %v1251 = vunpack.c.l.b16 %v153
    %v1252 = vunpack.c.l.b16 %v154
    %v1253 = vunpack.c.l.b16 %v155
    %v1254 = vunpack.c.l.b16 %v156
    %v1255 = vunpack.c.l.b16 %v157
    %v1256 = vunpack.c.l.b16 %v158
    %v1257 = vunpack.c.l.b16 %v159
    %v1258 = vunpack.c.l.b16 %v160
    %v1259 = vunpack.c.l.b16 %v161
    %v1260 = vunpack.c.l.b16 %v162
    %v1261 = vunpack.c.l.b16 %v163
    %v1262 = vunpack.c.l.b16 %v164
    %v1263 = vunpack.c.l.b16 %v165
    %v1264 = vunpack.c.l.b16 %v166
    %v1265 = vunpack.c.l.b16 %v167
    %v1266 = vunpack.c.l.b16 %v168
    %v1267 = vunpack.c.l.b16 %v169
    %v1268 = vunpack.c.l.b16 %v170
    %v1269 = vunpack.c.l.b16 %v171
    %v1270 = vunpack.c.l.b16 %v172
    %v1271 = vunpack.c.l.b16 %v173
    %v1272 = vunpack.c.l.b16 %v174
    %v1273 = vunpack.c.l.b16 %v175
    %v1274 = vunpack.c.l.b16 %v176
    %v1275 = vunpack.c.l.b16 %v177
    %v1276 = vunpack.c.l.b16 %v178
    %v1277 = vunpack.c.l.b16 %v179
    %v1278 = vunpack.c.l.b16 %v180
    %v1279 = vunpack.c.l.b16 %v181
    %v1280 = vpack.c.b16 %v1249, %v1248
    %v1281 = vpack.c.b16 %v1251, %v1250
    %v1282 = vpack.c.b16 %v1253, %v1252
    %v1283 = vpack.c.b16 %v1255, %v1254
    %v1284 = vpack.c.b16 %v1257, %v1256
    %v1285 = vpack.c.b16 %v1259, %v1258
    %v1286 = vpack.c.b16 %v1261, %v1260
    %v1287 = vpack.c.b16 %v1263, %v1262
    %v1288 = vpack.c.b16 %v1265, %v1264
    %v1289 = vpack.c.b16 %v1267, %v1266
    %v1290 = vpack.c.b16 %v1269, %v1268
    %v1291 = vpack.c.b16 %v1271, %v1270
    %v1292 = vpack.c.b16 %v1273, %v1272
    %v1293 = vpack.c.b16 %v1275, %v1274
    %v1294 = vpack.c.b16 %v1277, %v1276
    %v1295 = vpack.c.b16 %v1279, %v1278
    %1312 = vmatprep.subr.bf16.mxu0 0
    %1313 = vmatpush1.bf16.msra.mxu0 %v1280
    %1314 = vmatprep.subr.bf16.mxu0 0
    %1315 = vmatpush1.bf16.msra.mxu0 %v1281
    %1316 = vmatprep.subr.bf16.mxu0 0
    %1317 = vmatpush1.bf16.msra.mxu0 %v1282
    %1318 = vmatprep.subr.bf16.mxu0 0
    %1319 = vmatpush1.bf16.msra.mxu0 %v1283
    %1320 = vmatprep.subr.bf16.mxu0 0
    %1321 = vmatpush1.bf16.msra.mxu0 %v1284
    %1322 = vmatprep.subr.bf16.mxu0 0
    %1323 = vmatpush1.bf16.msra.mxu0 %v1285
    %1324 = vmatprep.subr.bf16.mxu0 0
    %1325 = vmatpush1.bf16.msra.mxu0 %v1286
    %1326 = vmatprep.subr.bf16.mxu0 0
    %1327 = vmatpush1.bf16.msra.mxu0 %v1287
    %1328 = vmatprep.subr.bf16.mxu0 0
    %1329 = vmatpush1.bf16.msra.mxu0 %v1288
    %1330 = vmatprep.subr.bf16.mxu0 0
    %1331 = vmatpush1.bf16.msra.mxu0 %v1289
    %1332 = vmatprep.subr.bf16.mxu0 0
    %1333 = vmatpush1.bf16.msra.mxu0 %v1290
    %1334 = vmatprep.subr.bf16.mxu0 0
    %1335 = vmatpush1.bf16.msra.mxu0 %v1291
    %1336 = vmatprep.subr.bf16.mxu0 0
    %1337 = vmatpush1.bf16.msra.mxu0 %v1292
    %1338 = vmatprep.subr.bf16.mxu0 0
    %1339 = vmatpush1.bf16.msra.mxu0 %v1293
    %1340 = vmatprep.subr.bf16.mxu0 0
    %1341 = vmatpush1.bf16.msra.mxu0 %v1294
    %1342 = vmatprep.subr.bf16.mxu0 0
    %1343 = vmatpush1.bf16.msra.mxu0 %v1295
    %1344 = vmatprep.mubr.bf16.mxu0 %v1211
    %1345 = vmatmul.mubr.bf16.gmra.mrb[0].mxu0 %v1210
    %v1346 = vpop.f32.mrb[0].mxu0
    %v1347 = vadd.f32 %v1215, %v1346
    %v1348 = vpop.f32.mrb[0].mxu0
    %v1349 = vpop.f32.mrb[0].mxu0
    %v1350 = vadd.f32 %v1215, %v1349
    %v1351 = vpop.f32.mrb[0].mxu0
    %1352 = vdwg.mxu0
    %v1353 = vadd.f32 %v1072, %v1347
    %v1354 = vadd.f32 %v1073, %v1350
    %1355 = vadd.xlane.f32.xlu0 %v1353
    %v1356 = vpop.xlane.xlu0 %1355
    %1357 = vadd.xlane.f32.xlu0 %v1354
    %v1358 = vpop.xlane.xlu0 %1357
    %v1359 = vmul.f32 %v1356, %v1043
    %v1360 = vmul.f32 %v1358, %v1043
    %v1361 = vsub.f32 %v1353, %v1359
    %v1362 = vsub.f32 %v1354, %v1360
    %v1363 = vmul.f32 %v1361, %v1361
    %v1364 = vmul.f32 %v1362, %v1362
    %1365 = vadd.xlane.f32.xlu0 %v1363
    %v1366 = vpop.xlane.xlu0 %1365
    %1367 = vadd.xlane.f32.xlu0 %v1364
    %v1368 = vpop.xlane.xlu0 %1367
    %v1369 = vmul.f32 %v1366, %v1043
    %v1370 = vmul.f32 %v1368, %v1043
    %v1371 = vadd.f32 %v1369, 1e-05
    %v1372 = vadd.f32 %v1370, 1e-05
    %v1373 = vrsqrt.pop %v1371
    %v1374 = vrsqrt.pop %v1372
    %v1375 = vmul.f32 %v1361, %v1373
    %v1376 = vmul.f32 %v1362, %v1374
    %v1377 = vlaneseq
    %v1378 = vshrl.u32 %v1377, 7
    %v1379 = vsub.s32 6, %v1378
    %v1380 = vrot.slane %v182, %v1379
    %v1381 = vmul.f32 %v1375, %v1380
    %v1382 = vmul.f32 %v1376, %v1380
    %v1383 = vlaneseq
    %v1384 = vshrl.u32 %v1383, 7
    %v1385 = vsub.s32 7, %v1384
    %v1386 = vrot.slane %v182, %v1385
    %v1387 = vadd.f32 %v1381, %v1386
    %v1388 = vadd.f32 %v1382, %v1386
    %s1389 = scalar_lea.vmem %s2, 192
    %v1390 = vld [vmem:[%s1389] sm:$0xff]
    %v1391 = vld [vmem:[%s1389 + $0x8] sm:$0xf]
    %v1392 = vld [vmem:[%s1389 + $0xc] sm:$0xff]
    %v1393 = vld [vmem:[%s1389 + $0x14] sm:$0xf]
    %v1394 = vld [vmem:[%s1389 + $0x18] sm:$0xff]
    %v1395 = vld [vmem:[%s1389 + $0x20] sm:$0xf]
    %v1396 = vld [vmem:[%s1389 + $0x24] sm:$0xff]
    %v1397 = vld [vmem:[%s1389 + $0x2c] sm:$0xf]
    %v1398 = vld [vmem:[%s1389 + $0x30] sm:$0xff]
    %v1399 = vld [vmem:[%s1389 + $0x38] sm:$0xf]
    %v1400 = vld [vmem:[%s1389 + $0x3c] sm:$0xff]
    %v1401 = vld [vmem:[%s1389 + $0x44] sm:$0xf]
    %v1402 = vld [vmem:[%s1389 + $0x48] sm:$0xff]
    %v1403 = vld [vmem:[%s1389 + $0x50] sm:$0xf]
    %v1404 = vld [vmem:[%s1389 + $0x54] sm:$0xff]
    %v1405 = vld [vmem:[%s1389 + $0x5c] sm:$0xf]
    %v1406 = vld [vmem:[%s1389 + $0x60] sm:$0xff]
    %v1407 = vld [vmem:[%s1389 + $0x68] sm:$0xf]
    %v1408 = vld [vmem:[%s1389 + $0x6c] sm:$0xff]
    %v1409 = vld [vmem:[%s1389 + $0x74] sm:$0xf]
    %v1410 = vld [vmem:[%s1389 + $0x78] sm:$0xff]
    %v1411 = vld [vmem:[%s1389 + $0x80] sm:$0xf]
    %v1412 = vld [vmem:[%s1389 + $0x84] sm:$0xff]
    %v1413 = vld [vmem:[%s1389 + $0x8c] sm:$0xf]
    %v1414 = vld [vmem:[%s1389 + $0x90] sm:$0xff]
    %v1415 = vld [vmem:[%s1389 + $0x98] sm:$0xf]
    %v1416 = vld [vmem:[%s1389 + $0x9c] sm:$0xff]
    %v1417 = vld [vmem:[%s1389 + $0xa4] sm:$0xf]
    %v1418 = vld [vmem:[%s1389 + $0xa8] sm:$0xff]
    %v1419 = vld [vmem:[%s1389 + $0xb0] sm:$0xf]
    %v1420 = vld [vmem:[%s1389 + $0xb4] sm:$0xff]
    %v1421 = vld [vmem:[%s1389 + $0xbc] sm:$0xf]
    %s1422 = scalar_lea.vmem %s3, 64
    %v1423 = vld [vmem:[%s1422] sm:$0xf]
    %v1424 = vld [vmem:[%s1422 + $0x4] sm:$0xf]
    %v1425 = vld [vmem:[%s1422 + $0x8] sm:$0xf]
    %v1426 = vld [vmem:[%s1422 + $0xc] sm:$0xf]
    %v1427 = vld [vmem:[%s1422 + $0x10] sm:$0xf]
    %v1428 = vld [vmem:[%s1422 + $0x14] sm:$0xf]
    %v1429 = vld [vmem:[%s1422 + $0x18] sm:$0xf]
    %v1430 = vld [vmem:[%s1422 + $0x1c] sm:$0xf]
    %v1431 = vld [vmem:[%s1422 + $0x20] sm:$0xf]
    %v1432 = vld [vmem:[%s1422 + $0x24] sm:$0xf]
    %v1433 = vld [vmem:[%s1422 + $0x28] sm:$0xf]
    %v1434 = vld [vmem:[%s1422 + $0x2c] sm:$0xf]
    %v1435 = vld [vmem:[%s1422 + $0x30] sm:$0xf]
    %v1436 = vld [vmem:[%s1422 + $0x34] sm:$0xf]
    %v1437 = vld [vmem:[%s1422 + $0x38] sm:$0xf]
    %v1438 = vld [vmem:[%s1422 + $0x3c] sm:$0xf]
    %s1439 = scalar_lea.vmem %s4, 128
    %v1440 = vld [vmem:[%s1439] sm:$0xff]
    %v1441 = vld [vmem:[%s1439 + $0x8] sm:$0xff]
    %v1442 = vld [vmem:[%s1439 + $0x10] sm:$0xff]
    %v1443 = vld [vmem:[%s1439 + $0x18] sm:$0xff]
    %v1444 = vld [vmem:[%s1439 + $0x20] sm:$0xff]
    %v1445 = vld [vmem:[%s1439 + $0x28] sm:$0xff]
    %v1446 = vld [vmem:[%s1439 + $0x30] sm:$0xff]
    %v1447 = vld [vmem:[%s1439 + $0x38] sm:$0xff]
    %v1448 = vld [vmem:[%s1439 + $0x40] sm:$0xff]
    %v1449 = vld [vmem:[%s1439 + $0x48] sm:$0xff]
    %v1450 = vld [vmem:[%s1439 + $0x50] sm:$0xff]
    %v1451 = vld [vmem:[%s1439 + $0x58] sm:$0xff]
    %v1452 = vld [vmem:[%s1439 + $0x60] sm:$0xff]
    %v1453 = vld [vmem:[%s1439 + $0x68] sm:$0xff]
    %v1454 = vld [vmem:[%s1439 + $0x70] sm:$0xff]
    %v1455 = vld [vmem:[%s1439 + $0x78] sm:$0xff]
    %s1456 = scalar_lea.vmem %s5, 128
    %v1457 = vld [vmem:[%s1456] sm:$0xf]
    %v1458 = vld [vmem:[%s1456 + $0x4] sm:$0xf]
    %v1459 = vld [vmem:[%s1456 + $0x8] sm:$0xf]
    %v1460 = vld [vmem:[%s1456 + $0xc] sm:$0xf]
    %v1461 = vld [vmem:[%s1456 + $0x10] sm:$0xf]
    %v1462 = vld [vmem:[%s1456 + $0x14] sm:$0xf]
    %v1463 = vld [vmem:[%s1456 + $0x18] sm:$0xf]
    %v1464 = vld [vmem:[%s1456 + $0x1c] sm:$0xf]
    %v1465 = vld [vmem:[%s1456 + $0x20] sm:$0xf]
    %v1466 = vld [vmem:[%s1456 + $0x24] sm:$0xf]
    %v1467 = vld [vmem:[%s1456 + $0x28] sm:$0xf]
    %v1468 = vld [vmem:[%s1456 + $0x2c] sm:$0xf]
    %v1469 = vld [vmem:[%s1456 + $0x30] sm:$0xf]
    %v1470 = vld [vmem:[%s1456 + $0x34] sm:$0xf]
    %v1471 = vld [vmem:[%s1456 + $0x38] sm:$0xf]
    %v1472 = vld [vmem:[%s1456 + $0x3c] sm:$0xf]
    %v1473 = vld [vmem:[%s1456 + $0x40] sm:$0xf]
    %v1474 = vld [vmem:[%s1456 + $0x44] sm:$0xf]
    %v1475 = vld [vmem:[%s1456 + $0x48] sm:$0xf]
    %v1476 = vld [vmem:[%s1456 + $0x4c] sm:$0xf]
    %v1477 = vld [vmem:[%s1456 + $0x50] sm:$0xf]
    %v1478 = vld [vmem:[%s1456 + $0x54] sm:$0xf]
    %v1479 = vld [vmem:[%s1456 + $0x58] sm:$0xf]
    %v1480 = vld [vmem:[%s1456 + $0x5c] sm:$0xf]
    %v1481 = vld [vmem:[%s1456 + $0x60] sm:$0xf]
    %v1482 = vld [vmem:[%s1456 + $0x64] sm:$0xf]
    %v1483 = vld [vmem:[%s1456 + $0x68] sm:$0xf]
    %v1484 = vld [vmem:[%s1456 + $0x6c] sm:$0xf]
    %v1485 = vld [vmem:[%s1456 + $0x70] sm:$0xf]
    %v1486 = vld [vmem:[%s1456 + $0x74] sm:$0xf]
    %v1487 = vld [vmem:[%s1456 + $0x78] sm:$0xf]
    %v1488 = vld [vmem:[%s1456 + $0x7c] sm:$0xf]
    %s1489 = scalar_lea.vmem %s6, 24
    %v1490 = vld [vmem:[%s1489] sm:$0xff]
    %v1491 = vld [vmem:[%s1489 + $0x8] sm:$0xff]
    %v1492 = vld [vmem:[%s1489 + $0x10] sm:$0xff]
    %v1493 = vpack.c.bf16 %v1388, %v1387
    %v1494 = vlaneseq
    %v1495 = vshrl.u32 %v1494, 7
    %v1496 = vsub.s32 0, %v1495
    %v1497 = vrot.slane %v1490, %v1496
    %v1498 = vlaneseq
    %v1499 = vshrl.u32 %v1498, 7
    %v1500 = vsub.s32 0, %v1499
    %v1501 = vrot.slane %v1491, %v1500
    %v1502 = vlaneseq
    %v1503 = vshrl.u32 %v1502, 7
    %v1504 = vsub.s32 0, %v1503
    %v1505 = vrot.slane %v1492, %v1504
    %v1538 = vunpack.c.l.b16 %v1390
    %v1539 = vunpack.c.h.b16 %v1390
    %v1540 = vunpack.c.l.b16 %v1391
    %v1541 = vunpack.c.l.b16 %v1392
    %v1542 = vunpack.c.h.b16 %v1392
    %v1543 = vunpack.c.l.b16 %v1393
    %v1544 = vunpack.c.l.b16 %v1394
    %v1545 = vunpack.c.h.b16 %v1394
    %v1546 = vunpack.c.l.b16 %v1395
    %v1547 = vunpack.c.l.b16 %v1396
    %v1548 = vunpack.c.h.b16 %v1396
    %v1549 = vunpack.c.l.b16 %v1397
    %v1550 = vunpack.c.l.b16 %v1398
    %v1551 = vunpack.c.h.b16 %v1398
    %v1552 = vunpack.c.l.b16 %v1399
    %v1553 = vunpack.c.l.b16 %v1400
    %v1554 = vunpack.c.h.b16 %v1400
    %v1555 = vunpack.c.l.b16 %v1401
    %v1556 = vunpack.c.l.b16 %v1402
    %v1557 = vunpack.c.h.b16 %v1402
    %v1558 = vunpack.c.l.b16 %v1403
    %v1559 = vunpack.c.l.b16 %v1404
    %v1560 = vunpack.c.h.b16 %v1404
    %v1561 = vunpack.c.l.b16 %v1405
    %v1562 = vunpack.c.l.b16 %v1406
    %v1563 = vunpack.c.h.b16 %v1406
    %v1564 = vunpack.c.l.b16 %v1407
    %v1565 = vunpack.c.l.b16 %v1408
    %v1566 = vunpack.c.h.b16 %v1408
    %v1567 = vunpack.c.l.b16 %v1409
    %v1568 = vunpack.c.l.b16 %v1410
    %v1569 = vunpack.c.h.b16 %v1410
    %v1570 = vunpack.c.l.b16 %v1411
    %v1571 = vunpack.c.l.b16 %v1412
    %v1572 = vunpack.c.h.b16 %v1412
    %v1573 = vunpack.c.l.b16 %v1413
    %v1574 = vunpack.c.l.b16 %v1414
    %v1575 = vunpack.c.h.b16 %v1414
    %v1576 = vunpack.c.l.b16 %v1415
    %v1577 = vunpack.c.l.b16 %v1416
    %v1578 = vunpack.c.h.b16 %v1416
    %v1579 = vunpack.c.l.b16 %v1417
    %v1580 = vunpack.c.l.b16 %v1418
    %v1581 = vunpack.c.h.b16 %v1418
    %v1582 = vunpack.c.l.b16 %v1419
    %v1583 = vunpack.c.l.b16 %v1420
    %v1584 = vunpack.c.h.b16 %v1420
    %v1585 = vunpack.c.l.b16 %v1421
    %v1586 = vpack.c.b16 %v1541, %v1538
    %v1587 = vpack.c.b16 %v1542, %v1539
    %v1588 = vpack.c.b16 %v1543, %v1540
    %v1589 = vpack.c.b16 %v1547, %v1544
    %v1590 = vpack.c.b16 %v1548, %v1545
    %v1591 = vpack.c.b16 %v1549, %v1546
    %v1592 = vpack.c.b16 %v1553, %v1550
    %v1593 = vpack.c.b16 %v1554, %v1551
    %v1594 = vpack.c.b16 %v1555, %v1552
    %v1595 = vpack.c.b16 %v1559, %v1556
    %v1596 = vpack.c.b16 %v1560, %v1557
    %v1597 = vpack.c.b16 %v1561, %v1558
    %v1598 = vpack.c.b16 %v1565, %v1562
    %v1599 = vpack.c.b16 %v1566, %v1563
    %v1600 = vpack.c.b16 %v1567, %v1564
    %v1601 = vpack.c.b16 %v1571, %v1568
    %v1602 = vpack.c.b16 %v1572, %v1569
    %v1603 = vpack.c.b16 %v1573, %v1570
    %v1604 = vpack.c.b16 %v1577, %v1574
    %v1605 = vpack.c.b16 %v1578, %v1575
    %v1606 = vpack.c.b16 %v1579, %v1576
    %v1607 = vpack.c.b16 %v1583, %v1580
    %v1608 = vpack.c.b16 %v1584, %v1581
    %v1609 = vpack.c.b16 %v1585, %v1582
    %1634 = vmatprep.subr.bf16.mxu0 %v1587
    %1635 = vmatpush1.bf16.msra.mxu0 %v1586
    %1636 = vmatprep.subr.bf16.mxu0 %v1590
    %1637 = vmatpush1.bf16.msra.mxu0 %v1589
    %1638 = vmatprep.subr.bf16.mxu0 %v1593
    %1639 = vmatpush1.bf16.msra.mxu0 %v1592
    %1640 = vmatprep.subr.bf16.mxu0 %v1596
    %1641 = vmatpush1.bf16.msra.mxu0 %v1595
    %1642 = vmatprep.subr.bf16.mxu0 %v1599
    %1643 = vmatpush1.bf16.msra.mxu0 %v1598
    %1644 = vmatprep.subr.bf16.mxu0 %v1602
    %1645 = vmatpush1.bf16.msra.mxu0 %v1601
    %1646 = vmatprep.subr.bf16.mxu0 %v1605
    %1647 = vmatpush1.bf16.msra.mxu0 %v1604
    %1648 = vmatprep.subr.bf16.mxu0 %v1608
    %1649 = vmatpush1.bf16.msra.mxu0 %v1607
    %1650 = vmatprep.subr.bf16.mxu0 0
    %1651 = vmatpush1.bf16.msra.mxu0 0
    %1652 = vmatprep.subr.bf16.mxu0 0
    %1653 = vmatpush1.bf16.msra.mxu0 0
    %1654 = vmatprep.subr.bf16.mxu0 0
    %1655 = vmatpush1.bf16.msra.mxu0 0
    %1656 = vmatprep.subr.bf16.mxu0 0
    %1657 = vmatpush1.bf16.msra.mxu0 0
    %1658 = vmatprep.subr.bf16.mxu0 0
    %1659 = vmatpush1.bf16.msra.mxu0 0
    %1660 = vmatprep.subr.bf16.mxu0 0
    %1661 = vmatpush1.bf16.msra.mxu0 0
    %1662 = vmatprep.subr.bf16.mxu0 0
    %1663 = vmatpush1.bf16.msra.mxu0 0
    %1664 = vmatprep.subr.bf16.mxu0 0
    %1665 = vmatpush1.bf16.msra.mxu0 0
    %1666 = vmatprep.mubr.bf16.mxu0 0
    %1667 = vmatmul.mubr.bf16.gmra.mrb[0].mxu0 %v1493
    %v1668 = vpop.f32.mrb[0].mxu0
    %v1669 = vadd.f32 %v1497, %v1668
    %v1670 = vpop.f32.mrb[0].mxu0
    %v1671 = vadd.f32 %v1501, %v1670
    %v1672 = vpop.f32.mrb[0].mxu0
    %v1673 = vadd.f32 %v1497, %v1672
    %v1674 = vpop.f32.mrb[0].mxu0
    %v1675 = vadd.f32 %v1501, %v1674
    %1676 = vdwg.mxu0
    %1677 = vmatprep.subr.bf16.mxu0 0
    %1678 = vmatpush1.bf16.msra.mxu0 %v1588
    %1679 = vmatprep.subr.bf16.mxu0 0
    %1680 = vmatpush1.bf16.msra.mxu0 %v1591
    %1681 = vmatprep.subr.bf16.mxu0 0
    %1682 = vmatpush1.bf16.msra.mxu0 %v1594
    %1683 = vmatprep.subr.bf16.mxu0 0
    %1684 = vmatpush1.bf16.msra.mxu0 %v1597
    %1685 = vmatprep.subr.bf16.mxu0 0
    %1686 = vmatpush1.bf16.msra.mxu0 %v1600
    %1687 = vmatprep.subr.bf16.mxu0 0
    %1688 = vmatpush1.bf16.msra.mxu0 %v1603
    %1689 = vmatprep.subr.bf16.mxu0 0
    %1690 = vmatpush1.bf16.msra.mxu0 %v1606
    %1691 = vmatprep.subr.bf16.mxu0 0
    %1692 = vmatpush1.bf16.msra.mxu0 %v1609
    %1693 = vmatprep.subr.bf16.mxu0 0
    %1694 = vmatpush1.bf16.msra.mxu0 0
    %1695 = vmatprep.subr.bf16.mxu0 0
    %1696 = vmatpush1.bf16.msra.mxu0 0
    %1697 = vmatprep.subr.bf16.mxu0 0
    %1698 = vmatpush1.bf16.msra.mxu0 0
    %1699 = vmatprep.subr.bf16.mxu0 0
    %1700 = vmatpush1.bf16.msra.mxu0 0
    %1701 = vmatprep.subr.bf16.mxu0 0
    %1702 = vmatpush1.bf16.msra.mxu0 0
    %1703 = vmatprep.subr.bf16.mxu0 0
    %1704 = vmatpush1.bf16.msra.mxu0 0
    %1705 = vmatprep.subr.bf16.mxu0 0
    %1706 = vmatpush1.bf16.msra.mxu0 0
    %1707 = vmatprep.subr.bf16.mxu0 0
    %1708 = vmatpush1.bf16.msra.mxu0 0
    %1709 = vmatprep.mubr.bf16.mxu0 0
    %1710 = vmatmul.mubr.bf16.gmra.mrb[0].mxu0 %v1493
    %v1711 = vpop.f32.mrb[0].mxu0
    %v1712 = vadd.f32 %v1505, %v1711
    %v1713 = vpop.f32.mrb[0].mxu0
    %v1714 = vpop.f32.mrb[0].mxu0
    %v1715 = vadd.f32 %v1505, %v1714
    %v1716 = vpop.f32.mrb[0].mxu0
    %1717 = vdwg.mxu0
    %v1718 = vpack.c.bf16 %v1673, %v1669
    %v1719 = vpack.c.bf16 %v1675, %v1671
    %v1720 = vpack.c.bf16 %v1715, %v1712
    %v1722 = vsel %vm413, %v1718, 0
    %v1725 = vsel %vm413, %v1719, 0
    %1727 = vmatprep.subr.bf16.mxu0 0
    %1728 = vmatpush1.bf16.xpose.msra.mxu0 %v1725
    %1729 = vmatprep.subr.bf16.mxu0 0
    %1730 = vmatpush1.bf16.xpose.msra.mxu0 0
    %1731 = vmatprep.subr.bf16.mxu0 0
    %1732 = vmatpush1.bf16.xpose.msra.mxu0 0
    %1733 = vmatprep.subr.bf16.mxu0 0
    %1734 = vmatpush1.bf16.xpose.msra.mxu0 0
    %1735 = vmatprep.subr.bf16.mxu0 0
    %1736 = vmatpush1.bf16.xpose.msra.mxu0 0
    %1737 = vmatprep.subr.bf16.mxu0 0
    %1738 = vmatpush1.bf16.xpose.msra.mxu0 0
    %1739 = vmatprep.subr.bf16.mxu0 0
    %1740 = vmatpush1.bf16.xpose.msra.mxu0 0
    %1741 = vmatprep.subr.bf16.mxu0 0
    %1742 = vmatpush1.bf16.xpose.msra.mxu0 0
    %1743 = vmatprep.subr.bf16.mxu0 0
    %1744 = vmatpush1.bf16.xpose.msra.mxu0 0
    %1745 = vmatprep.subr.bf16.mxu0 0
    %1746 = vmatpush1.bf16.xpose.msra.mxu0 0
    %1747 = vmatprep.subr.bf16.mxu0 0
    %1748 = vmatpush1.bf16.xpose.msra.mxu0 0
    %1749 = vmatprep.subr.bf16.mxu0 0
    %1750 = vmatpush1.bf16.xpose.msra.mxu0 0
    %1751 = vmatprep.subr.bf16.mxu0 0
    %1752 = vmatpush1.bf16.xpose.msra.mxu0 0
    %1753 = vmatprep.subr.bf16.mxu0 0
    %1754 = vmatpush1.bf16.xpose.msra.mxu0 0
    %1755 = vmatprep.subr.bf16.mxu0 0
    %1756 = vmatpush1.bf16.xpose.msra.mxu0 0
    %1757 = vmatprep.subr.bf16.mxu0 0
    %1758 = vmatpush1.bf16.xpose.msra.mxu0 0
    %1759 = vmatprep.mubr.bf16.mxu0 0
    %1760 = vmatmul.mubr.bf16.gmra.mrb[0].mxu0 %v1722
    %v1761 = vpop.f32.mrb[0].mxu0
    %v1762 = vadd.f32 0.0, %v1761
    %v1763 = vpop.f32.mrb[0].mxu0
    %v1764 = vpop.f32.mrb[0].mxu0
    %v1765 = vadd.f32 0.0, %v1764
    %v1766 = vpop.f32.mrb[0].mxu0
    %1767 = vdwg.mxu0
    %v1768 = vmul.f32 %v1762, 0.17677669
    %v1769 = vmul.f32 %v1765, 0.17677669
    %v1770 = vadd.f32 %v1768, %v84
    %v1771 = vadd.f32 %v1769, %v85
    %v1772 = vsel %vm465, %v1770, -inf
    %1773 = vmax.xlane.f32.xlu0 %v1772
    %v1774 = vpop.xlane.xlu0 %1773
    %v1775 = vsel %vm465, %v1771, -inf
    %1776 = vmax.xlane.f32.xlu0 %v1775
    %v1777 = vpop.xlane.xlu0 %1776
    %v1778 = vsub.f32 %v1770, %v1774
    %v1779 = vsub.f32 %v1771, %v1777
    %v1780 = vmul.f32 %v1778, 1.442695
    %v1781 = vpow.pop %v1780
    %v1782 = vmul.f32 %v1779, 1.442695
    %v1783 = vpow.pop %v1782
    %v1784 = vsel %vm465, %v1781, 0.0
    %1785 = vadd.xlane.f32.xlu0 %v1784
    %v1786 = vpop.xlane.xlu0 %1785
    %v1787 = vsel %vm465, %v1783, 0.0
    %1788 = vadd.xlane.f32.xlu0 %v1787
    %v1789 = vpop.xlane.xlu0 %1788
    %v1790 = vrcp.pop %v1786
    %v1791 = vrcp.pop %v1789
    %v1792 = vmul.f32 %v1781, %v1790
    %v1793 = vmul.f32 %v1783, %v1791
    %v1794 = vpack.c.bf16 %v1793, %v1792
    %v1796 = vsel %vm465, %v1794, 0
    %1798 = vmatprep.subr.bf16.mxu0 0
    %1799 = vmatpush1.bf16.msra.mxu0 %v1720
    %1800 = vmatprep.subr.bf16.mxu0 0
    %1801 = vmatpush1.bf16.msra.mxu0 0
    %1802 = vmatprep.subr.bf16.mxu0 0
    %1803 = vmatpush1.bf16.msra.mxu0 0
    %1804 = vmatprep.subr.bf16.mxu0 0
    %1805 = vmatpush1.bf16.msra.mxu0 0
    %1806 = vmatprep.subr.bf16.mxu0 0
    %1807 = vmatpush1.bf16.msra.mxu0 0
    %1808 = vmatprep.subr.bf16.mxu0 0
    %1809 = vmatpush1.bf16.msra.mxu0 0
    %1810 = vmatprep.subr.bf16.mxu0 0
    %1811 = vmatpush1.bf16.msra.mxu0 0
    %1812 = vmatprep.subr.bf16.mxu0 0
    %1813 = vmatpush1.bf16.msra.mxu0 0
    %1814 = vmatprep.subr.bf16.mxu0 0
    %1815 = vmatpush1.bf16.msra.mxu0 0
    %1816 = vmatprep.subr.bf16.mxu0 0
    %1817 = vmatpush1.bf16.msra.mxu0 0
    %1818 = vmatprep.subr.bf16.mxu0 0
    %1819 = vmatpush1.bf16.msra.mxu0 0
    %1820 = vmatprep.subr.bf16.mxu0 0
    %1821 = vmatpush1.bf16.msra.mxu0 0
    %1822 = vmatprep.subr.bf16.mxu0 0
    %1823 = vmatpush1.bf16.msra.mxu0 0
    %1824 = vmatprep.subr.bf16.mxu0 0
    %1825 = vmatpush1.bf16.msra.mxu0 0
    %1826 = vmatprep.subr.bf16.mxu0 0
    %1827 = vmatpush1.bf16.msra.mxu0 0
    %1828 = vmatprep.subr.bf16.mxu0 0
    %1829 = vmatpush1.bf16.msra.mxu0 0
    %1830 = vmatprep.mubr.bf16.mxu0 0
    %1831 = vmatmul.mubr.bf16.gmra.mrb[0].mxu0 %v1796
    %v1832 = vpop.f32.mrb[0].mxu0
    %v1833 = vadd.f32 0.0, %v1832
    %v1834 = vpop.f32.mrb[0].mxu0
    %v1835 = vpop.f32.mrb[0].mxu0
    %v1836 = vadd.f32 0.0, %v1835
    %v1837 = vpop.f32.mrb[0].mxu0
    %1838 = vdwg.mxu0
    %1840 = vrot.lane.b32.xlu0 %v1718, 96
    %v1841 = vpop.permute.xlu0 %1840
    %1843 = vrot.lane.b32.xlu0 %v1719, 96
    %v1844 = vpop.permute.xlu0 %1843
    %v1846 = vsel %vm413, %v1841, 0
    %v1849 = vsel %vm413, %v1844, 0
    %1851 = vmatprep.subr.bf16.mxu0 0
    %1852 = vmatpush1.bf16.xpose.msra.mxu0 %v1849
    %1853 = vmatprep.subr.bf16.mxu0 0
    %1854 = vmatpush1.bf16.xpose.msra.mxu0 0
    %1855 = vmatprep.subr.bf16.mxu0 0
    %1856 = vmatpush1.bf16.xpose.msra.mxu0 0
    %1857 = vmatprep.subr.bf16.mxu0 0
    %1858 = vmatpush1.bf16.xpose.msra.mxu0 0
    %1859 = vmatprep.subr.bf16.mxu0 0
    %1860 = vmatpush1.bf16.xpose.msra.mxu0 0
    %1861 = vmatprep.subr.bf16.mxu0 0
    %1862 = vmatpush1.bf16.xpose.msra.mxu0 0
    %1863 = vmatprep.subr.bf16.mxu0 0
    %1864 = vmatpush1.bf16.xpose.msra.mxu0 0
    %1865 = vmatprep.subr.bf16.mxu0 0
    %1866 = vmatpush1.bf16.xpose.msra.mxu0 0
    %1867 = vmatprep.subr.bf16.mxu0 0
    %1868 = vmatpush1.bf16.xpose.msra.mxu0 0
    %1869 = vmatprep.subr.bf16.mxu0 0
    %1870 = vmatpush1.bf16.xpose.msra.mxu0 0
    %1871 = vmatprep.subr.bf16.mxu0 0
    %1872 = vmatpush1.bf16.xpose.msra.mxu0 0
    %1873 = vmatprep.subr.bf16.mxu0 0
    %1874 = vmatpush1.bf16.xpose.msra.mxu0 0
    %1875 = vmatprep.subr.bf16.mxu0 0
    %1876 = vmatpush1.bf16.xpose.msra.mxu0 0
    %1877 = vmatprep.subr.bf16.mxu0 0
    %1878 = vmatpush1.bf16.xpose.msra.mxu0 0
    %1879 = vmatprep.subr.bf16.mxu0 0
    %1880 = vmatpush1.bf16.xpose.msra.mxu0 0
    %1881 = vmatprep.subr.bf16.mxu0 0
    %1882 = vmatpush1.bf16.xpose.msra.mxu0 0
    %1883 = vmatprep.mubr.bf16.mxu0 0
    %1884 = vmatmul.mubr.bf16.gmra.mrb[0].mxu0 %v1846
    %v1885 = vpop.f32.mrb[0].mxu0
    %v1886 = vadd.f32 0.0, %v1885
    %v1887 = vpop.f32.mrb[0].mxu0
    %v1888 = vpop.f32.mrb[0].mxu0
    %v1889 = vadd.f32 0.0, %v1888
    %v1890 = vpop.f32.mrb[0].mxu0
    %1891 = vdwg.mxu0
    %v1892 = vmul.f32 %v1886, 0.17677669
    %v1893 = vmul.f32 %v1889, 0.17677669
    %v1894 = vadd.f32 %v1892, %v84
    %v1895 = vadd.f32 %v1893, %v85
    %v1896 = vsel %vm465, %v1894, -inf
    %1897 = vmax.xlane.f32.xlu0 %v1896
    %v1898 = vpop.xlane.xlu0 %1897
    %v1899 = vsel %vm465, %v1895, -inf
    %1900 = vmax.xlane.f32.xlu0 %v1899
    %v1901 = vpop.xlane.xlu0 %1900
    %v1902 = vsub.f32 %v1894, %v1898
    %v1903 = vsub.f32 %v1895, %v1901
    %v1904 = vmul.f32 %v1902, 1.442695
    %v1905 = vpow.pop %v1904
    %v1906 = vmul.f32 %v1903, 1.442695
    %v1907 = vpow.pop %v1906
    %v1908 = vsel %vm465, %v1905, 0.0
    %1909 = vadd.xlane.f32.xlu0 %v1908
    %v1910 = vpop.xlane.xlu0 %1909
    %v1911 = vsel %vm465, %v1907, 0.0
    %1912 = vadd.xlane.f32.xlu0 %v1911
    %v1913 = vpop.xlane.xlu0 %1912
    %v1914 = vrcp.pop %v1910
    %v1915 = vrcp.pop %v1913
    %v1916 = vmul.f32 %v1905, %v1914
    %v1917 = vmul.f32 %v1907, %v1915
    %v1918 = vpack.c.bf16 %v1917, %v1916
    %1920 = vrot.lane.b32.xlu0 %v1720, 96
    %v1921 = vpop.permute.xlu0 %1920
    %v1924 = vsel %vm465, %v1918, 0
    %1926 = vmatprep.subr.bf16.mxu0 0
    %1927 = vmatpush1.bf16.msra.mxu0 %v1921
    %1928 = vmatprep.subr.bf16.mxu0 0
    %1929 = vmatpush1.bf16.msra.mxu0 0
    %1930 = vmatprep.subr.bf16.mxu0 0
    %1931 = vmatpush1.bf16.msra.mxu0 0
    %1932 = vmatprep.subr.bf16.mxu0 0
    %1933 = vmatpush1.bf16.msra.mxu0 0
    %1934 = vmatprep.subr.bf16.mxu0 0
    %1935 = vmatpush1.bf16.msra.mxu0 0
    %1936 = vmatprep.subr.bf16.mxu0 0
    %1937 = vmatpush1.bf16.msra.mxu0 0
    %1938 = vmatprep.subr.bf16.mxu0 0
    %1939 = vmatpush1.bf16.msra.mxu0 0
    %1940 = vmatprep.subr.bf16.mxu0 0
    %1941 = vmatpush1.bf16.msra.mxu0 0
    %1942 = vmatprep.subr.bf16.mxu0 0
    %1943 = vmatpush1.bf16.msra.mxu0 0
    %1944 = vmatprep.subr.bf16.mxu0 0
    %1945 = vmatpush1.bf16.msra.mxu0 0
    %1946 = vmatprep.subr.bf16.mxu0 0
    %1947 = vmatpush1.bf16.msra.mxu0 0
    %1948 = vmatprep.subr.bf16.mxu0 0
    %1949 = vmatpush1.bf16.msra.mxu0 0
    %1950 = vmatprep.subr.bf16.mxu0 0
    %1951 = vmatpush1.bf16.msra.mxu0 0
    %1952 = vmatprep.subr.bf16.mxu0 0
    %1953 = vmatpush1.bf16.msra.mxu0 0
    %1954 = vmatprep.subr.bf16.mxu0 0
    %1955 = vmatpush1.bf16.msra.mxu0 0
    %1956 = vmatprep.subr.bf16.mxu0 0
    %1957 = vmatpush1.bf16.msra.mxu0 0
    %1958 = vmatprep.mubr.bf16.mxu0 0
    %1959 = vmatmul.mubr.bf16.gmra.mrb[0].mxu0 %v1924
    %v1960 = vpop.f32.mrb[0].mxu0
    %v1961 = vadd.f32 0.0, %v1960
    %v1962 = vpop.f32.mrb[0].mxu0
    %v1963 = vpop.f32.mrb[0].mxu0
    %v1964 = vadd.f32 0.0, %v1963
    %v1965 = vpop.f32.mrb[0].mxu0
    %1966 = vdwg.mxu0
    %1967 = vrot.lane.b32.xlu0 %v1718, 64
    %v1968 = vpop.permute.xlu0 %1967
    %1969 = vrot.lane.b32.xlu0 %v1719, 64
    %v1970 = vpop.permute.xlu0 %1969
    %v1972 = vsel %vm413, %v1968, 0
    %v1975 = vsel %vm413, %v1970, 0
    %1977 = vmatprep.subr.bf16.mxu0 0
    %1978 = vmatpush1.bf16.xpose.msra.mxu0 %v1975
    %1979 = vmatprep.subr.bf16.mxu0 0
    %1980 = vmatpush1.bf16.xpose.msra.mxu0 0
    %1981 = vmatprep.subr.bf16.mxu0 0
    %1982 = vmatpush1.bf16.xpose.msra.mxu0 0
    %1983 = vmatprep.subr.bf16.mxu0 0
    %1984 = vmatpush1.bf16.xpose.msra.mxu0 0
    %1985 = vmatprep.subr.bf16.mxu0 0
    %1986 = vmatpush1.bf16.xpose.msra.mxu0 0
    %1987 = vmatprep.subr.bf16.mxu0 0
    %1988 = vmatpush1.bf16.xpose.msra.mxu0 0
    %1989 = vmatprep.subr.bf16.mxu0 0
    %1990 = vmatpush1.bf16.xpose.msra.mxu0 0
    %1991 = vmatprep.subr.bf16.mxu0 0
    %1992 = vmatpush1.bf16.xpose.msra.mxu0 0
    %1993 = vmatprep.subr.bf16.mxu0 0
    %1994 = vmatpush1.bf16.xpose.msra.mxu0 0
    %1995 = vmatprep.subr.bf16.mxu0 0
    %1996 = vmatpush1.bf16.xpose.msra.mxu0 0
    %1997 = vmatprep.subr.bf16.mxu0 0
    %1998 = vmatpush1.bf16.xpose.msra.mxu0 0
    %1999 = vmatprep.subr.bf16.mxu0 0
    %2000 = vmatpush1.bf16.xpose.msra.mxu0 0
    %2001 = vmatprep.subr.bf16.mxu0 0
    %2002 = vmatpush1.bf16.xpose.msra.mxu0 0
    %2003 = vmatprep.subr.bf16.mxu0 0
    %2004 = vmatpush1.bf16.xpose.msra.mxu0 0
    %2005 = vmatprep.subr.bf16.mxu0 0
    %2006 = vmatpush1.bf16.xpose.msra.mxu0 0
    %2007 = vmatprep.subr.bf16.mxu0 0
    %2008 = vmatpush1.bf16.xpose.msra.mxu0 0
    %2009 = vmatprep.mubr.bf16.mxu0 0
    %2010 = vmatmul.mubr.bf16.gmra.mrb[0].mxu0 %v1972
    %v2011 = vpop.f32.mrb[0].mxu0
    %v2012 = vadd.f32 0.0, %v2011
    %v2013 = vpop.f32.mrb[0].mxu0
    %v2014 = vpop.f32.mrb[0].mxu0
    %v2015 = vadd.f32 0.0, %v2014
    %v2016 = vpop.f32.mrb[0].mxu0
    %2017 = vdwg.mxu0
    %v2018 = vmul.f32 %v2012, 0.17677669
    %v2019 = vmul.f32 %v2015, 0.17677669
    %v2020 = vadd.f32 %v2018, %v84
    %v2021 = vadd.f32 %v2019, %v85
    %v2022 = vsel %vm465, %v2020, -inf
    %2023 = vmax.xlane.f32.xlu0 %v2022
    %v2024 = vpop.xlane.xlu0 %2023
    %v2025 = vsel %vm465, %v2021, -inf
    %2026 = vmax.xlane.f32.xlu0 %v2025
    %v2027 = vpop.xlane.xlu0 %2026
    %v2028 = vsub.f32 %v2020, %v2024
    %v2029 = vsub.f32 %v2021, %v2027
    %v2030 = vmul.f32 %v2028, 1.442695
    %v2031 = vpow.pop %v2030
    %v2032 = vmul.f32 %v2029, 1.442695
    %v2033 = vpow.pop %v2032
    %v2034 = vsel %vm465, %v2031, 0.0
    %2035 = vadd.xlane.f32.xlu0 %v2034
    %v2036 = vpop.xlane.xlu0 %2035
    %v2037 = vsel %vm465, %v2033, 0.0
    %2038 = vadd.xlane.f32.xlu0 %v2037
    %v2039 = vpop.xlane.xlu0 %2038
    %v2040 = vrcp.pop %v2036
    %v2041 = vrcp.pop %v2039
    %v2042 = vmul.f32 %v2031, %v2040
    %v2043 = vmul.f32 %v2033, %v2041
    %v2044 = vpack.c.bf16 %v2043, %v2042
    %2045 = vrot.lane.b32.xlu0 %v1720, 64
    %v2046 = vpop.permute.xlu0 %2045
    %v2049 = vsel %vm465, %v2044, 0
    %2051 = vmatprep.subr.bf16.mxu0 0
    %2052 = vmatpush1.bf16.msra.mxu0 %v2046
    %2053 = vmatprep.subr.bf16.mxu0 0
    %2054 = vmatpush1.bf16.msra.mxu0 0
    %2055 = vmatprep.subr.bf16.mxu0 0
    %2056 = vmatpush1.bf16.msra.mxu0 0
    %2057 = vmatprep.subr.bf16.mxu0 0
    %2058 = vmatpush1.bf16.msra.mxu0 0
    %2059 = vmatprep.subr.bf16.mxu0 0
    %2060 = vmatpush1.bf16.msra.mxu0 0
    %2061 = vmatprep.subr.bf16.mxu0 0
    %2062 = vmatpush1.bf16.msra.mxu0 0
    %2063 = vmatprep.subr.bf16.mxu0 0
    %2064 = vmatpush1.bf16.msra.mxu0 0
    %2065 = vmatprep.subr.bf16.mxu0 0
    %2066 = vmatpush1.bf16.msra.mxu0 0
    %2067 = vmatprep.subr.bf16.mxu0 0
    %2068 = vmatpush1.bf16.msra.mxu0 0
    %2069 = vmatprep.subr.bf16.mxu0 0
    %2070 = vmatpush1.bf16.msra.mxu0 0
    %2071 = vmatprep.subr.bf16.mxu0 0
    %2072 = vmatpush1.bf16.msra.mxu0 0
    %2073 = vmatprep.subr.bf16.mxu0 0
    %2074 = vmatpush1.bf16.msra.mxu0 0
    %2075 = vmatprep.subr.bf16.mxu0 0
    %2076 = vmatpush1.bf16.msra.mxu0 0
    %2077 = vmatprep.subr.bf16.mxu0 0
    %2078 = vmatpush1.bf16.msra.mxu0 0
    %2079 = vmatprep.subr.bf16.mxu0 0
    %2080 = vmatpush1.bf16.msra.mxu0 0
    %2081 = vmatprep.subr.bf16.mxu0 0
    %2082 = vmatpush1.bf16.msra.mxu0 0
    %2083 = vmatprep.mubr.bf16.mxu0 0
    %2084 = vmatmul.mubr.bf16.gmra.mrb[0].mxu0 %v2049
    %v2085 = vpop.f32.mrb[0].mxu0
    %v2086 = vadd.f32 0.0, %v2085
    %v2087 = vpop.f32.mrb[0].mxu0
    %v2088 = vpop.f32.mrb[0].mxu0
    %v2089 = vadd.f32 0.0, %v2088
    %v2090 = vpop.f32.mrb[0].mxu0
    %2091 = vdwg.mxu0
    %2092 = vrot.lane.b32.xlu0 %v1718, 32
    %v2093 = vpop.permute.xlu0 %2092
    %2094 = vrot.lane.b32.xlu0 %v1719, 32
    %v2095 = vpop.permute.xlu0 %2094
    %v2097 = vsel %vm413, %v2093, 0
    %v2100 = vsel %vm413, %v2095, 0
    %2102 = vmatprep.subr.bf16.mxu0 0
    %2103 = vmatpush1.bf16.xpose.msra.mxu0 %v2100
    %2104 = vmatprep.subr.bf16.mxu0 0
    %2105 = vmatpush1.bf16.xpose.msra.mxu0 0
    %2106 = vmatprep.subr.bf16.mxu0 0
    %2107 = vmatpush1.bf16.xpose.msra.mxu0 0
    %2108 = vmatprep.subr.bf16.mxu0 0
    %2109 = vmatpush1.bf16.xpose.msra.mxu0 0
    %2110 = vmatprep.subr.bf16.mxu0 0
    %2111 = vmatpush1.bf16.xpose.msra.mxu0 0
    %2112 = vmatprep.subr.bf16.mxu0 0
    %2113 = vmatpush1.bf16.xpose.msra.mxu0 0
    %2114 = vmatprep.subr.bf16.mxu0 0
    %2115 = vmatpush1.bf16.xpose.msra.mxu0 0
    %2116 = vmatprep.subr.bf16.mxu0 0
    %2117 = vmatpush1.bf16.xpose.msra.mxu0 0
    %2118 = vmatprep.subr.bf16.mxu0 0
    %2119 = vmatpush1.bf16.xpose.msra.mxu0 0
    %2120 = vmatprep.subr.bf16.mxu0 0
    %2121 = vmatpush1.bf16.xpose.msra.mxu0 0
    %2122 = vmatprep.subr.bf16.mxu0 0
    %2123 = vmatpush1.bf16.xpose.msra.mxu0 0
    %2124 = vmatprep.subr.bf16.mxu0 0
    %2125 = vmatpush1.bf16.xpose.msra.mxu0 0
    %2126 = vmatprep.subr.bf16.mxu0 0
    %2127 = vmatpush1.bf16.xpose.msra.mxu0 0
    %2128 = vmatprep.subr.bf16.mxu0 0
    %2129 = vmatpush1.bf16.xpose.msra.mxu0 0
    %2130 = vmatprep.subr.bf16.mxu0 0
    %2131 = vmatpush1.bf16.xpose.msra.mxu0 0
    %2132 = vmatprep.subr.bf16.mxu0 0
    %2133 = vmatpush1.bf16.xpose.msra.mxu0 0
    %2134 = vmatprep.mubr.bf16.mxu0 0
    %2135 = vmatmul.mubr.bf16.gmra.mrb[0].mxu0 %v2097
    %v2136 = vpop.f32.mrb[0].mxu0
    %v2137 = vadd.f32 0.0, %v2136
    %v2138 = vpop.f32.mrb[0].mxu0
    %v2139 = vpop.f32.mrb[0].mxu0
    %v2140 = vadd.f32 0.0, %v2139
    %v2141 = vpop.f32.mrb[0].mxu0
    %2142 = vdwg.mxu0
    %v2143 = vmul.f32 %v2137, 0.17677669
    %v2144 = vmul.f32 %v2140, 0.17677669
    %v2145 = vadd.f32 %v2143, %v84
    %v2146 = vadd.f32 %v2144, %v85
    %v2147 = vsel %vm465, %v2145, -inf
    %2148 = vmax.xlane.f32.xlu0 %v2147
    %v2149 = vpop.xlane.xlu0 %2148
    %v2150 = vsel %vm465, %v2146, -inf
    %2151 = vmax.xlane.f32.xlu0 %v2150
    %v2152 = vpop.xlane.xlu0 %2151
    %v2153 = vsub.f32 %v2145, %v2149
    %v2154 = vsub.f32 %v2146, %v2152
    %v2155 = vmul.f32 %v2153, 1.442695
    %v2156 = vpow.pop %v2155
    %v2157 = vmul.f32 %v2154, 1.442695
    %v2158 = vpow.pop %v2157
    %v2159 = vsel %vm465, %v2156, 0.0
    %2160 = vadd.xlane.f32.xlu0 %v2159
    %v2161 = vpop.xlane.xlu0 %2160
    %v2162 = vsel %vm465, %v2158, 0.0
    %2163 = vadd.xlane.f32.xlu0 %v2162
    %v2164 = vpop.xlane.xlu0 %2163
    %v2165 = vrcp.pop %v2161
    %v2166 = vrcp.pop %v2164
    %v2167 = vmul.f32 %v2156, %v2165
    %v2168 = vmul.f32 %v2158, %v2166
    %v2169 = vpack.c.bf16 %v2168, %v2167
    %2170 = vrot.lane.b32.xlu0 %v1720, 32
    %v2171 = vpop.permute.xlu0 %2170
    %v2174 = vsel %vm465, %v2169, 0
    %2176 = vmatprep.subr.bf16.mxu0 0
    %2177 = vmatpush1.bf16.msra.mxu0 %v2171
    %2178 = vmatprep.subr.bf16.mxu0 0
    %2179 = vmatpush1.bf16.msra.mxu0 0
    %2180 = vmatprep.subr.bf16.mxu0 0
    %2181 = vmatpush1.bf16.msra.mxu0 0
    %2182 = vmatprep.subr.bf16.mxu0 0
    %2183 = vmatpush1.bf16.msra.mxu0 0
    %2184 = vmatprep.subr.bf16.mxu0 0
    %2185 = vmatpush1.bf16.msra.mxu0 0
    %2186 = vmatprep.subr.bf16.mxu0 0
    %2187 = vmatpush1.bf16.msra.mxu0 0
    %2188 = vmatprep.subr.bf16.mxu0 0
    %2189 = vmatpush1.bf16.msra.mxu0 0
    %2190 = vmatprep.subr.bf16.mxu0 0
    %2191 = vmatpush1.bf16.msra.mxu0 0
    %2192 = vmatprep.subr.bf16.mxu0 0
    %2193 = vmatpush1.bf16.msra.mxu0 0
    %2194 = vmatprep.subr.bf16.mxu0 0
    %2195 = vmatpush1.bf16.msra.mxu0 0
    %2196 = vmatprep.subr.bf16.mxu0 0
    %2197 = vmatpush1.bf16.msra.mxu0 0
    %2198 = vmatprep.subr.bf16.mxu0 0
    %2199 = vmatpush1.bf16.msra.mxu0 0
    %2200 = vmatprep.subr.bf16.mxu0 0
    %2201 = vmatpush1.bf16.msra.mxu0 0
    %2202 = vmatprep.subr.bf16.mxu0 0
    %2203 = vmatpush1.bf16.msra.mxu0 0
    %2204 = vmatprep.subr.bf16.mxu0 0
    %2205 = vmatpush1.bf16.msra.mxu0 0
    %2206 = vmatprep.subr.bf16.mxu0 0
    %2207 = vmatpush1.bf16.msra.mxu0 0
    %2208 = vmatprep.mubr.bf16.mxu0 0
    %2209 = vmatmul.mubr.bf16.gmra.mrb[0].mxu0 %v2174
    %v2210 = vpop.f32.mrb[0].mxu0
    %v2211 = vadd.f32 0.0, %v2210
    %v2212 = vpop.f32.mrb[0].mxu0
    %v2213 = vpop.f32.mrb[0].mxu0
    %v2214 = vadd.f32 0.0, %v2213
    %v2215 = vpop.f32.mrb[0].mxu0
    %2216 = vdwg.mxu0
    %2219 = vrot.lane.b32.xlu0 %v1961, 32
    %v2220 = vpop.permute.xlu0 %2219
    %2221 = vrot.lane.b32.xlu0 %v1964, 32
    %v2222 = vpop.permute.xlu0 %2221
    %2227 = vrot.lane.b32.xlu0 %v2086, 64
    %v2228 = vpop.permute.xlu0 %2227
    %2229 = vrot.lane.b32.xlu0 %v2089, 64
    %v2230 = vpop.permute.xlu0 %2229
    %2235 = vrot.lane.b32.xlu0 %v2211, 96
    %v2236 = vpop.permute.xlu0 %2235
    %2237 = vrot.lane.b32.xlu0 %v2214, 96
    %v2238 = vpop.permute.xlu0 %2237
    %v2241 = vsel %vm413, %v1833, %v2220
    %v2242 = vsel %vm413, %v1836, %v2222
    %v2243 = vsel %vm937, %v2241, %v2228
    %v2244 = vsel %vm937, %v2242, %v2230
    %v2245 = vsel %vm940, %v2243, %v2236
    %v2246 = vsel %vm940, %v2244, %v2238
    %v2247 = vpack.c.bf16 %v2246, %v2245
    %v2248 = vlaneseq
    %v2249 = vshrl.u32 %v2248, 7
    %v2250 = vsub.s32 1, %v2249
    %v2251 = vrot.slane %v1490, %v2250
    %v2268 = vunpack.c.l.b16 %v1423
    %v2269 = vunpack.c.l.b16 %v1424
    %v2270 = vunpack.c.l.b16 %v1425
    %v2271 = vunpack.c.l.b16 %v1426
    %v2272 = vunpack.c.l.b16 %v1427
    %v2273 = vunpack.c.l.b16 %v1428
    %v2274 = vunpack.c.l.b16 %v1429
    %v2275 = vunpack.c.l.b16 %v1430
    %v2276 = vunpack.c.l.b16 %v1431
    %v2277 = vunpack.c.l.b16 %v1432
    %v2278 = vunpack.c.l.b16 %v1433
    %v2279 = vunpack.c.l.b16 %v1434
    %v2280 = vunpack.c.l.b16 %v1435
    %v2281 = vunpack.c.l.b16 %v1436
    %v2282 = vunpack.c.l.b16 %v1437
    %v2283 = vunpack.c.l.b16 %v1438
    %v2284 = vpack.c.b16 %v2269, %v2268
    %v2285 = vpack.c.b16 %v2271, %v2270
    %v2286 = vpack.c.b16 %v2273, %v2272
    %v2287 = vpack.c.b16 %v2275, %v2274
    %v2288 = vpack.c.b16 %v2277, %v2276
    %v2289 = vpack.c.b16 %v2279, %v2278
    %v2290 = vpack.c.b16 %v2281, %v2280
    %v2291 = vpack.c.b16 %v2283, %v2282
    %2300 = vmatprep.subr.bf16.mxu0 0
    %2301 = vmatpush1.bf16.msra.mxu0 %v2284
    %2302 = vmatprep.subr.bf16.mxu0 0
    %2303 = vmatpush1.bf16.msra.mxu0 %v2285
    %2304 = vmatprep.subr.bf16.mxu0 0
    %2305 = vmatpush1.bf16.msra.mxu0 %v2286
    %2306 = vmatprep.subr.bf16.mxu0 0
    %2307 = vmatpush1.bf16.msra.mxu0 %v2287
    %2308 = vmatprep.subr.bf16.mxu0 0
    %2309 = vmatpush1.bf16.msra.mxu0 %v2288
    %2310 = vmatprep.subr.bf16.mxu0 0
    %2311 = vmatpush1.bf16.msra.mxu0 %v2289
    %2312 = vmatprep.subr.bf16.mxu0 0
    %2313 = vmatpush1.bf16.msra.mxu0 %v2290
    %2314 = vmatprep.subr.bf16.mxu0 0
    %2315 = vmatpush1.bf16.msra.mxu0 %v2291
    %2316 = vmatprep.subr.bf16.mxu0 0
    %2317 = vmatpush1.bf16.msra.mxu0 0
    %2318 = vmatprep.subr.bf16.mxu0 0
    %2319 = vmatpush1.bf16.msra.mxu0 0
    %2320 = vmatprep.subr.bf16.mxu0 0
    %2321 = vmatpush1.bf16.msra.mxu0 0
    %2322 = vmatprep.subr.bf16.mxu0 0
    %2323 = vmatpush1.bf16.msra.mxu0 0
    %2324 = vmatprep.subr.bf16.mxu0 0
    %2325 = vmatpush1.bf16.msra.mxu0 0
    %2326 = vmatprep.subr.bf16.mxu0 0
    %2327 = vmatpush1.bf16.msra.mxu0 0
    %2328 = vmatprep.subr.bf16.mxu0 0
    %2329 = vmatpush1.bf16.msra.mxu0 0
    %2330 = vmatprep.subr.bf16.mxu0 0
    %2331 = vmatpush1.bf16.msra.mxu0 0
    %2332 = vmatprep.mubr.bf16.mxu0 0
    %2333 = vmatmul.mubr.bf16.gmra.mrb[0].mxu0 %v2247
    %v2334 = vpop.f32.mrb[0].mxu0
    %v2335 = vadd.f32 %v2251, %v2334
    %v2336 = vpop.f32.mrb[0].mxu0
    %v2337 = vpop.f32.mrb[0].mxu0
    %v2338 = vadd.f32 %v2251, %v2337
    %v2339 = vpop.f32.mrb[0].mxu0
    %2340 = vdwg.mxu0
    %v2341 = vadd.f32 %v1387, %v2335
    %v2342 = vadd.f32 %v1388, %v2338
    %2343 = vadd.xlane.f32.xlu0 %v2341
    %v2344 = vpop.xlane.xlu0 %2343
    %2345 = vadd.xlane.f32.xlu0 %v2342
    %v2346 = vpop.xlane.xlu0 %2345
    %v2347 = vmul.f32 %v2344, %v1043
    %v2348 = vmul.f32 %v2346, %v1043
    %v2349 = vsub.f32 %v2341, %v2347
    %v2350 = vsub.f32 %v2342, %v2348
    %v2351 = vmul.f32 %v2349, %v2349
    %v2352 = vmul.f32 %v2350, %v2350
    %2353 = vadd.xlane.f32.xlu0 %v2351
    %v2354 = vpop.xlane.xlu0 %2353
    %2355 = vadd.xlane.f32.xlu0 %v2352
    %v2356 = vpop.xlane.xlu0 %2355
    %v2357 = vmul.f32 %v2354, %v1043
    %v2358 = vmul.f32 %v2356, %v1043
    %v2359 = vadd.f32 %v2357, 1e-05
    %v2360 = vadd.f32 %v2358, 1e-05
    %v2361 = vrsqrt.pop %v2359
    %v2362 = vrsqrt.pop %v2360
    %v2363 = vmul.f32 %v2349, %v2361
    %v2364 = vmul.f32 %v2350, %v2362
    %v2365 = vlaneseq
    %v2366 = vshrl.u32 %v2365, 7
    %v2367 = vsub.s32 2, %v2366
    %v2368 = vrot.slane %v1490, %v2367
    %v2369 = vmul.f32 %v2363, %v2368
    %v2370 = vmul.f32 %v2364, %v2368
    %v2371 = vlaneseq
    %v2372 = vshrl.u32 %v2371, 7
    %v2373 = vsub.s32 3, %v2372
    %v2374 = vrot.slane %v1490, %v2373
    %v2375 = vadd.f32 %v2369, %v2374
    %v2376 = vadd.f32 %v2370, %v2374
    %v2377 = vpack.c.bf16 %v2376, %v2375
    %v2378 = vlaneseq
    %v2379 = vshrl.u32 %v2378, 7
    %v2380 = vsub.s32 4, %v2379
    %v2381 = vrot.slane %v1490, %v2380
    %v2382 = vlaneseq
    %v2383 = vshrl.u32 %v2382, 7
    %v2384 = vsub.s32 4, %v2383
    %v2385 = vrot.slane %v1491, %v2384
    %v2402 = vunpack.c.l.b16 %v1440
    %v2403 = vunpack.c.h.b16 %v1440
    %v2404 = vunpack.c.l.b16 %v1441
    %v2405 = vunpack.c.h.b16 %v1441
    %v2406 = vunpack.c.l.b16 %v1442
    %v2407 = vunpack.c.h.b16 %v1442
    %v2408 = vunpack.c.l.b16 %v1443
    %v2409 = vunpack.c.h.b16 %v1443
    %v2410 = vunpack.c.l.b16 %v1444
    %v2411 = vunpack.c.h.b16 %v1444
    %v2412 = vunpack.c.l.b16 %v1445
    %v2413 = vunpack.c.h.b16 %v1445
    %v2414 = vunpack.c.l.b16 %v1446
    %v2415 = vunpack.c.h.b16 %v1446
    %v2416 = vunpack.c.l.b16 %v1447
    %v2417 = vunpack.c.h.b16 %v1447
    %v2418 = vunpack.c.l.b16 %v1448
    %v2419 = vunpack.c.h.b16 %v1448
    %v2420 = vunpack.c.l.b16 %v1449
    %v2421 = vunpack.c.h.b16 %v1449
    %v2422 = vunpack.c.l.b16 %v1450
    %v2423 = vunpack.c.h.b16 %v1450
    %v2424 = vunpack.c.l.b16 %v1451
    %v2425 = vunpack.c.h.b16 %v1451
    %v2426 = vunpack.c.l.b16 %v1452
    %v2427 = vunpack.c.h.b16 %v1452
    %v2428 = vunpack.c.l.b16 %v1453
    %v2429 = vunpack.c.h.b16 %v1453
    %v2430 = vunpack.c.l.b16 %v1454
    %v2431 = vunpack.c.h.b16 %v1454
    %v2432 = vunpack.c.l.b16 %v1455
    %v2433 = vunpack.c.h.b16 %v1455
    %v2434 = vpack.c.b16 %v2404, %v2402
    %v2435 = vpack.c.b16 %v2405, %v2403
    %v2436 = vpack.c.b16 %v2408, %v2406
    %v2437 = vpack.c.b16 %v2409, %v2407
    %v2438 = vpack.c.b16 %v2412, %v2410
    %v2439 = vpack.c.b16 %v2413, %v2411
    %v2440 = vpack.c.b16 %v2416, %v2414
    %v2441 = vpack.c.b16 %v2417, %v2415
    %v2442 = vpack.c.b16 %v2420, %v2418
    %v2443 = vpack.c.b16 %v2421, %v2419
    %v2444 = vpack.c.b16 %v2424, %v2422
    %v2445 = vpack.c.b16 %v2425, %v2423
    %v2446 = vpack.c.b16 %v2428, %v2426
    %v2447 = vpack.c.b16 %v2429, %v2427
    %v2448 = vpack.c.b16 %v2432, %v2430
    %v2449 = vpack.c.b16 %v2433, %v2431
    %2466 = vmatprep.subr.bf16.mxu0 %v2435
    %2467 = vmatpush1.bf16.msra.mxu0 %v2434
    %2468 = vmatprep.subr.bf16.mxu0 %v2437
    %2469 = vmatpush1.bf16.msra.mxu0 %v2436
    %2470 = vmatprep.subr.bf16.mxu0 %v2439
    %2471 = vmatpush1.bf16.msra.mxu0 %v2438
    %2472 = vmatprep.subr.bf16.mxu0 %v2441
    %2473 = vmatpush1.bf16.msra.mxu0 %v2440
    %2474 = vmatprep.subr.bf16.mxu0 %v2443
    %2475 = vmatpush1.bf16.msra.mxu0 %v2442
    %2476 = vmatprep.subr.bf16.mxu0 %v2445
    %2477 = vmatpush1.bf16.msra.mxu0 %v2444
    %2478 = vmatprep.subr.bf16.mxu0 %v2447
    %2479 = vmatpush1.bf16.msra.mxu0 %v2446
    %2480 = vmatprep.subr.bf16.mxu0 %v2449
    %2481 = vmatpush1.bf16.msra.mxu0 %v2448
    %2482 = vmatprep.subr.bf16.mxu0 0
    %2483 = vmatpush1.bf16.msra.mxu0 0
    %2484 = vmatprep.subr.bf16.mxu0 0
    %2485 = vmatpush1.bf16.msra.mxu0 0
    %2486 = vmatprep.subr.bf16.mxu0 0
    %2487 = vmatpush1.bf16.msra.mxu0 0
    %2488 = vmatprep.subr.bf16.mxu0 0
    %2489 = vmatpush1.bf16.msra.mxu0 0
    %2490 = vmatprep.subr.bf16.mxu0 0
    %2491 = vmatpush1.bf16.msra.mxu0 0
    %2492 = vmatprep.subr.bf16.mxu0 0
    %2493 = vmatpush1.bf16.msra.mxu0 0
    %2494 = vmatprep.subr.bf16.mxu0 0
    %2495 = vmatpush1.bf16.msra.mxu0 0
    %2496 = vmatprep.subr.bf16.mxu0 0
    %2497 = vmatpush1.bf16.msra.mxu0 0
    %2498 = vmatprep.mubr.bf16.mxu0 0
    %2499 = vmatmul.mubr.bf16.gmra.mrb[0].mxu0 %v2377
    %v2500 = vpop.f32.mrb[0].mxu0
    %v2501 = vadd.f32 %v2381, %v2500
    %v2502 = vpop.f32.mrb[0].mxu0
    %v2503 = vadd.f32 %v2385, %v2502
    %v2504 = vpop.f32.mrb[0].mxu0
    %v2505 = vadd.f32 %v2381, %v2504
    %v2506 = vpop.f32.mrb[0].mxu0
    %v2507 = vadd.f32 %v2385, %v2506
    %2508 = vdwg.mxu0
    %v2509 = vmax.f32 %v2501, 0.0
    %v2510 = vmax.f32 %v2503, 0.0
    %v2511 = vmax.f32 %v2505, 0.0
    %v2512 = vmax.f32 %v2507, 0.0
    %v2513 = vpack.c.bf16 %v2511, %v2509
    %v2514 = vpack.c.bf16 %v2512, %v2510
    %v2515 = vlaneseq
    %v2516 = vshrl.u32 %v2515, 7
    %v2517 = vsub.s32 5, %v2516
    %v2518 = vrot.slane %v1490, %v2517
    %v2551 = vunpack.c.l.b16 %v1457
    %v2552 = vunpack.c.l.b16 %v1458
    %v2553 = vunpack.c.l.b16 %v1459
    %v2554 = vunpack.c.l.b16 %v1460
    %v2555 = vunpack.c.l.b16 %v1461
    %v2556 = vunpack.c.l.b16 %v1462
    %v2557 = vunpack.c.l.b16 %v1463
    %v2558 = vunpack.c.l.b16 %v1464
    %v2559 = vunpack.c.l.b16 %v1465
    %v2560 = vunpack.c.l.b16 %v1466
    %v2561 = vunpack.c.l.b16 %v1467
    %v2562 = vunpack.c.l.b16 %v1468
    %v2563 = vunpack.c.l.b16 %v1469
    %v2564 = vunpack.c.l.b16 %v1470
    %v2565 = vunpack.c.l.b16 %v1471
    %v2566 = vunpack.c.l.b16 %v1472
    %v2567 = vunpack.c.l.b16 %v1473
    %v2568 = vunpack.c.l.b16 %v1474
    %v2569 = vunpack.c.l.b16 %v1475
    %v2570 = vunpack.c.l.b16 %v1476
    %v2571 = vunpack.c.l.b16 %v1477
    %v2572 = vunpack.c.l.b16 %v1478
    %v2573 = vunpack.c.l.b16 %v1479
    %v2574 = vunpack.c.l.b16 %v1480
    %v2575 = vunpack.c.l.b16 %v1481
    %v2576 = vunpack.c.l.b16 %v1482
    %v2577 = vunpack.c.l.b16 %v1483
    %v2578 = vunpack.c.l.b16 %v1484
    %v2579 = vunpack.c.l.b16 %v1485
    %v2580 = vunpack.c.l.b16 %v1486
    %v2581 = vunpack.c.l.b16 %v1487
    %v2582 = vunpack.c.l.b16 %v1488
    %v2583 = vpack.c.b16 %v2552, %v2551
    %v2584 = vpack.c.b16 %v2554, %v2553
    %v2585 = vpack.c.b16 %v2556, %v2555
    %v2586 = vpack.c.b16 %v2558, %v2557
    %v2587 = vpack.c.b16 %v2560, %v2559
    %v2588 = vpack.c.b16 %v2562, %v2561
    %v2589 = vpack.c.b16 %v2564, %v2563
    %v2590 = vpack.c.b16 %v2566, %v2565
    %v2591 = vpack.c.b16 %v2568, %v2567
    %v2592 = vpack.c.b16 %v2570, %v2569
    %v2593 = vpack.c.b16 %v2572, %v2571
    %v2594 = vpack.c.b16 %v2574, %v2573
    %v2595 = vpack.c.b16 %v2576, %v2575
    %v2596 = vpack.c.b16 %v2578, %v2577
    %v2597 = vpack.c.b16 %v2580, %v2579
    %v2598 = vpack.c.b16 %v2582, %v2581
    %2615 = vmatprep.subr.bf16.mxu0 0
    %2616 = vmatpush1.bf16.msra.mxu0 %v2583
    %2617 = vmatprep.subr.bf16.mxu0 0
    %2618 = vmatpush1.bf16.msra.mxu0 %v2584
    %2619 = vmatprep.subr.bf16.mxu0 0
    %2620 = vmatpush1.bf16.msra.mxu0 %v2585
    %2621 = vmatprep.subr.bf16.mxu0 0
    %2622 = vmatpush1.bf16.msra.mxu0 %v2586
    %2623 = vmatprep.subr.bf16.mxu0 0
    %2624 = vmatpush1.bf16.msra.mxu0 %v2587
    %2625 = vmatprep.subr.bf16.mxu0 0
    %2626 = vmatpush1.bf16.msra.mxu0 %v2588
    %2627 = vmatprep.subr.bf16.mxu0 0
    %2628 = vmatpush1.bf16.msra.mxu0 %v2589
    %2629 = vmatprep.subr.bf16.mxu0 0
    %2630 = vmatpush1.bf16.msra.mxu0 %v2590
    %2631 = vmatprep.subr.bf16.mxu0 0
    %2632 = vmatpush1.bf16.msra.mxu0 %v2591
    %2633 = vmatprep.subr.bf16.mxu0 0
    %2634 = vmatpush1.bf16.msra.mxu0 %v2592
    %2635 = vmatprep.subr.bf16.mxu0 0
    %2636 = vmatpush1.bf16.msra.mxu0 %v2593
    %2637 = vmatprep.subr.bf16.mxu0 0
    %2638 = vmatpush1.bf16.msra.mxu0 %v2594
    %2639 = vmatprep.subr.bf16.mxu0 0
    %2640 = vmatpush1.bf16.msra.mxu0 %v2595
    %2641 = vmatprep.subr.bf16.mxu0 0
    %2642 = vmatpush1.bf16.msra.mxu0 %v2596
    %2643 = vmatprep.subr.bf16.mxu0 0
    %2644 = vmatpush1.bf16.msra.mxu0 %v2597
    %2645 = vmatprep.subr.bf16.mxu0 0
    %2646 = vmatpush1.bf16.msra.mxu0 %v2598
    %2647 = vmatprep.mubr.bf16.mxu0 %v2514
    %2648 = vmatmul.mubr.bf16.gmra.mrb[0].mxu0 %v2513
    %v2649 = vpop.f32.mrb[0].mxu0
    %v2650 = vpop.f32.mrb[0].mxu0
    %v2651 = vpop.f32.mrb[0].mxu0
    %v2652 = vadd.f32 %v2518, %v2651
    %v2653 = vpop.f32.mrb[0].mxu0
    %2654 = vdwg.mxu0
    %v2655 = vadd.f32 %v2376, %v2652
    %2656 = vadd.xlane.f32.xlu0 %v2655
    %v2657 = vpop.xlane.xlu0 %2656
    %v2658 = vmul.f32 %v2657, %v1043
    %v2659 = vsub.f32 %v2655, %v2658
    %v2660 = vmul.f32 %v2659, %v2659
    %2661 = vadd.xlane.f32.xlu0 %v2660
    %v2662 = vpop.xlane.xlu0 %2661
    %v2663 = vmul.f32 %v2662, %v1043
    %v2664 = vadd.f32 %v2663, 1e-05
    %v2665 = vrsqrt.pop %v2664
    %v2666 = vmul.f32 %v2659, %v2665
    %v2667 = vlaneseq
    %v2668 = vshrl.u32 %v2667, 7
    %v2669 = vsub.s32 6, %v2668
    %v2670 = vrot.slane %v1490, %v2669
    %v2671 = vmul.f32 %v2666, %v2670
    %v2672 = vlaneseq
    %v2673 = vshrl.u32 %v2672, 7
    %v2674 = vsub.s32 7, %v2673
    %v2675 = vrot.slane %v1490, %v2674
    %v2676 = vadd.f32 %v2671, %v2675
    %v2677 = vld [vmem:[%s8] sm:$0xf]
    %v2678 = vld [vmem:[%s8 + $0x4] sm:$0xf]
    %v2679 = vld [vmem:[%s8 + $0x8] sm:$0xf]
    %v2680 = vld [vmem:[%s8 + $0xc] sm:$0xf]
    %v2681 = vld [vmem:[%s8 + $0x10] sm:$0xf]
    %v2682 = vld [vmem:[%s8 + $0x14] sm:$0xf]
    %v2683 = vld [vmem:[%s8 + $0x18] sm:$0xf]
    %v2684 = vld [vmem:[%s8 + $0x1c] sm:$0xf]
    %v2685 = vld [vmem:[%s8 + $0x20] sm:$0xf]
    %v2686 = vld [vmem:[%s8 + $0x24] sm:$0xf]
    %v2687 = vld [vmem:[%s8 + $0x28] sm:$0xf]
    %v2688 = vld [vmem:[%s8 + $0x2c] sm:$0xf]
    %v2689 = vld [vmem:[%s8 + $0x30] sm:$0xf]
    %v2690 = vld [vmem:[%s8 + $0x34] sm:$0xf]
    %v2691 = vld [vmem:[%s8 + $0x38] sm:$0xf]
    %v2692 = vld [vmem:[%s8 + $0x3c] sm:$0xf]
    %v2693 = vld [vmem:[%s8 + $0x40] sm:$0xf]
    %v2694 = vld [vmem:[%s8 + $0x44] sm:$0xf]
    %v2695 = vld [vmem:[%s8 + $0x48] sm:$0xf]
    %v2696 = vld [vmem:[%s8 + $0x4c] sm:$0xf]
    %v2697 = vld [vmem:[%s9] sm:$0xff]
    %v2698 = vld [vmem:[%s9 + $0x8] sm:$0xff]
    %v2699 = vpack.c.bf16 %v2676, %v2676
    %v2700 = vld [vmem:[%s7] sm:$0xff]
    %v2701 = vld [vmem:[%s7 + $0x8] sm:$0xff]
    %v2702 = vld [vmem:[%s7 + $0x10] sm:$0xff]
    %v2703 = vld [vmem:[%s7 + $0x18] sm:$0xff]
    %v2704 = vld [vmem:[%s7 + $0x20] sm:$0xff]
    %v2705 = vld [vmem:[%s7 + $0x28] sm:$0xff]
    %v2706 = vld [vmem:[%s7 + $0x30] sm:$0xff]
    %v2707 = vld [vmem:[%s7 + $0x38] sm:$0xff]
    %v2708 = vld [vmem:[%s7 + $0x40] sm:$0xff]
    %v2709 = vld [vmem:[%s7 + $0x48] sm:$0xff]
    %v2710 = vld [vmem:[%s7 + $0x50] sm:$0xff]
    %v2711 = vld [vmem:[%s7 + $0x58] sm:$0xff]
    %v2712 = vld [vmem:[%s7 + $0x60] sm:$0xff]
    %v2713 = vld [vmem:[%s7 + $0x68] sm:$0xff]
    %v2714 = vld [vmem:[%s7 + $0x70] sm:$0xff]
    %v2715 = vld [vmem:[%s7 + $0x78] sm:$0xff]
    %v2716 = vlaneseq
    %v2717 = vshrl.u32 %v2716, 7
    %v2718 = vsub.s32 0, %v2717
    %v2719 = vrot.slane %v2697, %v2718
    %v2720 = vlaneseq
    %v2721 = vshrl.u32 %v2720, 7
    %v2722 = vsub.s32 0, %v2721
    %v2723 = vrot.slane %v2698, %v2722
    %v2725 = vrot.slane %v2699, 3
    %v2743 = vunpack.c.l.b16 %v2700
    %v2744 = vunpack.c.h.b16 %v2700
    %v2745 = vunpack.c.l.b16 %v2701
    %v2746 = vunpack.c.h.b16 %v2701
    %v2747 = vunpack.c.l.b16 %v2702
    %v2748 = vunpack.c.h.b16 %v2702
    %v2749 = vunpack.c.l.b16 %v2703
    %v2750 = vunpack.c.h.b16 %v2703
    %v2751 = vunpack.c.l.b16 %v2704
    %v2752 = vunpack.c.h.b16 %v2704
    %v2753 = vunpack.c.l.b16 %v2705
    %v2754 = vunpack.c.h.b16 %v2705
    %v2755 = vunpack.c.l.b16 %v2706
    %v2756 = vunpack.c.h.b16 %v2706
    %v2757 = vunpack.c.l.b16 %v2707
    %v2758 = vunpack.c.h.b16 %v2707
    %v2759 = vunpack.c.l.b16 %v2708
    %v2760 = vunpack.c.h.b16 %v2708
    %v2761 = vunpack.c.l.b16 %v2709
    %v2762 = vunpack.c.h.b16 %v2709
    %v2763 = vunpack.c.l.b16 %v2710
    %v2764 = vunpack.c.h.b16 %v2710
    %v2765 = vunpack.c.l.b16 %v2711
    %v2766 = vunpack.c.h.b16 %v2711
    %v2767 = vunpack.c.l.b16 %v2712
    %v2768 = vunpack.c.h.b16 %v2712
    %v2769 = vunpack.c.l.b16 %v2713
    %v2770 = vunpack.c.h.b16 %v2713
    %v2771 = vunpack.c.l.b16 %v2714
    %v2772 = vunpack.c.h.b16 %v2714
    %v2773 = vunpack.c.l.b16 %v2715
    %v2774 = vunpack.c.h.b16 %v2715
    %v2775 = vpack.c.b16 %v2745, %v2743
    %v2776 = vpack.c.b16 %v2746, %v2744
    %v2777 = vpack.c.b16 %v2749, %v2747
    %v2778 = vpack.c.b16 %v2750, %v2748
    %v2779 = vpack.c.b16 %v2753, %v2751
    %v2780 = vpack.c.b16 %v2754, %v2752
    %v2781 = vpack.c.b16 %v2757, %v2755
    %v2782 = vpack.c.b16 %v2758, %v2756
    %v2783 = vpack.c.b16 %v2761, %v2759
    %v2784 = vpack.c.b16 %v2762, %v2760
    %v2785 = vpack.c.b16 %v2765, %v2763
    %v2786 = vpack.c.b16 %v2766, %v2764
    %v2787 = vpack.c.b16 %v2769, %v2767
    %v2788 = vpack.c.b16 %v2770, %v2768
    %v2789 = vpack.c.b16 %v2773, %v2771
    %v2790 = vpack.c.b16 %v2774, %v2772
    %2807 = vmatprep.subr.bf16.mxu0 %v2776
    %2808 = vmatpush1.bf16.msra.mxu0 %v2775
    %2809 = vmatprep.subr.bf16.mxu0 %v2778
    %2810 = vmatpush1.bf16.msra.mxu0 %v2777
    %2811 = vmatprep.subr.bf16.mxu0 %v2780
    %2812 = vmatpush1.bf16.msra.mxu0 %v2779
    %2813 = vmatprep.subr.bf16.mxu0 %v2782
    %2814 = vmatpush1.bf16.msra.mxu0 %v2781
    %2815 = vmatprep.subr.bf16.mxu0 %v2784
    %2816 = vmatpush1.bf16.msra.mxu0 %v2783
    %2817 = vmatprep.subr.bf16.mxu0 %v2786
    %2818 = vmatpush1.bf16.msra.mxu0 %v2785
    %2819 = vmatprep.subr.bf16.mxu0 %v2788
    %2820 = vmatpush1.bf16.msra.mxu0 %v2787
    %2821 = vmatprep.subr.bf16.mxu0 %v2790
    %2822 = vmatpush1.bf16.msra.mxu0 %v2789
    %2823 = vmatprep.subr.bf16.mxu0 0
    %2824 = vmatpush1.bf16.msra.mxu0 0
    %2825 = vmatprep.subr.bf16.mxu0 0
    %2826 = vmatpush1.bf16.msra.mxu0 0
    %2827 = vmatprep.subr.bf16.mxu0 0
    %2828 = vmatpush1.bf16.msra.mxu0 0
    %2829 = vmatprep.subr.bf16.mxu0 0
    %2830 = vmatpush1.bf16.msra.mxu0 0
    %2831 = vmatprep.subr.bf16.mxu0 0
    %2832 = vmatpush1.bf16.msra.mxu0 0
    %2833 = vmatprep.subr.bf16.mxu0 0
    %2834 = vmatpush1.bf16.msra.mxu0 0
    %2835 = vmatprep.subr.bf16.mxu0 0
    %2836 = vmatpush1.bf16.msra.mxu0 0
    %2837 = vmatprep.subr.bf16.mxu0 0
    %2838 = vmatpush1.bf16.msra.mxu0 0
    %2839 = vmatprep.mubr.bf16.mxu0 0
    %2840 = vmatmul.mubr.bf16.gmra.mrb[0].mxu0 %v2725
    %v2841 = vpop.f32.mrb[0].mxu0
    %v2842 = vadd.f32 %v2719, %v2841
    %v2843 = vpop.f32.mrb[0].mxu0
    %v2844 = vadd.f32 %v2723, %v2843
    %v2845 = vpop.f32.mrb[0].mxu0
    %v2846 = vpop.f32.mrb[0].mxu0
    %2847 = vdwg.mxu0
    %v2848 = vmul.f32 %v2844, 0.5
    %v2849 = vmul.f32 %v2848, 1.442695
    %v2850 = vpow.pop %v2849
    %v2851 = vld [vmem:[%s1] sm:$0x3]
    %2853 = vrot.lane.b32.xlu0 %v2850, 96
    %v2854 = vpop.permute.xlu0 %2853
    %v2856 = vmul.f32 %v2851, %v2854
    %v2857 = vadd.f32 %v2844, %v2856
    %v2858 = vpack.c.bf16 %v2857, %v2857
    %v2859 = vlaneseq
    %v2860 = vshrl.u32 %v2859, 7
    %v2861 = vsub.s32 1, %v2860
    %v2862 = vrot.slane %v2697, %v2861
    %v2867 = vunpack.c.l.b16 %v2677
    %v2868 = vunpack.c.l.b16 %v2678
    %v2869 = vunpack.c.l.b16 %v2679
    %v2870 = vunpack.c.l.b16 %v2680
    %v2871 = vpack.c.b16 %v2868, %v2867
    %v2872 = vpack.c.b16 %v2870, %v2869
    %v2876 = vsel %vm413, %v2858, 0
    %2878 = vmatprep.subr.bf16.mxu0 0
    %2879 = vmatpush1.bf16.msra.mxu0 %v2871
    %2880 = vmatprep.subr.bf16.mxu0 0
    %2881 = vmatpush1.bf16.msra.mxu0 %v2872
    %2882 = vmatprep.subr.bf16.mxu0 0
    %2883 = vmatpush1.bf16.msra.mxu0 0
    %2884 = vmatprep.subr.bf16.mxu0 0
    %2885 = vmatpush1.bf16.msra.mxu0 0
    %2886 = vmatprep.subr.bf16.mxu0 0
    %2887 = vmatpush1.bf16.msra.mxu0 0
    %2888 = vmatprep.subr.bf16.mxu0 0
    %2889 = vmatpush1.bf16.msra.mxu0 0
    %2890 = vmatprep.subr.bf16.mxu0 0
    %2891 = vmatpush1.bf16.msra.mxu0 0
    %2892 = vmatprep.subr.bf16.mxu0 0
    %2893 = vmatpush1.bf16.msra.mxu0 0
    %2894 = vmatprep.subr.bf16.mxu0 0
    %2895 = vmatpush1.bf16.msra.mxu0 0
    %2896 = vmatprep.subr.bf16.mxu0 0
    %2897 = vmatpush1.bf16.msra.mxu0 0
    %2898 = vmatprep.subr.bf16.mxu0 0
    %2899 = vmatpush1.bf16.msra.mxu0 0
    %2900 = vmatprep.subr.bf16.mxu0 0
    %2901 = vmatpush1.bf16.msra.mxu0 0
    %2902 = vmatprep.subr.bf16.mxu0 0
    %2903 = vmatpush1.bf16.msra.mxu0 0
    %2904 = vmatprep.subr.bf16.mxu0 0
    %2905 = vmatpush1.bf16.msra.mxu0 0
    %2906 = vmatprep.subr.bf16.mxu0 0
    %2907 = vmatpush1.bf16.msra.mxu0 0
    %2908 = vmatprep.subr.bf16.mxu0 0
    %2909 = vmatpush1.bf16.msra.mxu0 0
    %2910 = vmatprep.mubr.bf16.mxu0 0
    %2911 = vmatmul.mubr.bf16.gmra.mrb[0].mxu0 %v2876
    %v2912 = vpop.f32.mrb[0].mxu0
    %v2913 = vadd.f32 %v2862, %v2912
    %v2914 = vpop.f32.mrb[0].mxu0
    %v2915 = vpop.f32.mrb[0].mxu0
    %v2916 = vpop.f32.mrb[0].mxu0
    %2917 = vdwg.mxu0
    %v2918 = vtanh.pop %v2913
    %v2919 = vpack.c.bf16 %v2918, %v2918
    %v2920 = vlaneseq
    %v2921 = vshrl.u32 %v2920, 7
    %v2922 = vsub.s32 2, %v2921
    %v2923 = vrot.slane %v2697, %v2922
    %v2928 = vunpack.c.l.b16 %v2681
    %v2929 = vunpack.c.l.b16 %v2682
    %v2930 = vunpack.c.l.b16 %v2683
    %v2931 = vunpack.c.l.b16 %v2684
    %v2932 = vpack.c.b16 %v2929, %v2928
    %v2933 = vpack.c.b16 %v2931, %v2930
    %v2937 = vsel %vm413, %v2919, 0
    %2939 = vmatprep.subr.bf16.mxu0 0
    %2940 = vmatpush1.bf16.msra.mxu0 %v2932
    %2941 = vmatprep.subr.bf16.mxu0 0
    %2942 = vmatpush1.bf16.msra.mxu0 %v2933
    %2943 = vmatprep.subr.bf16.mxu0 0
    %2944 = vmatpush1.bf16.msra.mxu0 0
    %2945 = vmatprep.subr.bf16.mxu0 0
    %2946 = vmatpush1.bf16.msra.mxu0 0
    %2947 = vmatprep.subr.bf16.mxu0 0
    %2948 = vmatpush1.bf16.msra.mxu0 0
    %2949 = vmatprep.subr.bf16.mxu0 0
    %2950 = vmatpush1.bf16.msra.mxu0 0
    %2951 = vmatprep.subr.bf16.mxu0 0
    %2952 = vmatpush1.bf16.msra.mxu0 0
    %2953 = vmatprep.subr.bf16.mxu0 0
    %2954 = vmatpush1.bf16.msra.mxu0 0
    %2955 = vmatprep.subr.bf16.mxu0 0
    %2956 = vmatpush1.bf16.msra.mxu0 0
    %2957 = vmatprep.subr.bf16.mxu0 0
    %2958 = vmatpush1.bf16.msra.mxu0 0
    %2959 = vmatprep.subr.bf16.mxu0 0
    %2960 = vmatpush1.bf16.msra.mxu0 0
    %2961 = vmatprep.subr.bf16.mxu0 0
    %2962 = vmatpush1.bf16.msra.mxu0 0
    %2963 = vmatprep.subr.bf16.mxu0 0
    %2964 = vmatpush1.bf16.msra.mxu0 0
    %2965 = vmatprep.subr.bf16.mxu0 0
    %2966 = vmatpush1.bf16.msra.mxu0 0
    %2967 = vmatprep.subr.bf16.mxu0 0
    %2968 = vmatpush1.bf16.msra.mxu0 0
    %2969 = vmatprep.subr.bf16.mxu0 0
    %2970 = vmatpush1.bf16.msra.mxu0 0
    %2971 = vmatprep.mubr.bf16.mxu0 0
    %2972 = vmatmul.mubr.bf16.gmra.mrb[0].mxu0 %v2937
    %v2973 = vpop.f32.mrb[0].mxu0
    %v2974 = vadd.f32 %v2923, %v2973
    %v2975 = vpop.f32.mrb[0].mxu0
    %v2976 = vpop.f32.mrb[0].mxu0
    %v2977 = vpop.f32.mrb[0].mxu0
    %2978 = vdwg.mxu0
    %v2979 = vpack.c.bf16 %v2974, %v2974
    %v2980 = vlaneseq
    %v2981 = vshrl.u32 %v2980, 7
    %v2982 = vsub.s32 3, %v2981
    %v2983 = vrot.slane %v2697, %v2982
    %v2988 = vunpack.c.l.b16 %v2685
    %v2989 = vunpack.c.l.b16 %v2686
    %v2990 = vunpack.c.l.b16 %v2687
    %v2991 = vunpack.c.l.b16 %v2688
    %v2992 = vpack.c.b16 %v2989, %v2988
    %v2993 = vpack.c.b16 %v2991, %v2990
    %v2997 = vsel %vm413, %v2979, 0
    %2999 = vmatprep.subr.bf16.mxu0 0
    %3000 = vmatpush1.bf16.msra.mxu0 %v2992
    %3001 = vmatprep.subr.bf16.mxu0 0
    %3002 = vmatpush1.bf16.msra.mxu0 %v2993
    %3003 = vmatprep.subr.bf16.mxu0 0
    %3004 = vmatpush1.bf16.msra.mxu0 0
    %3005 = vmatprep.subr.bf16.mxu0 0
    %3006 = vmatpush1.bf16.msra.mxu0 0
    %3007 = vmatprep.subr.bf16.mxu0 0
    %3008 = vmatpush1.bf16.msra.mxu0 0
    %3009 = vmatprep.subr.bf16.mxu0 0
    %3010 = vmatpush1.bf16.msra.mxu0 0
    %3011 = vmatprep.subr.bf16.mxu0 0
    %3012 = vmatpush1.bf16.msra.mxu0 0
    %3013 = vmatprep.subr.bf16.mxu0 0
    %3014 = vmatpush1.bf16.msra.mxu0 0
    %3015 = vmatprep.subr.bf16.mxu0 0
    %3016 = vmatpush1.bf16.msra.mxu0 0
    %3017 = vmatprep.subr.bf16.mxu0 0
    %3018 = vmatpush1.bf16.msra.mxu0 0
    %3019 = vmatprep.subr.bf16.mxu0 0
    %3020 = vmatpush1.bf16.msra.mxu0 0
    %3021 = vmatprep.subr.bf16.mxu0 0
    %3022 = vmatpush1.bf16.msra.mxu0 0
    %3023 = vmatprep.subr.bf16.mxu0 0
    %3024 = vmatpush1.bf16.msra.mxu0 0
    %3025 = vmatprep.subr.bf16.mxu0 0
    %3026 = vmatpush1.bf16.msra.mxu0 0
    %3027 = vmatprep.subr.bf16.mxu0 0
    %3028 = vmatpush1.bf16.msra.mxu0 0
    %3029 = vmatprep.subr.bf16.mxu0 0
    %3030 = vmatpush1.bf16.msra.mxu0 0
    %3031 = vmatprep.mubr.bf16.mxu0 0
    %3032 = vmatmul.mubr.bf16.gmra.mrb[0].mxu0 %v2997
    %v3033 = vpop.f32.mrb[0].mxu0
    %v3034 = vadd.f32 %v2983, %v3033
    %v3035 = vpop.f32.mrb[0].mxu0
    %v3036 = vpop.f32.mrb[0].mxu0
    %v3037 = vpop.f32.mrb[0].mxu0
    %3038 = vdwg.mxu0
    %vm3039 = vcmp.ge.f32.partialorder %v3034, 0.0
    %v3040 = vmul.f32 %v3034, 0.01
    %v3041 = vsel %vm3039, %v3034, %v3040
    %v3042 = vpack.c.bf16 %v3041, %v3041
    %v3043 = vlaneseq
    %v3044 = vshrl.u32 %v3043, 7
    %v3045 = vsub.s32 4, %v3044
    %v3046 = vrot.slane %v2697, %v3045
    %v3055 = vunpack.c.l.b16 %v2689
    %v3056 = vunpack.c.l.b16 %v2690
    %v3057 = vunpack.c.l.b16 %v2691
    %v3058 = vunpack.c.l.b16 %v2692
    %v3059 = vunpack.c.l.b16 %v2693
    %v3060 = vunpack.c.l.b16 %v2694
    %v3061 = vunpack.c.l.b16 %v2695
    %v3062 = vunpack.c.l.b16 %v2696
    %v3063 = vpack.c.b16 %v3056, %v3055
    %v3064 = vpack.c.b16 %v3058, %v3057
    %v3065 = vpack.c.b16 %v3060, %v3059
    %v3066 = vpack.c.b16 %v3062, %v3061
    %v3072 = vsel %vm937, %v3042, 0
    %3074 = vmatprep.subr.bf16.mxu0 0
    %3075 = vmatpush1.bf16.msra.mxu0 %v3063
    %3076 = vmatprep.subr.bf16.mxu0 0
    %3077 = vmatpush1.bf16.msra.mxu0 %v3064
    %3078 = vmatprep.subr.bf16.mxu0 0
    %3079 = vmatpush1.bf16.msra.mxu0 %v3065
    %3080 = vmatprep.subr.bf16.mxu0 0
    %3081 = vmatpush1.bf16.msra.mxu0 %v3066
    %3082 = vmatprep.subr.bf16.mxu0 0
    %3083 = vmatpush1.bf16.msra.mxu0 0
    %3084 = vmatprep.subr.bf16.mxu0 0
    %3085 = vmatpush1.bf16.msra.mxu0 0
    %3086 = vmatprep.subr.bf16.mxu0 0
    %3087 = vmatpush1.bf16.msra.mxu0 0
    %3088 = vmatprep.subr.bf16.mxu0 0
    %3089 = vmatpush1.bf16.msra.mxu0 0
    %3090 = vmatprep.subr.bf16.mxu0 0
    %3091 = vmatpush1.bf16.msra.mxu0 0
    %3092 = vmatprep.subr.bf16.mxu0 0
    %3093 = vmatpush1.bf16.msra.mxu0 0
    %3094 = vmatprep.subr.bf16.mxu0 0
    %3095 = vmatpush1.bf16.msra.mxu0 0
    %3096 = vmatprep.subr.bf16.mxu0 0
    %3097 = vmatpush1.bf16.msra.mxu0 0
    %3098 = vmatprep.subr.bf16.mxu0 0
    %3099 = vmatpush1.bf16.msra.mxu0 0
    %3100 = vmatprep.subr.bf16.mxu0 0
    %3101 = vmatpush1.bf16.msra.mxu0 0
    %3102 = vmatprep.subr.bf16.mxu0 0
    %3103 = vmatpush1.bf16.msra.mxu0 0
    %3104 = vmatprep.subr.bf16.mxu0 0
    %3105 = vmatpush1.bf16.msra.mxu0 0
    %3106 = vmatprep.mubr.bf16.mxu0 0
    %3107 = vmatmul.mubr.bf16.gmra.mrb[0].mxu0 %v3072
    %v3108 = vpop.f32.mrb[0].mxu0
    %v3109 = vadd.f32 %v3046, %v3108
    %v3110 = vpop.f32.mrb[0].mxu0
    %v3111 = vpop.f32.mrb[0].mxu0
    %v3112 = vpop.f32.mrb[0].mxu0
    %3113 = vdwg.mxu0
    %v3114 = vadd.f32 %v3109, %v2842
    %v3115 = vlaneseq
    %v3116 = vshrl.u32 %v3115, 7
    %v3117 = vsub.s32 5, %v3116
    %v3118 = vrot.slane %v2697, %v3117
    %v3119 = vmul.f32 %v3114, %v3118
    %vm3120 = vcmask 1041408
    %v3121 = vsel %vm3120, %v3119, 0.0
    %3122 = vadd.xlane.f32.xlu0 %v3121
    %v3123 = vpop.xlane.xlu0 %3122
    %v3124 = vlaneseq
    %v3125 = vshrl.u32 %v3124, 7
    %v3126 = vsub.s32 6, %v3125
    %v3127 = vrot.slane %v2697, %v3126
    %v3128 = vadd.f32 %v3123, %v3127
    %v3129 = vsub.f32 0.0, %v3128
    %v3130 = vmul.f32 %v3129, 1.442695
    %v3131 = vpow.pop %v3130
    %v3132 = vadd.f32 %v3131, 1.0
    %v3133 = vrcp.pop %v3132
    %v3134 = vmul.f32 1.0, %v3133
    %3135 = vst [vmem:[#allocation2] sm:$0x3] %v3114
    %vm3136 = vcmp.eq.s32.totalorder %v45, 0
    %3138 = vset.pattern.permute.xlu0 0
    %3139 = vperm.xlu0 %3138, %v3134
    %v3140 = vpop.permute.xlu0 %3139
    %v3142 = vsel %vm3136, %v3140, 0.0
    %3144 = vrot.lane.b32.xlu0 %v3142, 64
    %v3145 = vpop.permute.xlu0 %3144
    %v3147 = vsel %vm937, %v2844, %v3145
    %3148 = vst [vmem:[%s11] sm:$0x3] %v3147
    // Predicated region
    $region42: #{_lambda_.1} parent=1 // pred_check
      _
    $region43: #{_lambda_.1} parent=1 // pred_check_branch
      %3150 = sbr.rel (0) target = $region45
    $region44: #{_lambda_.1} parent=1 // pred_region
      %s3152 = ssub.s32 32, 32
      %3153 = vsyncadd [#allocation3], %s3152
      %s3155 = sshll.u32 [#allocation2], 4
      %s3156 = int_to_ptr.vmem [resolvable:$true] %s3155
      %3158 = dma.vmem_to_hbm [thread:$0]  %s3156, 32, %s10, [#allocation3]
    $region45: #{_lambda_.1} parent=1 // pred_fallthru
      _
    // Predicated region
    $region46: #{_lambda_.1} parent=1 // pred_check
      _
    $region47: #{_lambda_.1} parent=1 // pred_check_branch
      %3160 = sbr.rel (0) target = $region49
    $region48: #{_lambda_.1} parent=1 // pred_region
      _
    $region49: #{_lambda_.1} parent=1 // pred_fallthru
      _
    // Predicated region
    $region50: #{_lambda_.1} parent=1 // pred_check
      _
    $region51: #{_lambda_.1} parent=1 // pred_check_branch
      %3162 = sbr.rel (0) target = $region53
    $region52: #{_lambda_.1} parent=1 // pred_region
      %3163 = dma.done [#allocation3], 32
    $region53: #{_lambda_.1} parent=1 // pred_fallthru
      _
    // Predicated region
    $region54: #{_lambda_.1} parent=1 // pred_check
      _
    $region55: #{_lambda_.1} parent=1 // pred_check_branch
      %3165 = sbr.rel (0) target = $region57
    $region56: #{_lambda_.1} parent=1 // pred_region
      _
    $region57: #{_lambda_.1} parent=1 // pred_fallthru
      _
    %3166 = vsyncpa [#allocation3], 1

</llo_original>
